<compile_context>
chip_gen: v5e
topology: v5e:2x2
jax: 0.10.0
libtpu: 0.0.40
codegen_flags: <defaults>
</compile_context>

<pallas_src>
import jax
import jax.numpy as jnp
from jax import lax
from jax.experimental import pallas as pl
from jax.experimental.pallas import tpu as pltpu


def _conv_block_kernel(x_ref, w1_ref, w2_ref, alpha_ref, o_ref,
                       xpad1, patch1, xpad2, patch2):
    # x_ref    : (1, H, W, Cin)   f32    one sample, NHWC
    # w1_ref   : (9*Cin, Cout)    bf16   tap-major, channel-minor rows
    # w2_ref   : (Cout, 9*Cout)   bf16   tap-major, channel-minor cols
    # alpha_ref: (2,)             f32    SMEM; PReLU slopes for layer 1 / layer 2
    # o_ref    : (1, Cout, H*W)          lane-dense output (NCHW flattened)
    # xpad1/2  : (H+2, W+2, C)    f32    VMEM scratch (zero-padded conv input)
    # patch1/2 : (H*W, 9*C)       f32    VMEM scratch (im2col patch)
    H, W = x_ref.shape[1], x_ref.shape[2]
    Cout = w1_ref.shape[1]
    HW = H * W

    def conv_in_prelu(xpad, patch, w_ref, alpha, lane_dense_out):
        C = xpad.shape[2]
        # im2col: 9 ref-level window loads; (H, W, C)->(HW, C) keeps the minor dim fixed
        # (layout no-op); each slab lands at a static lane offset in the patch scratch.
        for ky in range(3):
            for kx in range(3):
                tap = 3 * ky + kx
                slab = xpad[ky:ky + H, kx:kx + W, :].reshape(HW, C)
                patch[:, tap * C:(tap + 1) * C] = slab
        p = patch[...].astype(jnp.bfloat16)          # bf16 MXU inputs, f32 accumulate
        if lane_dense_out:
            # (Cout, 9C) . (HW, 9C)^T -> (Cout, HW): result already lane-dense for o_ref.
            y = lax.dot_general(w_ref[...], p,
                                dimension_numbers=(((1,), (1,)), ((), ())),
                                preferred_element_type=jnp.float32)
            ax = 1
        else:
            # (HW, 9C) . (9C, Cout) -> (HW, Cout): channel-minor, feeds layer-2 im2col.
            y = jnp.dot(p, w_ref[...], preferred_element_type=jnp.float32)
            ax = 0
        # Conv bias folded out exactly: InstanceNorm(affine=False) subtracts the per-channel
        # spatial mean, which absorbs a per-channel constant, and the variance is unchanged.
        # InstanceNorm2d: biased variance over the spatial axis, eps = 1e-5.
        m = jnp.mean(y, axis=ax, keepdims=True)
        t = y - m
        v = jnp.mean(t * t, axis=ax, keepdims=True)
        y = t * lax.rsqrt(v + 1e-5)
        # PReLU with a single shared slope (PyTorch default num_parameters=1).
        return jnp.where(y >= 0, y, alpha * y)

    # ---- layer 1: zero-pad the input inside the kernel (no wrapper-side jnp.pad) ----
    xpad1[...] = jnp.zeros_like(xpad1)
    xpad1[1:H + 1, 1:W + 1, :] = x_ref[0]
    y1 = conv_in_prelu(xpad1, patch1, w1_ref, alpha_ref[0],
                       lane_dense_out=False)          # (HW, Cout)

    # ---- layer 2: the intermediate never leaves VMEM (fully fused) ----
    xpad2[...] = jnp.zeros_like(xpad2)
    xpad2[1:H + 1, 1:W + 1, :] = y1.reshape(H, W, Cout)
    y2 = conv_in_prelu(xpad2, patch2, w2_ref, alpha_ref[1],
                       lane_dense_out=True)           # (Cout, HW)

    o_ref[0] = y2.astype(o_ref.dtype)                 # unmasked 256-lane stores


def _conv_block_pallas(x_nhwc, w1, w2, alphas):
    N, H, W, Cin = x_nhwc.shape
    Cout = w1.shape[1]
    HW = H * W
    Hp, Wp = H + 2, W + 2
    return pl.pallas_call(
        _conv_block_kernel,
        out_shape=jax.ShapeDtypeStruct((N, Cout, HW), x_nhwc.dtype),
        grid_spec=pltpu.PrefetchScalarGridSpec(
            num_scalar_prefetch=0,
            grid=(N,),
            in_specs=[
                pl.BlockSpec((1, H, W, Cin), lambda n: (n, 0, 0, 0)),
                pl.BlockSpec((9 * Cin, Cout), lambda n: (0, 0)),
                pl.BlockSpec((Cout, 9 * Cout), lambda n: (0, 0)),
                pl.BlockSpec(memory_space=pltpu.MemorySpace.SMEM),   # PReLU alphas
            ],
            out_specs=pl.BlockSpec((1, Cout, HW), lambda n: (n, 0, 0)),
            scratch_shapes=[
                pltpu.VMEM((Hp, Wp, Cin), jnp.float32),     # padded layer-1 input
                pltpu.VMEM((HW, 9 * Cin), jnp.float32),     # layer-1 im2col patch
                pltpu.VMEM((Hp, Wp, Cout), jnp.float32),    # padded layer-2 input
                pltpu.VMEM((HW, 9 * Cout), jnp.float32),    # layer-2 im2col patch
            ],
        ),
        compiler_params=pltpu.CompilerParams(
            dimension_semantics=("parallel",),              # v7x: 2 TCs split the batch
            vmem_limit_bytes=32 * 1024 * 1024,
        ),
    )(x_nhwc, w1, w2, alphas)


def init_conv_block_params(key, in_channels, out_channels):
    """Deterministic synthetic parameters (shapes match the PyTorch module)."""
    k1, k2, k3, k4 = jax.random.split(key, 4)
    # PyTorch conv weight layout: (Cout, Cin, 3, 3)
    w1 = jax.random.normal(k1, (out_channels, in_channels, 3, 3), jnp.float32) * 0.1
    b1 = jax.random.normal(k2, (out_channels,), jnp.float32) * 0.01
    w2 = jax.random.normal(k3, (out_channels, out_channels, 3, 3), jnp.float32) * 0.1
    b2 = jax.random.normal(k4, (out_channels,), jnp.float32) * 0.01
    # Matmul-ready layouts; bf16 weights (f32 accumulation happens in the kernel).
    w1m = jnp.transpose(w1, (2, 3, 1, 0)).reshape(9 * in_channels, out_channels)
    w2m = jnp.transpose(w2, (0, 2, 3, 1)).reshape(out_channels, 9 * out_channels)
    return dict(
        w1=w1m.astype(jnp.bfloat16),
        # Biases kept for parameter-shape fidelity with the PyTorch module, but they are
        # provably a no-op through InstanceNorm2d(affine=False), so the kernel skips them.
        b1=b1,
        w2=w2m.astype(jnp.bfloat16),
        b2=b2,
        alphas=jnp.array([0.25, 0.25], jnp.float32),   # PReLU default init, one per layer
    )


@jax.jit
def conv_block_forward(x_nchw, params):
    # External API is NCHW (PyTorch). One tiny input transpose to NHWC; the kernel output
    # is (N, Cout, H*W) which is NCHW flattened -> free reshape on the way out.
    N, _, H, W = x_nchw.shape
    Cout = params["w1"].shape[1]
    x_nhwc = jnp.transpose(x_nchw, (0, 2, 3, 1))
    out = _conv_block_pallas(x_nhwc, params["w1"], params["w2"], params["alphas"])
    return out.reshape(N, Cout, H, W)


if __name__ == "__main__":
    key = jax.random.PRNGKey(0)
    kx, kp = jax.random.split(key)

    N, Cin, Cout, S = 2, 4, 8, 16
    x = jax.random.normal(kx, (N, Cin, S, S), jnp.float32)
    params = init_conv_block_params(kp, Cin, Cout)

    out = conv_block_forward(x, params)
    jax.block_until_ready(out)
    assert out.shape == (N, Cout, S, S), out.shape
    assert bool(jnp.isfinite(out).all())
    print("KERNEL_OK")
</pallas_src>

<mosaic_0001>
module attributes {stable_mosaic.version = 11 : i64} {
  func.func @_conv_block_kernel(%arg0: i32, %arg1: memref<1x16x16x4xf32, #tpu.memory_space<vmem>>, %arg2: memref<36x8xbf16, #tpu.memory_space<vmem>>, %arg3: memref<8x72xbf16, #tpu.memory_space<vmem>>, %arg4: memref<2xf32, #tpu.memory_space<smem>>, %arg5: memref<1x8x256xf32, #tpu.memory_space<vmem>>, %arg6: memref<18x18x4xf32, #tpu.memory_space<vmem>>, %arg7: memref<256x36xf32, #tpu.memory_space<vmem>>, %arg8: memref<18x18x8xf32, #tpu.memory_space<vmem>>, %arg9: memref<256x72xf32, #tpu.memory_space<vmem>>) attributes {dimension_semantics = [#tpu.dimension_semantics<parallel>], iteration_bounds = array<i64: 2>, scalar_prefetch = 0 : i64, scratch_operands = 4 : i64, tpu.core_type = #tpu.core_type<tc>, window_params = [{transform_indices = @transform_0, window_bounds = array<i64: 1, 16, 16, 4>}, {pipeline_mode = #tpu.pipeline_mode<synchronous>, transform_indices = @transform_1, window_bounds = array<i64: 36, 8>}, {pipeline_mode = #tpu.pipeline_mode<synchronous>, transform_indices = @transform_2, window_bounds = array<i64: 8, 72>}, {transform_indices = @transform_3, window_bounds = array<i64: 2>}, {transform_indices = @transform_4, window_bounds = array<i64: 1, 8, 256>}]} {
    %cst = arith.constant 0.000000e+00 : f32
    %0 = vector.broadcast %cst : f32 to vector<18x18x4xf32>
    %c0 = arith.constant 0 : index
    %c0_0 = arith.constant 0 : index
    %c0_1 = arith.constant 0 : index
    %1 = vector.load %arg6[%c0, %c0_0, %c0_1] : memref<18x18x4xf32, #tpu.memory_space<vmem>>, vector<18x18x4xf32>
    tpu.vector_store %arg6[%c0, %c0_0, %c0_1], %0 {strides = array<i32>} : memref<18x18x4xf32, #tpu.memory_space<vmem>>, vector<18x18x4xf32>,
    %c0_2 = arith.constant 0 : index
    %c0_3 = arith.constant 0 : index
    %c0_4 = arith.constant 0 : index
    %c0_5 = arith.constant 0 : index
    %2 = vector.load %arg1[%c0_2, %c0_3, %c0_4, %c0_5] : memref<1x16x16x4xf32, #tpu.memory_space<vmem>>, vector<1x16x16x4xf32>
    %3 = vector.shape_cast %2 : vector<1x16x16x4xf32> to vector<16x16x4xf32>
    %c1 = arith.constant 1 : index
    %c1_6 = arith.constant 1 : index
    %c0_7 = arith.constant 0 : index
    %4 = vector.load %arg6[%c1, %c1_6, %c0_7] : memref<18x18x4xf32, #tpu.memory_space<vmem>>, vector<16x16x4xf32>
    tpu.vector_store %arg6[%c1, %c1_6, %c0_7], %3 {strides = array<i32>} : memref<18x18x4xf32, #tpu.memory_space<vmem>>, vector<16x16x4xf32>,
    %c0_8 = arith.constant 0 : index
    %5 = memref.load %arg4[%c0_8] : memref<2xf32, #tpu.memory_space<smem>>
    %c0_9 = arith.constant 0 : index
    %c0_10 = arith.constant 0 : index
    %c0_11 = arith.constant 0 : index
    %6 = vector.load %arg6[%c0_9, %c0_10, %c0_11] : memref<18x18x4xf32, #tpu.memory_space<vmem>>, vector<16x16x4xf32>
    %7 = vector.shape_cast %6 : vector<16x16x4xf32> to vector<256x4xf32>
    %c0_12 = arith.constant 0 : index
    %c0_13 = arith.constant 0 : index
    %8 = vector.load %arg7[%c0_12, %c0_13] : memref<256x36xf32, #tpu.memory_space<vmem>>, vector<256x4xf32>
    tpu.vector_store %arg7[%c0_12, %c0_13], %7 {strides = array<i32>} : memref<256x36xf32, #tpu.memory_space<vmem>>, vector<256x4xf32>,
    %c0_14 = arith.constant 0 : index
    %c1_15 = arith.constant 1 : index
    %c0_16 = arith.constant 0 : index
    %9 = vector.load %arg6[%c0_14, %c1_15, %c0_16] : memref<18x18x4xf32, #tpu.memory_space<vmem>>, vector<16x16x4xf32>
    %10 = vector.shape_cast %9 : vector<16x16x4xf32> to vector<256x4xf32>
    %c0_17 = arith.constant 0 : index
    %c4 = arith.constant 4 : index
    %11 = vector.load %arg7[%c0_17, %c4] : memref<256x36xf32, #tpu.memory_space<vmem>>, vector<256x4xf32>
    tpu.vector_store %arg7[%c0_17, %c4], %10 {strides = array<i32>} : memref<256x36xf32, #tpu.memory_space<vmem>>, vector<256x4xf32>,
    %c0_18 = arith.constant 0 : index
    %c2 = arith.constant 2 : index
    %c0_19 = arith.constant 0 : index
    %12 = vector.load %arg6[%c0_18, %c2, %c0_19] : memref<18x18x4xf32, #tpu.memory_space<vmem>>, vector<16x16x4xf32>
    %13 = vector.shape_cast %12 : vector<16x16x4xf32> to vector<256x4xf32>
    %c0_20 = arith.constant 0 : index
    %c8 = arith.constant 8 : index
    %14 = vector.load %arg7[%c0_20, %c8] : memref<256x36xf32, #tpu.memory_space<vmem>>, vector<256x4xf32>
    tpu.vector_store %arg7[%c0_20, %c8], %13 {strides = array<i32>} : memref<256x36xf32, #tpu.memory_space<vmem>>, vector<256x4xf32>,
    %c1_21 = arith.constant 1 : index
    %c0_22 = arith.constant 0 : index
    %c0_23 = arith.constant 0 : index
    %15 = vector.load %arg6[%c1_21, %c0_22, %c0_23] : memref<18x18x4xf32, #tpu.memory_space<vmem>>, vector<16x16x4xf32>
    %16 = vector.shape_cast %15 : vector<16x16x4xf32> to vector<256x4xf32>
    %c0_24 = arith.constant 0 : index
    %c12 = arith.constant 12 : index
    %17 = vector.load %arg7[%c0_24, %c12] : memref<256x36xf32, #tpu.memory_space<vmem>>, vector<256x4xf32>
    tpu.vector_store %arg7[%c0_24, %c12], %16 {strides = array<i32>} : memref<256x36xf32, #tpu.memory_space<vmem>>, vector<256x4xf32>,
    %c1_25 = arith.constant 1 : index
    %c1_26 = arith.constant 1 : index
    %c0_27 = arith.constant 0 : index
    %18 = vector.load %arg6[%c1_25, %c1_26, %c0_27] : memref<18x18x4xf32, #tpu.memory_space<vmem>>, vector<16x16x4xf32>
    %19 = vector.shape_cast %18 : vector<16x16x4xf32> to vector<256x4xf32>
    %c0_28 = arith.constant 0 : index
    %c16 = arith.constant 16 : index
    %20 = vector.load %arg7[%c0_28, %c16] : memref<256x36xf32, #tpu.memory_space<vmem>>, vector<256x4xf32>
    tpu.vector_store %arg7[%c0_28, %c16], %19 {strides = array<i32>} : memref<256x36xf32, #tpu.memory_space<vmem>>, vector<256x4xf32>,
    %c1_29 = arith.constant 1 : index
    %c2_30 = arith.constant 2 : index
    %c0_31 = arith.constant 0 : index
    %21 = vector.load %arg6[%c1_29, %c2_30, %c0_31] : memref<18x18x4xf32, #tpu.memory_space<vmem>>, vector<16x16x4xf32>
    %22 = vector.shape_cast %21 : vector<16x16x4xf32> to vector<256x4xf32>
    %c0_32 = arith.constant 0 : index
    %c20 = arith.constant 20 : index
    %23 = vector.load %arg7[%c0_32, %c20] : memref<256x36xf32, #tpu.memory_space<vmem>>, vector<256x4xf32>
    tpu.vector_store %arg7[%c0_32, %c20], %22 {strides = array<i32>} : memref<256x36xf32, #tpu.memory_space<vmem>>, vector<256x4xf32>,
    %c2_33 = arith.constant 2 : index
    %c0_34 = arith.constant 0 : index
    %c0_35 = arith.constant 0 : index
    %24 = vector.load %arg6[%c2_33, %c0_34, %c0_35] : memref<18x18x4xf32, #tpu.memory_space<vmem>>, vector<16x16x4xf32>
    %25 = vector.shape_cast %24 : vector<16x16x4xf32> to vector<256x4xf32>
    %c0_36 = arith.constant 0 : index
    %c24 = arith.constant 24 : index
    %26 = vector.load %arg7[%c0_36, %c24] : memref<256x36xf32, #tpu.memory_space<vmem>>, vector<256x4xf32>
    tpu.vector_store %arg7[%c0_36, %c24], %25 {strides = array<i32>} : memref<256x36xf32, #tpu.memory_space<vmem>>, vector<256x4xf32>,
    %c2_37 = arith.constant 2 : index
    %c1_38 = arith.constant 1 : index
    %c0_39 = arith.constant 0 : index
    %27 = vector.load %arg6[%c2_37, %c1_38, %c0_39] : memref<18x18x4xf32, #tpu.memory_space<vmem>>, vector<16x16x4xf32>
    %28 = vector.shape_cast %27 : vector<16x16x4xf32> to vector<256x4xf32>
    %c0_40 = arith.constant 0 : index
    %c28 = arith.constant 28 : index
    %29 = vector.load %arg7[%c0_40, %c28] : memref<256x36xf32, #tpu.memory_space<vmem>>, vector<256x4xf32>
    tpu.vector_store %arg7[%c0_40, %c28], %28 {strides = array<i32>} : memref<256x36xf32, #tpu.memory_space<vmem>>, vector<256x4xf32>,
    %c2_41 = arith.constant 2 : index
    %c2_42 = arith.constant 2 : index
    %c0_43 = arith.constant 0 : index
    %30 = vector.load %arg6[%c2_41, %c2_42, %c0_43] : memref<18x18x4xf32, #tpu.memory_space<vmem>>, vector<16x16x4xf32>
    %31 = vector.shape_cast %30 : vector<16x16x4xf32> to vector<256x4xf32>
    %c0_44 = arith.constant 0 : index
    %c32 = arith.constant 32 : index
    %32 = vector.load %arg7[%c0_44, %c32] : memref<256x36xf32, #tpu.memory_space<vmem>>, vector<256x4xf32>
    tpu.vector_store %arg7[%c0_44, %c32], %31 {strides = array<i32>} : memref<256x36xf32, #tpu.memory_space<vmem>>, vector<256x4xf32>,
    %c0_45 = arith.constant 0 : index
    %c0_46 = arith.constant 0 : index
    %33 = vector.load %arg7[%c0_45, %c0_46] : memref<256x36xf32, #tpu.memory_space<vmem>>, vector<256x36xf32>
    %34 = arith.truncf %33 : vector<256x36xf32> to vector<256x36xbf16>
    %c0_47 = arith.constant 0 : index
    %c0_48 = arith.constant 0 : index
    %35 = vector.load %arg2[%c0_47, %c0_48] : memref<36x8xbf16, #tpu.memory_space<vmem>>, vector<36x8xbf16>
    %cst_49 = arith.constant dense<0.000000e+00> : vector<256x8xf32>
    %36 = tpu.matmul %34, %35, %cst_49 {dimension_numbers = #tpu.dot_dimension_numbers<[1], [0], [0], [1], [0, 0, 1, 1], [], []>} : vector<256x36xbf16>, vector<36x8xbf16>, vector<256x8xf32> -> vector<256x8xf32>
    %cst_50 = arith.constant dense<0.000000e+00> : vector<8xf32>
    %37 = vector.multi_reduction <add>, %36, %cst_50 [0] : vector<256x8xf32> to vector<8xf32>
    %38 = vector.shape_cast %37 : vector<8xf32> to vector<1x8xf32>
    %cst_51 = arith.constant 2.560000e+02 : f32
    %39 = vector.broadcast %cst_51 : f32 to vector<1x8xf32>
    %40 = arith.divf %38, %39 : vector<1x8xf32>
    %41 = vector.broadcast %40 : vector<1x8xf32> to vector<256x8xf32>
    %42 = arith.subf %36, %41 : vector<256x8xf32>
    %43 = arith.mulf %42, %42 : vector<256x8xf32>
    %cst_52 = arith.constant dense<0.000000e+00> : vector<8xf32>
    %44 = vector.multi_reduction <add>, %43, %cst_52 [0] : vector<256x8xf32> to vector<8xf32>
    %45 = vector.shape_cast %44 : vector<8xf32> to vector<1x8xf32>
    %cst_53 = arith.constant 2.560000e+02 : f32
    %46 = vector.broadcast %cst_53 : f32 to vector<1x8xf32>
    %47 = arith.divf %45, %46 : vector<1x8xf32>
    %cst_54 = arith.constant 9.99999974E-6 : f32
    %48 = vector.broadcast %cst_54 : f32 to vector<1x8xf32>
    %49 = arith.addf %47, %48 : vector<1x8xf32>
    %50 = math.rsqrt %49 : vector<1x8xf32>
    %51 = vector.broadcast %50 : vector<1x8xf32> to vector<256x8xf32>
    %52 = arith.mulf %42, %51 : vector<256x8xf32>
    %cst_55 = arith.constant 0.000000e+00 : f32
    %53 = vector.broadcast %cst_55 : f32 to vector<256x8xf32>
    %54 = arith.cmpf oge, %52, %53 : vector<256x8xf32>
    %55 = vector.broadcast %5 : f32 to vector<256x8xf32>
    %56 = arith.mulf %55, %52 : vector<256x8xf32>
    %57 = arith.select %54, %52, %56 : vector<256x8xi1>, vector<256x8xf32>
    %cst_56 = arith.constant 0.000000e+00 : f32
    %58 = vector.broadcast %cst_56 : f32 to vector<18x18x8xf32>
    %c0_57 = arith.constant 0 : index
    %c0_58 = arith.constant 0 : index
    %c0_59 = arith.constant 0 : index
    %59 = vector.load %arg8[%c0_57, %c0_58, %c0_59] : memref<18x18x8xf32, #tpu.memory_space<vmem>>, vector<18x18x8xf32>
    tpu.vector_store %arg8[%c0_57, %c0_58, %c0_59], %58 {strides = array<i32>} : memref<18x18x8xf32, #tpu.memory_space<vmem>>, vector<18x18x8xf32>,
    %60 = vector.shape_cast %57 : vector<256x8xf32> to vector<16x16x8xf32>
    %c1_60 = arith.constant 1 : index
    %c1_61 = arith.constant 1 : index
    %c0_62 = arith.constant 0 : index
    %61 = vector.load %arg8[%c1_60, %c1_61, %c0_62] : memref<18x18x8xf32, #tpu.memory_space<vmem>>, vector<16x16x8xf32>
    tpu.vector_store %arg8[%c1_60, %c1_61, %c0_62], %60 {strides = array<i32>} : memref<18x18x8xf32, #tpu.memory_space<vmem>>, vector<16x16x8xf32>,
    %c1_63 = arith.constant 1 : index
    %62 = memref.load %arg4[%c1_63] : memref<2xf32, #tpu.memory_space<smem>>
    %c0_64 = arith.constant 0 : index
    %c0_65 = arith.constant 0 : index
    %c0_66 = arith.constant 0 : index
    %63 = vector.load %arg8[%c0_64, %c0_65, %c0_66] : memref<18x18x8xf32, #tpu.memory_space<vmem>>, vector<16x16x8xf32>
    %64 = vector.shape_cast %63 : vector<16x16x8xf32> to vector<256x8xf32>
    %c0_67 = arith.constant 0 : index
    %c0_68 = arith.constant 0 : index
    %65 = vector.load %arg9[%c0_67, %c0_68] : memref<256x72xf32, #tpu.memory_space<vmem>>, vector<256x8xf32>
    tpu.vector_store %arg9[%c0_67, %c0_68], %64 {strides = array<i32>} : memref<256x72xf32, #tpu.memory_space<vmem>>, vector<256x8xf32>,
    %c0_69 = arith.constant 0 : index
    %c1_70 = arith.constant 1 : index
    %c0_71 = arith.constant 0 : index
    %66 = vector.load %arg8[%c0_69, %c1_70, %c0_71] : memref<18x18x8xf32, #tpu.memory_space<vmem>>, vector<16x16x8xf32>
    %67 = vector.shape_cast %66 : vector<16x16x8xf32> to vector<256x8xf32>
    %c0_72 = arith.constant 0 : index
    %c8_73 = arith.constant 8 : index
    %68 = vector.load %arg9[%c0_72, %c8_73] : memref<256x72xf32, #tpu.memory_space<vmem>>, vector<256x8xf32>
    tpu.vector_store %arg9[%c0_72, %c8_73], %67 {strides = array<i32>} : memref<256x72xf32, #tpu.memory_space<vmem>>, vector<256x8xf32>,
    %c0_74 = arith.constant 0 : index
    %c2_75 = arith.constant 2 : index
    %c0_76 = arith.constant 0 : index
    %69 = vector.load %arg8[%c0_74, %c2_75, %c0_76] : memref<18x18x8xf32, #tpu.memory_space<vmem>>, vector<16x16x8xf32>
    %70 = vector.shape_cast %69 : vector<16x16x8xf32> to vector<256x8xf32>
    %c0_77 = arith.constant 0 : index
    %c16_78 = arith.constant 16 : index
    %71 = vector.load %arg9[%c0_77, %c16_78] : memref<256x72xf32, #tpu.memory_space<vmem>>, vector<256x8xf32>
    tpu.vector_store %arg9[%c0_77, %c16_78], %70 {strides = array<i32>} : memref<256x72xf32, #tpu.memory_space<vmem>>, vector<256x8xf32>,
    %c1_79 = arith.constant 1 : index
    %c0_80 = arith.constant 0 : index
    %c0_81 = arith.constant 0 : index
    %72 = vector.load %arg8[%c1_79, %c0_80, %c0_81] : memref<18x18x8xf32, #tpu.memory_space<vmem>>, vector<16x16x8xf32>
    %73 = vector.shape_cast %72 : vector<16x16x8xf32> to vector<256x8xf32>
    %c0_82 = arith.constant 0 : index
    %c24_83 = arith.constant 24 : index
    %74 = vector.load %arg9[%c0_82, %c24_83] : memref<256x72xf32, #tpu.memory_space<vmem>>, vector<256x8xf32>
    tpu.vector_store %arg9[%c0_82, %c24_83], %73 {strides = array<i32>} : memref<256x72xf32, #tpu.memory_space<vmem>>, vector<256x8xf32>,
    %c1_84 = arith.constant 1 : index
    %c1_85 = arith.constant 1 : index
    %c0_86 = arith.constant 0 : index
    %75 = vector.load %arg8[%c1_84, %c1_85, %c0_86] : memref<18x18x8xf32, #tpu.memory_space<vmem>>, vector<16x16x8xf32>
    %76 = vector.shape_cast %75 : vector<16x16x8xf32> to vector<256x8xf32>
    %c0_87 = arith.constant 0 : index
    %c32_88 = arith.constant 32 : index
    %77 = vector.load %arg9[%c0_87, %c32_88] : memref<256x72xf32, #tpu.memory_space<vmem>>, vector<256x8xf32>
    tpu.vector_store %arg9[%c0_87, %c32_88], %76 {strides = array<i32>} : memref<256x72xf32, #tpu.memory_space<vmem>>, vector<256x8xf32>,
    %c1_89 = arith.constant 1 : index
    %c2_90 = arith.constant 2 : index
    %c0_91 = arith.constant 0 : index
    %78 = vector.load %arg8[%c1_89, %c2_90, %c0_91] : memref<18x18x8xf32, #tpu.memory_space<vmem>>, vector<16x16x8xf32>
    %79 = vector.shape_cast %78 : vector<16x16x8xf32> to vector<256x8xf32>
    %c0_92 = arith.constant 0 : index
    %c40 = arith.constant 40 : index
    %80 = vector.load %arg9[%c0_92, %c40] : memref<256x72xf32, #tpu.memory_space<vmem>>, vector<256x8xf32>
    tpu.vector_store %arg9[%c0_92, %c40], %79 {strides = array<i32>} : memref<256x72xf32, #tpu.memory_space<vmem>>, vector<256x8xf32>,
    %c2_93 = arith.constant 2 : index
    %c0_94 = arith.constant 0 : index
    %c0_95 = arith.constant 0 : index
    %81 = vector.load %arg8[%c2_93, %c0_94, %c0_95] : memref<18x18x8xf32, #tpu.memory_space<vmem>>, vector<16x16x8xf32>
    %82 = vector.shape_cast %81 : vector<16x16x8xf32> to vector<256x8xf32>
    %c0_96 = arith.constant 0 : index
    %c48 = arith.constant 48 : index
    %83 = vector.load %arg9[%c0_96, %c48] : memref<256x72xf32, #tpu.memory_space<vmem>>, vector<256x8xf32>
    tpu.vector_store %arg9[%c0_96, %c48], %82 {strides = array<i32>} : memref<256x72xf32, #tpu.memory_space<vmem>>, vector<256x8xf32>,
    %c2_97 = arith.constant 2 : index
    %c1_98 = arith.constant 1 : index
    %c0_99 = arith.constant 0 : index
    %84 = vector.load %arg8[%c2_97, %c1_98, %c0_99] : memref<18x18x8xf32, #tpu.memory_space<vmem>>, vector<16x16x8xf32>
    %85 = vector.shape_cast %84 : vector<16x16x8xf32> to vector<256x8xf32>
    %c0_100 = arith.constant 0 : index
    %c56 = arith.constant 56 : index
    %86 = vector.load %arg9[%c0_100, %c56] : memref<256x72xf32, #tpu.memory_space<vmem>>, vector<256x8xf32>
    tpu.vector_store %arg9[%c0_100, %c56], %85 {strides = array<i32>} : memref<256x72xf32, #tpu.memory_space<vmem>>, vector<256x8xf32>,
    %c2_101 = arith.constant 2 : index
    %c2_102 = arith.constant 2 : index
    %c0_103 = arith.constant 0 : index
    %87 = vector.load %arg8[%c2_101, %c2_102, %c0_103] : memref<18x18x8xf32, #tpu.memory_space<vmem>>, vector<16x16x8xf32>
    %88 = vector.shape_cast %87 : vector<16x16x8xf32> to vector<256x8xf32>
    %c0_104 = arith.constant 0 : index
    %c64 = arith.constant 64 : index
    %89 = vector.load %arg9[%c0_104, %c64] : memref<256x72xf32, #tpu.memory_space<vmem>>, vector<256x8xf32>
    tpu.vector_store %arg9[%c0_104, %c64], %88 {strides = array<i32>} : memref<256x72xf32, #tpu.memory_space<vmem>>, vector<256x8xf32>,
    %c0_105 = arith.constant 0 : index
    %c0_106 = arith.constant 0 : index
    %90 = vector.load %arg9[%c0_105, %c0_106] : memref<256x72xf32, #tpu.memory_space<vmem>>, vector<256x72xf32>
    %91 = arith.truncf %90 : vector<256x72xf32> to vector<256x72xbf16>
    %c0_107 = arith.constant 0 : index
    %c0_108 = arith.constant 0 : index
    %92 = vector.load %arg3[%c0_107, %c0_108] : memref<8x72xbf16, #tpu.memory_space<vmem>>, vector<8x72xbf16>
    %cst_109 = arith.constant dense<0.000000e+00> : vector<8x256xf32>
    %93 = tpu.matmul %92, %91, %cst_109 {dimension_numbers = #tpu.dot_dimension_numbers<[1], [1], [0], [0], [0, 0, 1, 0], [], []>} : vector<8x72xbf16>, vector<256x72xbf16>, vector<8x256xf32> -> vector<8x256xf32>
    %cst_110 = arith.constant dense<0.000000e+00> : vector<8xf32>
    %94 = vector.multi_reduction <add>, %93, %cst_110 [1] : vector<8x256xf32> to vector<8xf32>
    %95 = vector.shape_cast %94 : vector<8xf32> to vector<8x1xf32>
    %cst_111 = arith.constant 2.560000e+02 : f32
    %96 = vector.broadcast %cst_111 : f32 to vector<8x1xf32>
    %97 = arith.divf %95, %96 : vector<8x1xf32>
    %98 = vector.broadcast %97 : vector<8x1xf32> to vector<8x256xf32>
    %99 = arith.subf %93, %98 : vector<8x256xf32>
    %100 = arith.mulf %99, %99 : vector<8x256xf32>
    %cst_112 = arith.constant dense<0.000000e+00> : vector<8xf32>
    %101 = vector.multi_reduction <add>, %100, %cst_112 [1] : vector<8x256xf32> to vector<8xf32>
    %102 = vector.shape_cast %101 : vector<8xf32> to vector<8x1xf32>
    %cst_113 = arith.constant 2.560000e+02 : f32
    %103 = vector.broadcast %cst_113 : f32 to vector<8x1xf32>
    %104 = arith.divf %102, %103 : vector<8x1xf32>
    %cst_114 = arith.constant 9.99999974E-6 : f32
    %105 = vector.broadcast %cst_114 : f32 to vector<8x1xf32>
    %106 = arith.addf %104, %105 : vector<8x1xf32>
    %107 = math.rsqrt %106 : vector<8x1xf32>
    %108 = vector.broadcast %107 : vector<8x1xf32> to vector<8x256xf32>
    %109 = arith.mulf %99, %108 : vector<8x256xf32>
    %cst_115 = arith.constant 0.000000e+00 : f32
    %110 = vector.broadcast %cst_115 : f32 to vector<8x256xf32>
    %111 = arith.cmpf oge, %109, %110 : vector<8x256xf32>
    %112 = vector.broadcast %62 : f32 to vector<8x256xf32>
    %113 = arith.mulf %112, %109 : vector<8x256xf32>
    %114 = arith.select %111, %109, %113 : vector<8x256xi1>, vector<8x256xf32>
    %c0_116 = arith.constant 0 : index
    %c0_117 = arith.constant 0 : index
    %c0_118 = arith.constant 0 : index
    %115 = vector.load %arg5[%c0_116, %c0_117, %c0_118] : memref<1x8x256xf32, #tpu.memory_space<vmem>>, vector<1x8x256xf32>
    %116 = vector.shape_cast %115 : vector<1x8x256xf32> to vector<8x256xf32>
    %117 = vector.shape_cast %114 : vector<8x256xf32> to vector<1x8x256xf32>
    tpu.vector_store %arg5[%c0_116, %c0_117, %c0_118], %117 {strides = array<i32>} : memref<1x8x256xf32, #tpu.memory_space<vmem>>, vector<1x8x256xf32>,
    return
  }
  func.func @transform_0(%arg0: i32) -> (i32, i32, i32, i32) {
    %c0_i32 = arith.constant 0 : i32
    %c0_i32_0 = arith.constant 0 : i32
    %c0_i32_1 = arith.constant 0 : i32
    %c0_i32_2 = arith.constant 0 : i32
    return %arg0, %c0_i32, %c0_i32_0, %c0_i32_1 : i32, i32, i32, i32
  }
  func.func @transform_1(%arg0: i32) -> (i32, i32) {
    %c0_i32 = arith.constant 0 : i32
    %c0_i32_0 = arith.constant 0 : i32
    %c0_i32_1 = arith.constant 0 : i32
    return %c0_i32, %c0_i32_0 : i32, i32
  }
  func.func @transform_2(%arg0: i32) -> (i32, i32) {
    %c0_i32 = arith.constant 0 : i32
    %c0_i32_0 = arith.constant 0 : i32
    %c0_i32_1 = arith.constant 0 : i32
    return %c0_i32, %c0_i32_0 : i32, i32
  }
  func.func @transform_3(%arg0: i32) -> i32 {
    %c0_i32 = arith.constant 0 : i32
    %c0_i32_0 = arith.constant 0 : i32
    return %c0_i32 : i32
  }
  func.func @transform_4(%arg0: i32) -> (i32, i32, i32) {
    %c0_i32 = arith.constant 0 : i32
    %c0_i32_0 = arith.constant 0 : i32
    %c0_i32_1 = arith.constant 0 : i32
    return %arg0, %c0_i32, %c0_i32_0 : i32, i32, i32
  }
}

</mosaic_0001>

<llo_original>
// kernel: conv_block_forward.1
$region0: #{conv_block_forward.1}
  #allocation0 [shape = 'u32[]', space=smem, size = 0x4, offset = 0x4, fixed_abs, tag = 'smem constant byte address 0x4 - core index']
  #allocation1 [shape = 'u32[72,128]{1,0:T(1,128)}', space=vmem, size = 0x9000, scoped, tag = 'internal scratch']
  #allocation2 [shape = 'f32[18,18,4]{2,1,0:T(8,128)}', space=vmem, size = 0x36000, scoped, tag = 'scratch operand']
  #allocation3 [shape = 'f32[256,36]{1,0:T(8,128)}', space=vmem, size = 0x20000, scoped, tag = 'scratch operand']
  #allocation4 [shape = 'f32[18,18,8]{2,1,0:T(8,128)}', space=vmem, size = 0x36000, scoped, tag = 'scratch operand']
  #allocation5 [shape = 'f32[256,72]{1,0:T(8,128)}', space=vmem, size = 0x20000, scoped, tag = 'scratch operand']
  %s0 = inlined_call_operand.vmem [shape: f32[2,16,16,4], index: 0, kind: input, shape index: {}]
  %s1 = inlined_call_operand.vmem [shape: bf16[36,8], index: 1, kind: input, shape index: {}]
  %s2 = inlined_call_operand.vmem [shape: bf16[8,72], index: 2, kind: input, shape index: {}]
  %s3 = inlined_call_operand.vmem [shape: f32[2], index: 3, kind: input, shape index: {}]
  %s4 = inlined_call_operand.vmem [shape: f32[2,8,256], index: 4, kind: output, shape index: {}]
  %s5 = sld [smem:[#allocation0]]
  $region53: #{conv_block_forward.1} parent=0
    _
  %s7 = ssub.s32 1, %s5
  %s8 = scalar_select 0, %s7, %s5
  $region1: #{conv_block_forward.1} parent=0
    #allocation6 [shape = 'u8[512]{0}', space=smem, size = 0x200, scoped, tag = 'input window, operand 3, single buffered']
    #allocation7 [shape = 's32[2]{0}', space=sflag, size = 0x8, scoped, tag = 'scoped memory for conv_block_forward.1']
    %9 = vsyncpa [#allocation7], 0
    loop: start=0, step=1, limit=4
    $region2: #{conv_block_forward.1} parent=1 // loop_pre_header
      _
    $region3: #{conv_block_forward.1} parent=1 // loop_header
      %s11 = sphi 0, %s15
      %p12 = scmp.ge.s32.totalorder %s11, 4
      %s21 = sphi 0, %s23
      %s24 = sphi 0, %s21
      %s25 = sphi 0, %s24
      %s41 = sphi 0, %s25
      %s45 = sphi 0, %s45
      %s47 = sphi 0, %s45
      %s48 = sphi 0, %s47
      %s62 = sphi 0, %s48
      %s66 = sphi 0, %s66
      %s68 = sphi 0, %s66
      %s69 = sphi 0, %s68
      %s83 = sphi 0, %s69
      %s87 = sphi 0, %s87
      %s89 = sphi 0, %s87
      %s90 = sphi 0, %s89
      %s104 = sphi 0, %s90
      %s110 = sphi 0, %s112
      %s113 = sphi 0, %s110
      %s114 = sphi 0, %s113
      %s130 = sphi 0, %s114
    $region4: #{conv_block_forward.1} parent=1 // loop_header_branch
      %14 = sbr.rel (%p12) target = $region8
    $region5: #{conv_block_forward.1} parent=1 // loop_body
      %s16 = ssub.s32 %s11, 1
      %s17 = ssub.s32 %s11, 2
      %s18 = sadd.s32 %s11, 1
      %s19 = ssub.s32 %s11, %s18
      %p20 = scmp.eq.s32.totalorder %s19, 0
      %s22 = sadd.s32 %s21, 1
      %s23 = scalar_select %p20, %s21, %s22
      %p26 = pneg %p20
      %p27 = scmp.eq.s32.totalorder %s11, 1
      %p28 = por %p26, %p27
      %p29 = scmp.ne.s32.totalorder %s21, %s24
      %p30 = scmp.eq.s32.totalorder %s11, 0
      %p31 = por %p29, %p30
      %p32 = scmp.ne.s32.totalorder %s21, %s24
      %p33 = scmp.eq.s32.totalorder %s16, 1
      %p34 = por %p32, %p33
      %p35 = scmp.ne.s32.totalorder %s24, %s25
      %p36 = scmp.eq.s32.totalorder %s16, 0
      %p37 = por %p35, %p36
      %p38 = scmp.ne.s32.totalorder %s24, %s25
      %p39 = scmp.eq.s32.totalorder %s17, 1
      %p40 = por %p38, %p39
      %p42 = scmp.ne.s32.totalorder %s25, %s41
      %p43 = scmp.eq.s32.totalorder %s17, 0
      %p44 = por %p42, %p43
      %s46 = sadd.s32 %s45, 1
      %p49 = scmp.eq.s32.totalorder %s11, 1
      %p50 = scmp.ne.s32.totalorder %s45, %s47
      %p51 = scmp.eq.s32.totalorder %s11, 0
      %p52 = por %p50, %p51
      %p53 = scmp.ne.s32.totalorder %s45, %s47
      %p54 = scmp.eq.s32.totalorder %s16, 1
      %p55 = por %p53, %p54
      %p56 = scmp.ne.s32.totalorder %s47, %s48
      %p57 = scmp.eq.s32.totalorder %s16, 0
      %p58 = por %p56, %p57
      %p59 = scmp.ne.s32.totalorder %s47, %s48
      %p60 = scmp.eq.s32.totalorder %s17, 1
      %p61 = por %p59, %p60
      %p63 = scmp.ne.s32.totalorder %s48, %s62
      %p64 = scmp.eq.s32.totalorder %s17, 0
      %p65 = por %p63, %p64
      %s67 = sadd.s32 %s66, 1
      %p70 = scmp.eq.s32.totalorder %s11, 1
      %p71 = scmp.ne.s32.totalorder %s66, %s68
      %p72 = scmp.eq.s32.totalorder %s11, 0
      %p73 = por %p71, %p72
      %p74 = scmp.ne.s32.totalorder %s66, %s68
      %p75 = scmp.eq.s32.totalorder %s16, 1
      %p76 = por %p74, %p75
      %p77 = scmp.ne.s32.totalorder %s68, %s69
      %p78 = scmp.eq.s32.totalorder %s16, 0
      %p79 = por %p77, %p78
      %p80 = scmp.ne.s32.totalorder %s68, %s69
      %p81 = scmp.eq.s32.totalorder %s17, 1
      %p82 = por %p80, %p81
      %p84 = scmp.ne.s32.totalorder %s69, %s83
      %p85 = scmp.eq.s32.totalorder %s17, 0
      %p86 = por %p84, %p85
      %s88 = sadd.s32 %s87, 1
      %p91 = scmp.eq.s32.totalorder %s11, 1
      %p92 = scmp.ne.s32.totalorder %s87, %s89
      %p93 = scmp.eq.s32.totalorder %s11, 0
      %p94 = por %p92, %p93
      %p95 = scmp.ne.s32.totalorder %s87, %s89
      %p96 = scmp.eq.s32.totalorder %s16, 1
      %p97 = por %p95, %p96
      %p98 = scmp.ne.s32.totalorder %s89, %s90
      %p99 = scmp.eq.s32.totalorder %s16, 0
      %p100 = por %p98, %p99
      %p101 = scmp.ne.s32.totalorder %s89, %s90
      %p102 = scmp.eq.s32.totalorder %s17, 1
      %p103 = por %p101, %p102
      %p105 = scmp.ne.s32.totalorder %s90, %s104
      %p106 = scmp.eq.s32.totalorder %s17, 0
      %p107 = por %p105, %p106
      %s108 = ssub.s32 %s11, %s18
      %p109 = scmp.eq.s32.totalorder %s108, 0
      %s111 = sadd.s32 %s110, 1
      %s112 = scalar_select %p109, %s110, %s111
      %p115 = pneg %p109
      %p116 = scmp.eq.s32.totalorder %s11, 1
      %p117 = por %p115, %p116
      %p118 = scmp.ne.s32.totalorder %s110, %s113
      %p119 = scmp.eq.s32.totalorder %s11, 0
      %p120 = por %p118, %p119
      %p121 = scmp.ne.s32.totalorder %s110, %s113
      %p122 = scmp.eq.s32.totalorder %s16, 1
      %p123 = por %p121, %p122
      %p124 = scmp.ne.s32.totalorder %s113, %s114
      %p125 = scmp.eq.s32.totalorder %s16, 0
      %p126 = por %p124, %p125
      %p127 = scmp.ne.s32.totalorder %s113, %s114
      %p128 = scmp.eq.s32.totalorder %s17, 1
      %p129 = por %p127, %p128
      %p131 = scmp.ne.s32.totalorder %s114, %s130
      %p132 = scmp.eq.s32.totalorder %s17, 0
      %p133 = por %p131, %p132
      %p134 = scmp.le.s32.totalorder 1, %s11
      %p135 = scmp.lt.s32.totalorder %s11, 3
      %p136 = pnand %p134, %p135
      %p137 = pneg %p136
      // Predicated region
      $region9: #{conv_block_forward.1} parent=5 // pred_check
        _
      $region10: #{conv_block_forward.1} parent=5 // pred_check_branch
        %139 = sbr.rel (%p136) target = $region12
      $region11: #{conv_block_forward.1} parent=5 // pred_region
        %s140 = ssub.s32 %s11, 1
        // Predicated region
        $region13: #{conv_block_forward.1} parent=11 // pred_check
          %p141 = pneg %p58
        $region14: #{conv_block_forward.1} parent=11 // pred_check_branch
          %143 = sbr.rel (%p141) target = $region16
        $region15: #{conv_block_forward.1} parent=11 // pred_region
          _
        $region16: #{conv_block_forward.1} parent=11 // pred_fallthru
          _
        // Predicated region
        $region17: #{conv_block_forward.1} parent=11 // pred_check
          %p144 = pneg %p79
        $region18: #{conv_block_forward.1} parent=11 // pred_check_branch
          %146 = sbr.rel (%p144) target = $region20
        $region19: #{conv_block_forward.1} parent=11 // pred_region
          _
        $region20: #{conv_block_forward.1} parent=11 // pred_fallthru
          _
        // Predicated region
        $region21: #{conv_block_forward.1} parent=11 // pred_check
          %p147 = pneg %p100
        $region22: #{conv_block_forward.1} parent=11 // pred_check_branch
          %149 = sbr.rel (%p147) target = $region24
        $region23: #{conv_block_forward.1} parent=11 // pred_region
          %151 = vsyncadd [#allocation7], 0
          %s153 = sshll.u32 %s3, 4
          %s154 = int_to_ptr.vmem [resolvable:$true] %s153
          %156 = dma.vmem_to_smem %s154, 16, [#allocation6], [#allocation7]
        $region24: #{conv_block_forward.1} parent=11 // pred_fallthru
          _
      $region12: #{conv_block_forward.1} parent=5 // pred_fallthru
        _
      %p157 = scmp.lt.s32.totalorder %s11, 2
      // Predicated region
      $region25: #{conv_block_forward.1} parent=5 // pred_check
        %p158 = pneg %p157
      $region26: #{conv_block_forward.1} parent=5 // pred_check_branch
        %160 = sbr.rel (%p158) target = $region28
      $region27: #{conv_block_forward.1} parent=5 // pred_region
        // Predicated region
        $region29: #{conv_block_forward.1} parent=27 // pred_check
          %p161 = pneg %p31
        $region30: #{conv_block_forward.1} parent=27 // pred_check_branch
          %163 = sbr.rel (%p161) target = $region32
        $region31: #{conv_block_forward.1} parent=27 // pred_region
          %p164 = scmp.lt.s32.totalorder %s11, 1
          %s165 = scalar_select %p164, %s11, 1
          %s166 = smul.addr %s165, 32
          %s167 = smul.addr %s166, 8
          %s168 = scalar_lea.vmem %s0, %s167
        $region32: #{conv_block_forward.1} parent=27 // pred_fallthru
          _
      $region28: #{conv_block_forward.1} parent=5 // pred_fallthru
        _
      %p169 = scmp.le.s32.totalorder 1, %s11
      %p170 = scmp.lt.s32.totalorder %s11, 3
      %p171 = pnand %p169, %p170
      %p172 = pneg %p171
      // Predicated region
      $region33: #{conv_block_forward.1} parent=5 // pred_check
        _
      $region34: #{conv_block_forward.1} parent=5 // pred_check_branch
        %174 = sbr.rel (%p171) target = $region36
      $region35: #{conv_block_forward.1} parent=5 // pred_region
        %s175 = ssub.s32 %s11, 1
        // Predicated region
        $region37: #{conv_block_forward.1} parent=35 // pred_check
          %p176 = pneg %p100
        $region38: #{conv_block_forward.1} parent=35 // pred_check_branch
          %178 = sbr.rel (%p176) target = $region40
        $region39: #{conv_block_forward.1} parent=35 // pred_region
          %180 = dma.done [#allocation7], 16
        $region40: #{conv_block_forward.1} parent=35 // pred_fallthru
          _
        %181 = sfence
        %p182 = scmp.lt.s32.totalorder %s16, 1
        %s183 = scalar_select %p182, %s16, 1
        %s184 = smul.addr %s183, 32
        %s185 = smul.addr %s184, 8
        %s186 = scalar_lea.vmem %s0, %s185
        %p187 = pneg %p37
        %p188 = pneg %p34
        %p189 = pneg %p58
        %p190 = pneg %p55
        %p191 = pneg %p79
        %p192 = pneg %p76
        %p193 = pneg %p100
        %p194 = pneg %p97
        %p195 = pneg %p126
        %p196 = pneg %p123
        %p197 = scmp.lt.s32.totalorder %s16, 1
        %s198 = scalar_select %p197, %s16, 1
        %s199 = smul.addr %s198, 2
        %s200 = smul.addr %s199, 8
        %s201 = scalar_lea.vmem %s4, %s200
        %p202 = scmp.lt.s32.totalorder %s16, 1
        %s203 = scalar_select %p202, %s16, 1
        %s204 = smul.addr %s203, 32
        %s205 = smul.addr %s204, 8
        %s206 = scalar_lea.vmem %s0, %s205
        %p207 = scmp.lt.s32.totalorder %s16, 1
        %s208 = scalar_select %p207, %s16, 1
        %s209 = smul.addr %s208, 2
        %s210 = smul.addr %s209, 8
        %s211 = scalar_lea.vmem %s4, %s210
        %vm213 = vcmask 31744
        %214 = vst.msk [vmem:[#allocation2] sm:$0xff] %vm213, 0.0
        %215 = vst.msk [vmem:[#allocation2 + $0x8] sm:$0xff] %vm213, 0.0
        %vm216 = vcmask 25600
        %217 = vst.msk [vmem:[#allocation2 + $0x10] sm:$0x3] %vm216, 0.0
        %218 = vst.msk [vmem:[#allocation2 + $0x18] sm:$0xff] %vm213, 0.0
        %219 = vst.msk [vmem:[#allocation2 + $0x20] sm:$0xff] %vm213, 0.0
        %220 = vst.msk [vmem:[#allocation2 + $0x28] sm:$0x3] %vm216, 0.0
        %221 = vst.msk [vmem:[#allocation2 + $0x30] sm:$0xff] %vm213, 0.0
        %222 = vst.msk [vmem:[#allocation2 + $0x38] sm:$0xff] %vm213, 0.0
        %223 = vst.msk [vmem:[#allocation2 + $0x40] sm:$0x3] %vm216, 0.0
        %224 = vst.msk [vmem:[#allocation2 + $0x48] sm:$0xff] %vm213, 0.0
        %225 = vst.msk [vmem:[#allocation2 + $0x50] sm:$0xff] %vm213, 0.0
        %226 = vst.msk [vmem:[#allocation2 + $0x58] sm:$0x3] %vm216, 0.0
        %227 = vst.msk [vmem:[#allocation2 + $0x60] sm:$0xff] %vm213, 0.0
        %228 = vst.msk [vmem:[#allocation2 + $0x68] sm:$0xff] %vm213, 0.0
        %229 = vst.msk [vmem:[#allocation2 + $0x70] sm:$0x3] %vm216, 0.0
        %230 = vst.msk [vmem:[#allocation2 + $0x78] sm:$0xff] %vm213, 0.0
        %231 = vst.msk [vmem:[#allocation2 + $0x80] sm:$0xff] %vm213, 0.0
        %232 = vst.msk [vmem:[#allocation2 + $0x88] sm:$0x3] %vm216, 0.0
        %233 = vst.msk [vmem:[#allocation2 + $0x90] sm:$0xff] %vm213, 0.0
        %234 = vst.msk [vmem:[#allocation2 + $0x98] sm:$0xff] %vm213, 0.0
        %235 = vst.msk [vmem:[#allocation2 + $0xa0] sm:$0x3] %vm216, 0.0
        %236 = vst.msk [vmem:[#allocation2 + $0xa8] sm:$0xff] %vm213, 0.0
        %237 = vst.msk [vmem:[#allocation2 + $0xb0] sm:$0xff] %vm213, 0.0
        %238 = vst.msk [vmem:[#allocation2 + $0xb8] sm:$0x3] %vm216, 0.0
        %239 = vst.msk [vmem:[#allocation2 + $0xc0] sm:$0xff] %vm213, 0.0
        %240 = vst.msk [vmem:[#allocation2 + $0xc8] sm:$0xff] %vm213, 0.0
        %241 = vst.msk [vmem:[#allocation2 + $0xd0] sm:$0x3] %vm216, 0.0
        %242 = vst.msk [vmem:[#allocation2 + $0xd8] sm:$0xff] %vm213, 0.0
        %243 = vst.msk [vmem:[#allocation2 + $0xe0] sm:$0xff] %vm213, 0.0
        %244 = vst.msk [vmem:[#allocation2 + $0xe8] sm:$0x3] %vm216, 0.0
        %245 = vst.msk [vmem:[#allocation2 + $0xf0] sm:$0xff] %vm213, 0.0
        %246 = vst.msk [vmem:[#allocation2 + $0xf8] sm:$0xff] %vm213, 0.0
        %247 = vst.msk [vmem:[#allocation2 + $0x100] sm:$0x3] %vm216, 0.0
        %248 = vst.msk [vmem:[#allocation2 + $0x108] sm:$0xff] %vm213, 0.0
        %249 = vst.msk [vmem:[#allocation2 + $0x110] sm:$0xff] %vm213, 0.0
        %250 = vst.msk [vmem:[#allocation2 + $0x118] sm:$0x3] %vm216, 0.0
        %251 = vst.msk [vmem:[#allocation2 + $0x120] sm:$0xff] %vm213, 0.0
        %252 = vst.msk [vmem:[#allocation2 + $0x128] sm:$0xff] %vm213, 0.0
        %253 = vst.msk [vmem:[#allocation2 + $0x130] sm:$0x3] %vm216, 0.0
        %254 = vst.msk [vmem:[#allocation2 + $0x138] sm:$0xff] %vm213, 0.0
        %255 = vst.msk [vmem:[#allocation2 + $0x140] sm:$0xff] %vm213, 0.0
        %256 = vst.msk [vmem:[#allocation2 + $0x148] sm:$0x3] %vm216, 0.0
        %257 = vst.msk [vmem:[#allocation2 + $0x150] sm:$0xff] %vm213, 0.0
        %258 = vst.msk [vmem:[#allocation2 + $0x158] sm:$0xff] %vm213, 0.0
        %259 = vst.msk [vmem:[#allocation2 + $0x160] sm:$0x3] %vm216, 0.0
        %260 = vst.msk [vmem:[#allocation2 + $0x168] sm:$0xff] %vm213, 0.0
        %261 = vst.msk [vmem:[#allocation2 + $0x170] sm:$0xff] %vm213, 0.0
        %262 = vst.msk [vmem:[#allocation2 + $0x178] sm:$0x3] %vm216, 0.0
        %263 = vst.msk [vmem:[#allocation2 + $0x180] sm:$0xff] %vm213, 0.0
        %264 = vst.msk [vmem:[#allocation2 + $0x188] sm:$0xff] %vm213, 0.0
        %265 = vst.msk [vmem:[#allocation2 + $0x190] sm:$0x3] %vm216, 0.0
        %266 = vst.msk [vmem:[#allocation2 + $0x198] sm:$0xff] %vm213, 0.0
        %267 = vst.msk [vmem:[#allocation2 + $0x1a0] sm:$0xff] %vm213, 0.0
        %268 = vst.msk [vmem:[#allocation2 + $0x1a8] sm:$0x3] %vm216, 0.0
        %v269 = vld [vmem:[%s206] sm:$0xff]
        %v270 = vld [vmem:[%s206 + $0x8] sm:$0xff]
        %v271 = vld [vmem:[%s206 + $0x10] sm:$0xff]
        %v272 = vld [vmem:[%s206 + $0x18] sm:$0xff]
        %v273 = vld [vmem:[%s206 + $0x20] sm:$0xff]
        %v274 = vld [vmem:[%s206 + $0x28] sm:$0xff]
        %v275 = vld [vmem:[%s206 + $0x30] sm:$0xff]
        %v276 = vld [vmem:[%s206 + $0x38] sm:$0xff]
        %v277 = vld [vmem:[%s206 + $0x40] sm:$0xff]
        %v278 = vld [vmem:[%s206 + $0x48] sm:$0xff]
        %v279 = vld [vmem:[%s206 + $0x50] sm:$0xff]
        %v280 = vld [vmem:[%s206 + $0x58] sm:$0xff]
        %v281 = vld [vmem:[%s206 + $0x60] sm:$0xff]
        %v282 = vld [vmem:[%s206 + $0x68] sm:$0xff]
        %v283 = vld [vmem:[%s206 + $0x70] sm:$0xff]
        %v284 = vld [vmem:[%s206 + $0x78] sm:$0xff]
        %v285 = vld [vmem:[%s206 + $0x80] sm:$0xff]
        %v286 = vld [vmem:[%s206 + $0x88] sm:$0xff]
        %v287 = vld [vmem:[%s206 + $0x90] sm:$0xff]
        %v288 = vld [vmem:[%s206 + $0x98] sm:$0xff]
        %v289 = vld [vmem:[%s206 + $0xa0] sm:$0xff]
        %v290 = vld [vmem:[%s206 + $0xa8] sm:$0xff]
        %v291 = vld [vmem:[%s206 + $0xb0] sm:$0xff]
        %v292 = vld [vmem:[%s206 + $0xb8] sm:$0xff]
        %v293 = vld [vmem:[%s206 + $0xc0] sm:$0xff]
        %v294 = vld [vmem:[%s206 + $0xc8] sm:$0xff]
        %v295 = vld [vmem:[%s206 + $0xd0] sm:$0xff]
        %v296 = vld [vmem:[%s206 + $0xd8] sm:$0xff]
        %v297 = vld [vmem:[%s206 + $0xe0] sm:$0xff]
        %v298 = vld [vmem:[%s206 + $0xe8] sm:$0xff]
        %v299 = vld [vmem:[%s206 + $0xf0] sm:$0xff]
        %v300 = vld [vmem:[%s206 + $0xf8] sm:$0xff]
        %s301 = scalar_lea.vmem [#allocation2], 24
        %302 = vst.msk [vmem:[%s301 + $0x1] sm:$0xff] %vm213, %v269
        %303 = vst.msk [vmem:[%s301 + $0x9] sm:$0xff] %vm213, %v270
        %304 = vst.msk [vmem:[%s301 + $0x19] sm:$0xff] %vm213, %v271
        %305 = vst.msk [vmem:[%s301 + $0x21] sm:$0xff] %vm213, %v272
        %306 = vst.msk [vmem:[%s301 + $0x31] sm:$0xff] %vm213, %v273
        %307 = vst.msk [vmem:[%s301 + $0x39] sm:$0xff] %vm213, %v274
        %308 = vst.msk [vmem:[%s301 + $0x49] sm:$0xff] %vm213, %v275
        %309 = vst.msk [vmem:[%s301 + $0x51] sm:$0xff] %vm213, %v276
        %310 = vst.msk [vmem:[%s301 + $0x61] sm:$0xff] %vm213, %v277
        %311 = vst.msk [vmem:[%s301 + $0x69] sm:$0xff] %vm213, %v278
        %312 = vst.msk [vmem:[%s301 + $0x79] sm:$0xff] %vm213, %v279
        %313 = vst.msk [vmem:[%s301 + $0x81] sm:$0xff] %vm213, %v280
        %314 = vst.msk [vmem:[%s301 + $0x91] sm:$0xff] %vm213, %v281
        %315 = vst.msk [vmem:[%s301 + $0x99] sm:$0xff] %vm213, %v282
        %316 = vst.msk [vmem:[%s301 + $0xa9] sm:$0xff] %vm213, %v283
        %317 = vst.msk [vmem:[%s301 + $0xb1] sm:$0xff] %vm213, %v284
        %318 = vst.msk [vmem:[%s301 + $0xc1] sm:$0xff] %vm213, %v285
        %319 = vst.msk [vmem:[%s301 + $0xc9] sm:$0xff] %vm213, %v286
        %320 = vst.msk [vmem:[%s301 + $0xd9] sm:$0xff] %vm213, %v287
        %321 = vst.msk [vmem:[%s301 + $0xe1] sm:$0xff] %vm213, %v288
        %322 = vst.msk [vmem:[%s301 + $0xf1] sm:$0xff] %vm213, %v289
        %323 = vst.msk [vmem:[%s301 + $0xf9] sm:$0xff] %vm213, %v290
        %324 = vst.msk [vmem:[%s301 + $0x109] sm:$0xff] %vm213, %v291
        %325 = vst.msk [vmem:[%s301 + $0x111] sm:$0xff] %vm213, %v292
        %326 = vst.msk [vmem:[%s301 + $0x121] sm:$0xff] %vm213, %v293
        %327 = vst.msk [vmem:[%s301 + $0x129] sm:$0xff] %vm213, %v294
        %328 = vst.msk [vmem:[%s301 + $0x139] sm:$0xff] %vm213, %v295
        %329 = vst.msk [vmem:[%s301 + $0x141] sm:$0xff] %vm213, %v296
        %330 = vst.msk [vmem:[%s301 + $0x151] sm:$0xff] %vm213, %v297
        %331 = vst.msk [vmem:[%s301 + $0x159] sm:$0xff] %vm213, %v298
        %332 = vst.msk [vmem:[%s301 + $0x169] sm:$0xff] %vm213, %v299
        %333 = vst.msk [vmem:[%s301 + $0x171] sm:$0xff] %vm213, %v300
        %s334 = sld [smem:[#allocation6]]
        %v335 = vld [vmem:[#allocation2] sm:$0xff]
        %v336 = vld [vmem:[#allocation2 + $0x8] sm:$0xff]
        %v337 = vld [vmem:[#allocation2 + $0x18] sm:$0xff]
        %v338 = vld [vmem:[#allocation2 + $0x20] sm:$0xff]
        %v339 = vld [vmem:[#allocation2 + $0x30] sm:$0xff]
        %v340 = vld [vmem:[#allocation2 + $0x38] sm:$0xff]
        %v341 = vld [vmem:[#allocation2 + $0x48] sm:$0xff]
        %v342 = vld [vmem:[#allocation2 + $0x50] sm:$0xff]
        %v343 = vld [vmem:[#allocation2 + $0x60] sm:$0xff]
        %v344 = vld [vmem:[#allocation2 + $0x68] sm:$0xff]
        %v345 = vld [vmem:[#allocation2 + $0x78] sm:$0xff]
        %v346 = vld [vmem:[#allocation2 + $0x80] sm:$0xff]
        %v347 = vld [vmem:[#allocation2 + $0x90] sm:$0xff]
        %v348 = vld [vmem:[#allocation2 + $0x98] sm:$0xff]
        %v349 = vld [vmem:[#allocation2 + $0xa8] sm:$0xff]
        %v350 = vld [vmem:[#allocation2 + $0xb0] sm:$0xff]
        %v351 = vld [vmem:[#allocation2 + $0xc0] sm:$0xff]
        %v352 = vld [vmem:[#allocation2 + $0xc8] sm:$0xff]
        %v353 = vld [vmem:[#allocation2 + $0xd8] sm:$0xff]
        %v354 = vld [vmem:[#allocation2 + $0xe0] sm:$0xff]
        %v355 = vld [vmem:[#allocation2 + $0xf0] sm:$0xff]
        %v356 = vld [vmem:[#allocation2 + $0xf8] sm:$0xff]
        %v357 = vld [vmem:[#allocation2 + $0x108] sm:$0xff]
        %v358 = vld [vmem:[#allocation2 + $0x110] sm:$0xff]
        %v359 = vld [vmem:[#allocation2 + $0x120] sm:$0xff]
        %v360 = vld [vmem:[#allocation2 + $0x128] sm:$0xff]
        %v361 = vld [vmem:[#allocation2 + $0x138] sm:$0xff]
        %v362 = vld [vmem:[#allocation2 + $0x140] sm:$0xff]
        %v363 = vld [vmem:[#allocation2 + $0x150] sm:$0xff]
        %v364 = vld [vmem:[#allocation2 + $0x158] sm:$0xff]
        %v365 = vld [vmem:[#allocation2 + $0x168] sm:$0xff]
        %v366 = vld [vmem:[#allocation2 + $0x170] sm:$0xff]
        %367 = vst.msk [vmem:[#allocation3] sm:$0xff] %vm213, %v335
        %368 = vst.msk [vmem:[#allocation3 + $0x8] sm:$0xff] %vm213, %v336
        %369 = vst.msk [vmem:[#allocation3 + $0x10] sm:$0xff] %vm213, %v337
        %370 = vst.msk [vmem:[#allocation3 + $0x18] sm:$0xff] %vm213, %v338
        %371 = vst.msk [vmem:[#allocation3 + $0x20] sm:$0xff] %vm213, %v339
        %372 = vst.msk [vmem:[#allocation3 + $0x28] sm:$0xff] %vm213, %v340
        %373 = vst.msk [vmem:[#allocation3 + $0x30] sm:$0xff] %vm213, %v341
        %374 = vst.msk [vmem:[#allocation3 + $0x38] sm:$0xff] %vm213, %v342
        %375 = vst.msk [vmem:[#allocation3 + $0x40] sm:$0xff] %vm213, %v343
        %376 = vst.msk [vmem:[#allocation3 + $0x48] sm:$0xff] %vm213, %v344
        %377 = vst.msk [vmem:[#allocation3 + $0x50] sm:$0xff] %vm213, %v345
        %378 = vst.msk [vmem:[#allocation3 + $0x58] sm:$0xff] %vm213, %v346
        %379 = vst.msk [vmem:[#allocation3 + $0x60] sm:$0xff] %vm213, %v347
        %380 = vst.msk [vmem:[#allocation3 + $0x68] sm:$0xff] %vm213, %v348
        %381 = vst.msk [vmem:[#allocation3 + $0x70] sm:$0xff] %vm213, %v349
        %382 = vst.msk [vmem:[#allocation3 + $0x78] sm:$0xff] %vm213, %v350
        %383 = vst.msk [vmem:[#allocation3 + $0x80] sm:$0xff] %vm213, %v351
        %384 = vst.msk [vmem:[#allocation3 + $0x88] sm:$0xff] %vm213, %v352
        %385 = vst.msk [vmem:[#allocation3 + $0x90] sm:$0xff] %vm213, %v353
        %386 = vst.msk [vmem:[#allocation3 + $0x98] sm:$0xff] %vm213, %v354
        %387 = vst.msk [vmem:[#allocation3 + $0xa0] sm:$0xff] %vm213, %v355
        %388 = vst.msk [vmem:[#allocation3 + $0xa8] sm:$0xff] %vm213, %v356
        %389 = vst.msk [vmem:[#allocation3 + $0xb0] sm:$0xff] %vm213, %v357
        %390 = vst.msk [vmem:[#allocation3 + $0xb8] sm:$0xff] %vm213, %v358
        %391 = vst.msk [vmem:[#allocation3 + $0xc0] sm:$0xff] %vm213, %v359
        %392 = vst.msk [vmem:[#allocation3 + $0xc8] sm:$0xff] %vm213, %v360
        %393 = vst.msk [vmem:[#allocation3 + $0xd0] sm:$0xff] %vm213, %v361
        %394 = vst.msk [vmem:[#allocation3 + $0xd8] sm:$0xff] %vm213, %v362
        %395 = vst.msk [vmem:[#allocation3 + $0xe0] sm:$0xff] %vm213, %v363
        %396 = vst.msk [vmem:[#allocation3 + $0xe8] sm:$0xff] %vm213, %v364
        %397 = vst.msk [vmem:[#allocation3 + $0xf0] sm:$0xff] %vm213, %v365
        %398 = vst.msk [vmem:[#allocation3 + $0xf8] sm:$0xff] %vm213, %v366
        %v399 = vld [vmem:[#allocation2 + $0x1] sm:$0xff]
        %v400 = vld [vmem:[#allocation2 + $0x9] sm:$0xff]
        %v401 = vld [vmem:[#allocation2 + $0x19] sm:$0xff]
        %v402 = vld [vmem:[#allocation2 + $0x21] sm:$0xff]
        %v403 = vld [vmem:[#allocation2 + $0x31] sm:$0xff]
        %v404 = vld [vmem:[#allocation2 + $0x39] sm:$0xff]
        %v405 = vld [vmem:[#allocation2 + $0x49] sm:$0xff]
        %v406 = vld [vmem:[#allocation2 + $0x51] sm:$0xff]
        %v407 = vld [vmem:[#allocation2 + $0x61] sm:$0xff]
        %v408 = vld [vmem:[#allocation2 + $0x69] sm:$0xff]
        %v409 = vld [vmem:[#allocation2 + $0x79] sm:$0xff]
        %v410 = vld [vmem:[#allocation2 + $0x81] sm:$0xff]
        %v411 = vld [vmem:[#allocation2 + $0x91] sm:$0xff]
        %v412 = vld [vmem:[#allocation2 + $0x99] sm:$0xff]
        %v413 = vld [vmem:[#allocation2 + $0xa9] sm:$0xff]
        %v414 = vld [vmem:[#allocation2 + $0xb1] sm:$0xff]
        %v415 = vld [vmem:[#allocation2 + $0xc1] sm:$0xff]
        %v416 = vld [vmem:[#allocation2 + $0xc9] sm:$0xff]
        %v417 = vld [vmem:[#allocation2 + $0xd9] sm:$0xff]
        %v418 = vld [vmem:[#allocation2 + $0xe1] sm:$0xff]
        %v419 = vld [vmem:[#allocation2 + $0xf1] sm:$0xff]
        %v420 = vld [vmem:[#allocation2 + $0xf9] sm:$0xff]
        %v421 = vld [vmem:[#allocation2 + $0x109] sm:$0xff]
        %v422 = vld [vmem:[#allocation2 + $0x111] sm:$0xff]
        %v423 = vld [vmem:[#allocation2 + $0x121] sm:$0xff]
        %v424 = vld [vmem:[#allocation2 + $0x129] sm:$0xff]
        %v425 = vld [vmem:[#allocation2 + $0x139] sm:$0xff]
        %v426 = vld [vmem:[#allocation2 + $0x141] sm:$0xff]
        %v427 = vld [vmem:[#allocation2 + $0x151] sm:$0xff]
        %v428 = vld [vmem:[#allocation2 + $0x159] sm:$0xff]
        %v429 = vld [vmem:[#allocation2 + $0x169] sm:$0xff]
        %v430 = vld [vmem:[#allocation2 + $0x171] sm:$0xff]
        %463 = vrot.lane.b32.xlu0 %v399, 4
        %v464 = vpop.permute.xlu0 %463
        %465 = vrot.lane.b32.xlu0 %v400, 4
        %v466 = vpop.permute.xlu0 %465
        %467 = vrot.lane.b32.xlu0 %v401, 4
        %v468 = vpop.permute.xlu0 %467
        %469 = vrot.lane.b32.xlu0 %v402, 4
        %v470 = vpop.permute.xlu0 %469
        %471 = vrot.lane.b32.xlu0 %v403, 4
        %v472 = vpop.permute.xlu0 %471
        %473 = vrot.lane.b32.xlu0 %v404, 4
        %v474 = vpop.permute.xlu0 %473
        %475 = vrot.lane.b32.xlu0 %v405, 4
        %v476 = vpop.permute.xlu0 %475
        %477 = vrot.lane.b32.xlu0 %v406, 4
        %v478 = vpop.permute.xlu0 %477
        %479 = vrot.lane.b32.xlu0 %v407, 4
        %v480 = vpop.permute.xlu0 %479
        %481 = vrot.lane.b32.xlu0 %v408, 4
        %v482 = vpop.permute.xlu0 %481
        %483 = vrot.lane.b32.xlu0 %v409, 4
        %v484 = vpop.permute.xlu0 %483
        %485 = vrot.lane.b32.xlu0 %v410, 4
        %v486 = vpop.permute.xlu0 %485
        %487 = vrot.lane.b32.xlu0 %v411, 4
        %v488 = vpop.permute.xlu0 %487
        %489 = vrot.lane.b32.xlu0 %v412, 4
        %v490 = vpop.permute.xlu0 %489
        %491 = vrot.lane.b32.xlu0 %v413, 4
        %v492 = vpop.permute.xlu0 %491
        %493 = vrot.lane.b32.xlu0 %v414, 4
        %v494 = vpop.permute.xlu0 %493
        %495 = vrot.lane.b32.xlu0 %v415, 4
        %v496 = vpop.permute.xlu0 %495
        %497 = vrot.lane.b32.xlu0 %v416, 4
        %v498 = vpop.permute.xlu0 %497
        %499 = vrot.lane.b32.xlu0 %v417, 4
        %v500 = vpop.permute.xlu0 %499
        %501 = vrot.lane.b32.xlu0 %v418, 4
        %v502 = vpop.permute.xlu0 %501
        %503 = vrot.lane.b32.xlu0 %v419, 4
        %v504 = vpop.permute.xlu0 %503
        %505 = vrot.lane.b32.xlu0 %v420, 4
        %v506 = vpop.permute.xlu0 %505
        %507 = vrot.lane.b32.xlu0 %v421, 4
        %v508 = vpop.permute.xlu0 %507
        %509 = vrot.lane.b32.xlu0 %v422, 4
        %v510 = vpop.permute.xlu0 %509
        %511 = vrot.lane.b32.xlu0 %v423, 4
        %v512 = vpop.permute.xlu0 %511
        %513 = vrot.lane.b32.xlu0 %v424, 4
        %v514 = vpop.permute.xlu0 %513
        %515 = vrot.lane.b32.xlu0 %v425, 4
        %v516 = vpop.permute.xlu0 %515
        %517 = vrot.lane.b32.xlu0 %v426, 4
        %v518 = vpop.permute.xlu0 %517
        %519 = vrot.lane.b32.xlu0 %v427, 4
        %v520 = vpop.permute.xlu0 %519
        %521 = vrot.lane.b32.xlu0 %v428, 4
        %v522 = vpop.permute.xlu0 %521
        %523 = vrot.lane.b32.xlu0 %v429, 4
        %v524 = vpop.permute.xlu0 %523
        %525 = vrot.lane.b32.xlu0 %v430, 4
        %v526 = vpop.permute.xlu0 %525
        %vm559 = vcmask 64544
        %560 = vst.msk [vmem:[#allocation3] sm:$0xff] %vm559, %v464
        %561 = vst.msk [vmem:[#allocation3 + $0x8] sm:$0xff] %vm559, %v466
        %562 = vst.msk [vmem:[#allocation3 + $0x10] sm:$0xff] %vm559, %v468
        %563 = vst.msk [vmem:[#allocation3 + $0x18] sm:$0xff] %vm559, %v470
        %564 = vst.msk [vmem:[#allocation3 + $0x20] sm:$0xff] %vm559, %v472
        %565 = vst.msk [vmem:[#allocation3 + $0x28] sm:$0xff] %vm559, %v474
        %566 = vst.msk [vmem:[#allocation3 + $0x30] sm:$0xff] %vm559, %v476
        %567 = vst.msk [vmem:[#allocation3 + $0x38] sm:$0xff] %vm559, %v478
        %568 = vst.msk [vmem:[#allocation3 + $0x40] sm:$0xff] %vm559, %v480
        %569 = vst.msk [vmem:[#allocation3 + $0x48] sm:$0xff] %vm559, %v482
        %570 = vst.msk [vmem:[#allocation3 + $0x50] sm:$0xff] %vm559, %v484
        %571 = vst.msk [vmem:[#allocation3 + $0x58] sm:$0xff] %vm559, %v486
        %572 = vst.msk [vmem:[#allocation3 + $0x60] sm:$0xff] %vm559, %v488
        %573 = vst.msk [vmem:[#allocation3 + $0x68] sm:$0xff] %vm559, %v490
        %574 = vst.msk [vmem:[#allocation3 + $0x70] sm:$0xff] %vm559, %v492
        %575 = vst.msk [vmem:[#allocation3 + $0x78] sm:$0xff] %vm559, %v494
        %576 = vst.msk [vmem:[#allocation3 + $0x80] sm:$0xff] %vm559, %v496
        %577 = vst.msk [vmem:[#allocation3 + $0x88] sm:$0xff] %vm559, %v498
        %578 = vst.msk [vmem:[#allocation3 + $0x90] sm:$0xff] %vm559, %v500
        %579 = vst.msk [vmem:[#allocation3 + $0x98] sm:$0xff] %vm559, %v502
        %580 = vst.msk [vmem:[#allocation3 + $0xa0] sm:$0xff] %vm559, %v504
        %581 = vst.msk [vmem:[#allocation3 + $0xa8] sm:$0xff] %vm559, %v506
        %582 = vst.msk [vmem:[#allocation3 + $0xb0] sm:$0xff] %vm559, %v508
        %583 = vst.msk [vmem:[#allocation3 + $0xb8] sm:$0xff] %vm559, %v510
        %584 = vst.msk [vmem:[#allocation3 + $0xc0] sm:$0xff] %vm559, %v512
        %585 = vst.msk [vmem:[#allocation3 + $0xc8] sm:$0xff] %vm559, %v514
        %586 = vst.msk [vmem:[#allocation3 + $0xd0] sm:$0xff] %vm559, %v516
        %587 = vst.msk [vmem:[#allocation3 + $0xd8] sm:$0xff] %vm559, %v518
        %588 = vst.msk [vmem:[#allocation3 + $0xe0] sm:$0xff] %vm559, %v520
        %589 = vst.msk [vmem:[#allocation3 + $0xe8] sm:$0xff] %vm559, %v522
        %590 = vst.msk [vmem:[#allocation3 + $0xf0] sm:$0xff] %vm559, %v524
        %591 = vst.msk [vmem:[#allocation3 + $0xf8] sm:$0xff] %vm559, %v526
        %v592 = vld [vmem:[#allocation2 + $0x2] sm:$0xff]
        %v593 = vld [vmem:[#allocation2 + $0xa] sm:$0xff]
        %v594 = vld [vmem:[#allocation2 + $0x1a] sm:$0xff]
        %v595 = vld [vmem:[#allocation2 + $0x22] sm:$0xff]
        %v596 = vld [vmem:[#allocation2 + $0x32] sm:$0xff]
        %v597 = vld [vmem:[#allocation2 + $0x3a] sm:$0xff]
        %v598 = vld [vmem:[#allocation2 + $0x4a] sm:$0xff]
        %v599 = vld [vmem:[#allocation2 + $0x52] sm:$0xff]
        %v600 = vld [vmem:[#allocation2 + $0x62] sm:$0xff]
        %v601 = vld [vmem:[#allocation2 + $0x6a] sm:$0xff]
        %v602 = vld [vmem:[#allocation2 + $0x7a] sm:$0xff]
        %v603 = vld [vmem:[#allocation2 + $0x82] sm:$0xff]
        %v604 = vld [vmem:[#allocation2 + $0x92] sm:$0xff]
        %v605 = vld [vmem:[#allocation2 + $0x9a] sm:$0xff]
        %v606 = vld [vmem:[#allocation2 + $0xaa] sm:$0xff]
        %v607 = vld [vmem:[#allocation2 + $0xb2] sm:$0xff]
        %v608 = vld [vmem:[#allocation2 + $0xc2] sm:$0xff]
        %v609 = vld [vmem:[#allocation2 + $0xca] sm:$0xff]
        %v610 = vld [vmem:[#allocation2 + $0xda] sm:$0xff]
        %v611 = vld [vmem:[#allocation2 + $0xe2] sm:$0xff]
        %v612 = vld [vmem:[#allocation2 + $0xf2] sm:$0xff]
        %v613 = vld [vmem:[#allocation2 + $0xfa] sm:$0xff]
        %v614 = vld [vmem:[#allocation2 + $0x10a] sm:$0xff]
        %v615 = vld [vmem:[#allocation2 + $0x112] sm:$0xff]
        %v616 = vld [vmem:[#allocation2 + $0x122] sm:$0xff]
        %v617 = vld [vmem:[#allocation2 + $0x12a] sm:$0xff]
        %v618 = vld [vmem:[#allocation2 + $0x13a] sm:$0xff]
        %v619 = vld [vmem:[#allocation2 + $0x142] sm:$0xff]
        %v620 = vld [vmem:[#allocation2 + $0x152] sm:$0xff]
        %v621 = vld [vmem:[#allocation2 + $0x15a] sm:$0xff]
        %v622 = vld [vmem:[#allocation2 + $0x16a] sm:$0xff]
        %v623 = vld [vmem:[#allocation2 + $0x172] sm:$0xff]
        %656 = vrot.lane.b32.xlu0 %v592, 8
        %v657 = vpop.permute.xlu0 %656
        %658 = vrot.lane.b32.xlu0 %v593, 8
        %v659 = vpop.permute.xlu0 %658
        %660 = vrot.lane.b32.xlu0 %v594, 8
        %v661 = vpop.permute.xlu0 %660
        %662 = vrot.lane.b32.xlu0 %v595, 8
        %v663 = vpop.permute.xlu0 %662
        %664 = vrot.lane.b32.xlu0 %v596, 8
        %v665 = vpop.permute.xlu0 %664
        %666 = vrot.lane.b32.xlu0 %v597, 8
        %v667 = vpop.permute.xlu0 %666
        %668 = vrot.lane.b32.xlu0 %v598, 8
        %v669 = vpop.permute.xlu0 %668
        %670 = vrot.lane.b32.xlu0 %v599, 8
        %v671 = vpop.permute.xlu0 %670
        %672 = vrot.lane.b32.xlu0 %v600, 8
        %v673 = vpop.permute.xlu0 %672
        %674 = vrot.lane.b32.xlu0 %v601, 8
        %v675 = vpop.permute.xlu0 %674
        %676 = vrot.lane.b32.xlu0 %v602, 8
        %v677 = vpop.permute.xlu0 %676
        %678 = vrot.lane.b32.xlu0 %v603, 8
        %v679 = vpop.permute.xlu0 %678
        %680 = vrot.lane.b32.xlu0 %v604, 8
        %v681 = vpop.permute.xlu0 %680
        %682 = vrot.lane.b32.xlu0 %v605, 8
        %v683 = vpop.permute.xlu0 %682
        %684 = vrot.lane.b32.xlu0 %v606, 8
        %v685 = vpop.permute.xlu0 %684
        %686 = vrot.lane.b32.xlu0 %v607, 8
        %v687 = vpop.permute.xlu0 %686
        %688 = vrot.lane.b32.xlu0 %v608, 8
        %v689 = vpop.permute.xlu0 %688
        %690 = vrot.lane.b32.xlu0 %v609, 8
        %v691 = vpop.permute.xlu0 %690
        %692 = vrot.lane.b32.xlu0 %v610, 8
        %v693 = vpop.permute.xlu0 %692
        %694 = vrot.lane.b32.xlu0 %v611, 8
        %v695 = vpop.permute.xlu0 %694
        %696 = vrot.lane.b32.xlu0 %v612, 8
        %v697 = vpop.permute.xlu0 %696
        %698 = vrot.lane.b32.xlu0 %v613, 8
        %v699 = vpop.permute.xlu0 %698
        %700 = vrot.lane.b32.xlu0 %v614, 8
        %v701 = vpop.permute.xlu0 %700
        %702 = vrot.lane.b32.xlu0 %v615, 8
        %v703 = vpop.permute.xlu0 %702
        %704 = vrot.lane.b32.xlu0 %v616, 8
        %v705 = vpop.permute.xlu0 %704
        %706 = vrot.lane.b32.xlu0 %v617, 8
        %v707 = vpop.permute.xlu0 %706
        %708 = vrot.lane.b32.xlu0 %v618, 8
        %v709 = vpop.permute.xlu0 %708
        %710 = vrot.lane.b32.xlu0 %v619, 8
        %v711 = vpop.permute.xlu0 %710
        %712 = vrot.lane.b32.xlu0 %v620, 8
        %v713 = vpop.permute.xlu0 %712
        %714 = vrot.lane.b32.xlu0 %v621, 8
        %v715 = vpop.permute.xlu0 %714
        %716 = vrot.lane.b32.xlu0 %v622, 8
        %v717 = vpop.permute.xlu0 %716
        %718 = vrot.lane.b32.xlu0 %v623, 8
        %v719 = vpop.permute.xlu0 %718
        %vm752 = vcmask 97344
        %753 = vst.msk [vmem:[#allocation3] sm:$0xff] %vm752, %v657
        %754 = vst.msk [vmem:[#allocation3 + $0x8] sm:$0xff] %vm752, %v659
        %755 = vst.msk [vmem:[#allocation3 + $0x10] sm:$0xff] %vm752, %v661
        %756 = vst.msk [vmem:[#allocation3 + $0x18] sm:$0xff] %vm752, %v663
        %757 = vst.msk [vmem:[#allocation3 + $0x20] sm:$0xff] %vm752, %v665
        %758 = vst.msk [vmem:[#allocation3 + $0x28] sm:$0xff] %vm752, %v667
        %759 = vst.msk [vmem:[#allocation3 + $0x30] sm:$0xff] %vm752, %v669
        %760 = vst.msk [vmem:[#allocation3 + $0x38] sm:$0xff] %vm752, %v671
        %761 = vst.msk [vmem:[#allocation3 + $0x40] sm:$0xff] %vm752, %v673
        %762 = vst.msk [vmem:[#allocation3 + $0x48] sm:$0xff] %vm752, %v675
        %763 = vst.msk [vmem:[#allocation3 + $0x50] sm:$0xff] %vm752, %v677
        %764 = vst.msk [vmem:[#allocation3 + $0x58] sm:$0xff] %vm752, %v679
        %765 = vst.msk [vmem:[#allocation3 + $0x60] sm:$0xff] %vm752, %v681
        %766 = vst.msk [vmem:[#allocation3 + $0x68] sm:$0xff] %vm752, %v683
        %767 = vst.msk [vmem:[#allocation3 + $0x70] sm:$0xff] %vm752, %v685
        %768 = vst.msk [vmem:[#allocation3 + $0x78] sm:$0xff] %vm752, %v687
        %769 = vst.msk [vmem:[#allocation3 + $0x80] sm:$0xff] %vm752, %v689
        %770 = vst.msk [vmem:[#allocation3 + $0x88] sm:$0xff] %vm752, %v691
        %771 = vst.msk [vmem:[#allocation3 + $0x90] sm:$0xff] %vm752, %v693
        %772 = vst.msk [vmem:[#allocation3 + $0x98] sm:$0xff] %vm752, %v695
        %773 = vst.msk [vmem:[#allocation3 + $0xa0] sm:$0xff] %vm752, %v697
        %774 = vst.msk [vmem:[#allocation3 + $0xa8] sm:$0xff] %vm752, %v699
        %775 = vst.msk [vmem:[#allocation3 + $0xb0] sm:$0xff] %vm752, %v701
        %776 = vst.msk [vmem:[#allocation3 + $0xb8] sm:$0xff] %vm752, %v703
        %777 = vst.msk [vmem:[#allocation3 + $0xc0] sm:$0xff] %vm752, %v705
        %778 = vst.msk [vmem:[#allocation3 + $0xc8] sm:$0xff] %vm752, %v707
        %779 = vst.msk [vmem:[#allocation3 + $0xd0] sm:$0xff] %vm752, %v709
        %780 = vst.msk [vmem:[#allocation3 + $0xd8] sm:$0xff] %vm752, %v711
        %781 = vst.msk [vmem:[#allocation3 + $0xe0] sm:$0xff] %vm752, %v713
        %782 = vst.msk [vmem:[#allocation3 + $0xe8] sm:$0xff] %vm752, %v715
        %783 = vst.msk [vmem:[#allocation3 + $0xf0] sm:$0xff] %vm752, %v717
        %784 = vst.msk [vmem:[#allocation3 + $0xf8] sm:$0xff] %vm752, %v719
        %v785 = vld [vmem:[%s301] sm:$0xff]
        %v786 = vld [vmem:[%s301 + $0x8] sm:$0xff]
        %v787 = vld [vmem:[%s301 + $0x18] sm:$0xff]
        %v788 = vld [vmem:[%s301 + $0x20] sm:$0xff]
        %v789 = vld [vmem:[%s301 + $0x30] sm:$0xff]
        %v790 = vld [vmem:[%s301 + $0x38] sm:$0xff]
        %v791 = vld [vmem:[%s301 + $0x48] sm:$0xff]
        %v792 = vld [vmem:[%s301 + $0x50] sm:$0xff]
        %v793 = vld [vmem:[%s301 + $0x60] sm:$0xff]
        %v794 = vld [vmem:[%s301 + $0x68] sm:$0xff]
        %v795 = vld [vmem:[%s301 + $0x78] sm:$0xff]
        %v796 = vld [vmem:[%s301 + $0x80] sm:$0xff]
        %v797 = vld [vmem:[%s301 + $0x90] sm:$0xff]
        %v798 = vld [vmem:[%s301 + $0x98] sm:$0xff]
        %v799 = vld [vmem:[%s301 + $0xa8] sm:$0xff]
        %v800 = vld [vmem:[%s301 + $0xb0] sm:$0xff]
        %v801 = vld [vmem:[%s301 + $0xc0] sm:$0xff]
        %v802 = vld [vmem:[%s301 + $0xc8] sm:$0xff]
        %v803 = vld [vmem:[%s301 + $0xd8] sm:$0xff]
        %v804 = vld [vmem:[%s301 + $0xe0] sm:$0xff]
        %v805 = vld [vmem:[%s301 + $0xf0] sm:$0xff]
        %v806 = vld [vmem:[%s301 + $0xf8] sm:$0xff]
        %v807 = vld [vmem:[%s301 + $0x108] sm:$0xff]
        %v808 = vld [vmem:[%s301 + $0x110] sm:$0xff]
        %v809 = vld [vmem:[%s301 + $0x120] sm:$0xff]
        %v810 = vld [vmem:[%s301 + $0x128] sm:$0xff]
        %v811 = vld [vmem:[%s301 + $0x138] sm:$0xff]
        %v812 = vld [vmem:[%s301 + $0x140] sm:$0xff]
        %v813 = vld [vmem:[%s301 + $0x150] sm:$0xff]
        %v814 = vld [vmem:[%s301 + $0x158] sm:$0xff]
        %v815 = vld [vmem:[%s301 + $0x168] sm:$0xff]
        %v816 = vld [vmem:[%s301 + $0x170] sm:$0xff]
        %849 = vrot.lane.b32.xlu0 %v785, 12
        %v850 = vpop.permute.xlu0 %849
        %851 = vrot.lane.b32.xlu0 %v786, 12
        %v852 = vpop.permute.xlu0 %851
        %853 = vrot.lane.b32.xlu0 %v787, 12
        %v854 = vpop.permute.xlu0 %853
        %855 = vrot.lane.b32.xlu0 %v788, 12
        %v856 = vpop.permute.xlu0 %855
        %857 = vrot.lane.b32.xlu0 %v789, 12
        %v858 = vpop.permute.xlu0 %857
        %859 = vrot.lane.b32.xlu0 %v790, 12
        %v860 = vpop.permute.xlu0 %859
        %861 = vrot.lane.b32.xlu0 %v791, 12
        %v862 = vpop.permute.xlu0 %861
        %863 = vrot.lane.b32.xlu0 %v792, 12
        %v864 = vpop.permute.xlu0 %863
        %865 = vrot.lane.b32.xlu0 %v793, 12
        %v866 = vpop.permute.xlu0 %865
        %867 = vrot.lane.b32.xlu0 %v794, 12
        %v868 = vpop.permute.xlu0 %867
        %869 = vrot.lane.b32.xlu0 %v795, 12
        %v870 = vpop.permute.xlu0 %869
        %871 = vrot.lane.b32.xlu0 %v796, 12
        %v872 = vpop.permute.xlu0 %871
        %873 = vrot.lane.b32.xlu0 %v797, 12
        %v874 = vpop.permute.xlu0 %873
        %875 = vrot.lane.b32.xlu0 %v798, 12
        %v876 = vpop.permute.xlu0 %875
        %877 = vrot.lane.b32.xlu0 %v799, 12
        %v878 = vpop.permute.xlu0 %877
        %879 = vrot.lane.b32.xlu0 %v800, 12
        %v880 = vpop.permute.xlu0 %879
        %881 = vrot.lane.b32.xlu0 %v801, 12
        %v882 = vpop.permute.xlu0 %881
        %883 = vrot.lane.b32.xlu0 %v802, 12
        %v884 = vpop.permute.xlu0 %883
        %885 = vrot.lane.b32.xlu0 %v803, 12
        %v886 = vpop.permute.xlu0 %885
        %887 = vrot.lane.b32.xlu0 %v804, 12
        %v888 = vpop.permute.xlu0 %887
        %889 = vrot.lane.b32.xlu0 %v805, 12
        %v890 = vpop.permute.xlu0 %889
        %891 = vrot.lane.b32.xlu0 %v806, 12
        %v892 = vpop.permute.xlu0 %891
        %893 = vrot.lane.b32.xlu0 %v807, 12
        %v894 = vpop.permute.xlu0 %893
        %895 = vrot.lane.b32.xlu0 %v808, 12
        %v896 = vpop.permute.xlu0 %895
        %897 = vrot.lane.b32.xlu0 %v809, 12
        %v898 = vpop.permute.xlu0 %897
        %899 = vrot.lane.b32.xlu0 %v810, 12
        %v900 = vpop.permute.xlu0 %899
        %901 = vrot.lane.b32.xlu0 %v811, 12
        %v902 = vpop.permute.xlu0 %901
        %903 = vrot.lane.b32.xlu0 %v812, 12
        %v904 = vpop.permute.xlu0 %903
        %905 = vrot.lane.b32.xlu0 %v813, 12
        %v906 = vpop.permute.xlu0 %905
        %907 = vrot.lane.b32.xlu0 %v814, 12
        %v908 = vpop.permute.xlu0 %907
        %909 = vrot.lane.b32.xlu0 %v815, 12
        %v910 = vpop.permute.xlu0 %909
        %911 = vrot.lane.b32.xlu0 %v816, 12
        %v912 = vpop.permute.xlu0 %911
        %vm945 = vcmask 130144
        %946 = vst.msk [vmem:[#allocation3] sm:$0xff] %vm945, %v850
        %947 = vst.msk [vmem:[#allocation3 + $0x8] sm:$0xff] %vm945, %v852
        %948 = vst.msk [vmem:[#allocation3 + $0x10] sm:$0xff] %vm945, %v854
        %949 = vst.msk [vmem:[#allocation3 + $0x18] sm:$0xff] %vm945, %v856
        %950 = vst.msk [vmem:[#allocation3 + $0x20] sm:$0xff] %vm945, %v858
        %951 = vst.msk [vmem:[#allocation3 + $0x28] sm:$0xff] %vm945, %v860
        %952 = vst.msk [vmem:[#allocation3 + $0x30] sm:$0xff] %vm945, %v862
        %953 = vst.msk [vmem:[#allocation3 + $0x38] sm:$0xff] %vm945, %v864
        %954 = vst.msk [vmem:[#allocation3 + $0x40] sm:$0xff] %vm945, %v866
        %955 = vst.msk [vmem:[#allocation3 + $0x48] sm:$0xff] %vm945, %v868
        %956 = vst.msk [vmem:[#allocation3 + $0x50] sm:$0xff] %vm945, %v870
        %957 = vst.msk [vmem:[#allocation3 + $0x58] sm:$0xff] %vm945, %v872
        %958 = vst.msk [vmem:[#allocation3 + $0x60] sm:$0xff] %vm945, %v874
        %959 = vst.msk [vmem:[#allocation3 + $0x68] sm:$0xff] %vm945, %v876
        %960 = vst.msk [vmem:[#allocation3 + $0x70] sm:$0xff] %vm945, %v878
        %961 = vst.msk [vmem:[#allocation3 + $0x78] sm:$0xff] %vm945, %v880
        %962 = vst.msk [vmem:[#allocation3 + $0x80] sm:$0xff] %vm945, %v882
        %963 = vst.msk [vmem:[#allocation3 + $0x88] sm:$0xff] %vm945, %v884
        %964 = vst.msk [vmem:[#allocation3 + $0x90] sm:$0xff] %vm945, %v886
        %965 = vst.msk [vmem:[#allocation3 + $0x98] sm:$0xff] %vm945, %v888
        %966 = vst.msk [vmem:[#allocation3 + $0xa0] sm:$0xff] %vm945, %v890
        %967 = vst.msk [vmem:[#allocation3 + $0xa8] sm:$0xff] %vm945, %v892
        %968 = vst.msk [vmem:[#allocation3 + $0xb0] sm:$0xff] %vm945, %v894
        %969 = vst.msk [vmem:[#allocation3 + $0xb8] sm:$0xff] %vm945, %v896
        %970 = vst.msk [vmem:[#allocation3 + $0xc0] sm:$0xff] %vm945, %v898
        %971 = vst.msk [vmem:[#allocation3 + $0xc8] sm:$0xff] %vm945, %v900
        %972 = vst.msk [vmem:[#allocation3 + $0xd0] sm:$0xff] %vm945, %v902
        %973 = vst.msk [vmem:[#allocation3 + $0xd8] sm:$0xff] %vm945, %v904
        %974 = vst.msk [vmem:[#allocation3 + $0xe0] sm:$0xff] %vm945, %v906
        %975 = vst.msk [vmem:[#allocation3 + $0xe8] sm:$0xff] %vm945, %v908
        %976 = vst.msk [vmem:[#allocation3 + $0xf0] sm:$0xff] %vm945, %v910
        %977 = vst.msk [vmem:[#allocation3 + $0xf8] sm:$0xff] %vm945, %v912
        %v978 = vld [vmem:[%s301 + $0x1] sm:$0xff]
        %v979 = vld [vmem:[%s301 + $0x9] sm:$0xff]
        %v980 = vld [vmem:[%s301 + $0x19] sm:$0xff]
        %v981 = vld [vmem:[%s301 + $0x21] sm:$0xff]
        %v982 = vld [vmem:[%s301 + $0x31] sm:$0xff]
        %v983 = vld [vmem:[%s301 + $0x39] sm:$0xff]
        %v984 = vld [vmem:[%s301 + $0x49] sm:$0xff]
        %v985 = vld [vmem:[%s301 + $0x51] sm:$0xff]
        %v986 = vld [vmem:[%s301 + $0x61] sm:$0xff]
        %v987 = vld [vmem:[%s301 + $0x69] sm:$0xff]
        %v988 = vld [vmem:[%s301 + $0x79] sm:$0xff]
        %v989 = vld [vmem:[%s301 + $0x81] sm:$0xff]
        %v990 = vld [vmem:[%s301 + $0x91] sm:$0xff]
        %v991 = vld [vmem:[%s301 + $0x99] sm:$0xff]
        %v992 = vld [vmem:[%s301 + $0xa9] sm:$0xff]
        %v993 = vld [vmem:[%s301 + $0xb1] sm:$0xff]
        %v994 = vld [vmem:[%s301 + $0xc1] sm:$0xff]
        %v995 = vld [vmem:[%s301 + $0xc9] sm:$0xff]
        %v996 = vld [vmem:[%s301 + $0xd9] sm:$0xff]
        %v997 = vld [vmem:[%s301 + $0xe1] sm:$0xff]
        %v998 = vld [vmem:[%s301 + $0xf1] sm:$0xff]
        %v999 = vld [vmem:[%s301 + $0xf9] sm:$0xff]
        %v1000 = vld [vmem:[%s301 + $0x109] sm:$0xff]
        %v1001 = vld [vmem:[%s301 + $0x111] sm:$0xff]
        %v1002 = vld [vmem:[%s301 + $0x121] sm:$0xff]
        %v1003 = vld [vmem:[%s301 + $0x129] sm:$0xff]
        %v1004 = vld [vmem:[%s301 + $0x139] sm:$0xff]
        %v1005 = vld [vmem:[%s301 + $0x141] sm:$0xff]
        %v1006 = vld [vmem:[%s301 + $0x151] sm:$0xff]
        %v1007 = vld [vmem:[%s301 + $0x159] sm:$0xff]
        %v1008 = vld [vmem:[%s301 + $0x169] sm:$0xff]
        %v1009 = vld [vmem:[%s301 + $0x171] sm:$0xff]
        %1042 = vrot.lane.b32.xlu0 %v978, 16
        %v1043 = vpop.permute.xlu0 %1042
        %1044 = vrot.lane.b32.xlu0 %v979, 16
        %v1045 = vpop.permute.xlu0 %1044
        %1046 = vrot.lane.b32.xlu0 %v980, 16
        %v1047 = vpop.permute.xlu0 %1046
        %1048 = vrot.lane.b32.xlu0 %v981, 16
        %v1049 = vpop.permute.xlu0 %1048
        %1050 = vrot.lane.b32.xlu0 %v982, 16
        %v1051 = vpop.permute.xlu0 %1050
        %1052 = vrot.lane.b32.xlu0 %v983, 16
        %v1053 = vpop.permute.xlu0 %1052
        %1054 = vrot.lane.b32.xlu0 %v984, 16
        %v1055 = vpop.permute.xlu0 %1054
        %1056 = vrot.lane.b32.xlu0 %v985, 16
        %v1057 = vpop.permute.xlu0 %1056
        %1058 = vrot.lane.b32.xlu0 %v986, 16
        %v1059 = vpop.permute.xlu0 %1058
        %1060 = vrot.lane.b32.xlu0 %v987, 16
        %v1061 = vpop.permute.xlu0 %1060
        %1062 = vrot.lane.b32.xlu0 %v988, 16
        %v1063 = vpop.permute.xlu0 %1062
        %1064 = vrot.lane.b32.xlu0 %v989, 16
        %v1065 = vpop.permute.xlu0 %1064
        %1066 = vrot.lane.b32.xlu0 %v990, 16
        %v1067 = vpop.permute.xlu0 %1066
        %1068 = vrot.lane.b32.xlu0 %v991, 16
        %v1069 = vpop.permute.xlu0 %1068
        %1070 = vrot.lane.b32.xlu0 %v992, 16
        %v1071 = vpop.permute.xlu0 %1070
        %1072 = vrot.lane.b32.xlu0 %v993, 16
        %v1073 = vpop.permute.xlu0 %1072
        %1074 = vrot.lane.b32.xlu0 %v994, 16
        %v1075 = vpop.permute.xlu0 %1074
        %1076 = vrot.lane.b32.xlu0 %v995, 16
        %v1077 = vpop.permute.xlu0 %1076
        %1078 = vrot.lane.b32.xlu0 %v996, 16
        %v1079 = vpop.permute.xlu0 %1078
        %1080 = vrot.lane.b32.xlu0 %v997, 16
        %v1081 = vpop.permute.xlu0 %1080
        %1082 = vrot.lane.b32.xlu0 %v998, 16
        %v1083 = vpop.permute.xlu0 %1082
        %1084 = vrot.lane.b32.xlu0 %v999, 16
        %v1085 = vpop.permute.xlu0 %1084
        %1086 = vrot.lane.b32.xlu0 %v1000, 16
        %v1087 = vpop.permute.xlu0 %1086
        %1088 = vrot.lane.b32.xlu0 %v1001, 16
        %v1089 = vpop.permute.xlu0 %1088
        %1090 = vrot.lane.b32.xlu0 %v1002, 16
        %v1091 = vpop.permute.xlu0 %1090
        %1092 = vrot.lane.b32.xlu0 %v1003, 16
        %v1093 = vpop.permute.xlu0 %1092
        %1094 = vrot.lane.b32.xlu0 %v1004, 16
        %v1095 = vpop.permute.xlu0 %1094
        %1096 = vrot.lane.b32.xlu0 %v1005, 16
        %v1097 = vpop.permute.xlu0 %1096
        %1098 = vrot.lane.b32.xlu0 %v1006, 16
        %v1099 = vpop.permute.xlu0 %1098
        %1100 = vrot.lane.b32.xlu0 %v1007, 16
        %v1101 = vpop.permute.xlu0 %1100
        %1102 = vrot.lane.b32.xlu0 %v1008, 16
        %v1103 = vpop.permute.xlu0 %1102
        %1104 = vrot.lane.b32.xlu0 %v1009, 16
        %v1105 = vpop.permute.xlu0 %1104
        %vm1138 = vcmask 162944
        %1139 = vst.msk [vmem:[#allocation3] sm:$0xff] %vm1138, %v1043
        %1140 = vst.msk [vmem:[#allocation3 + $0x8] sm:$0xff] %vm1138, %v1045
        %1141 = vst.msk [vmem:[#allocation3 + $0x10] sm:$0xff] %vm1138, %v1047
        %1142 = vst.msk [vmem:[#allocation3 + $0x18] sm:$0xff] %vm1138, %v1049
        %1143 = vst.msk [vmem:[#allocation3 + $0x20] sm:$0xff] %vm1138, %v1051
        %1144 = vst.msk [vmem:[#allocation3 + $0x28] sm:$0xff] %vm1138, %v1053
        %1145 = vst.msk [vmem:[#allocation3 + $0x30] sm:$0xff] %vm1138, %v1055
        %1146 = vst.msk [vmem:[#allocation3 + $0x38] sm:$0xff] %vm1138, %v1057
        %1147 = vst.msk [vmem:[#allocation3 + $0x40] sm:$0xff] %vm1138, %v1059
        %1148 = vst.msk [vmem:[#allocation3 + $0x48] sm:$0xff] %vm1138, %v1061
        %1149 = vst.msk [vmem:[#allocation3 + $0x50] sm:$0xff] %vm1138, %v1063
        %1150 = vst.msk [vmem:[#allocation3 + $0x58] sm:$0xff] %vm1138, %v1065
        %1151 = vst.msk [vmem:[#allocation3 + $0x60] sm:$0xff] %vm1138, %v1067
        %1152 = vst.msk [vmem:[#allocation3 + $0x68] sm:$0xff] %vm1138, %v1069
        %1153 = vst.msk [vmem:[#allocation3 + $0x70] sm:$0xff] %vm1138, %v1071
        %1154 = vst.msk [vmem:[#allocation3 + $0x78] sm:$0xff] %vm1138, %v1073
        %1155 = vst.msk [vmem:[#allocation3 + $0x80] sm:$0xff] %vm1138, %v1075
        %1156 = vst.msk [vmem:[#allocation3 + $0x88] sm:$0xff] %vm1138, %v1077
        %1157 = vst.msk [vmem:[#allocation3 + $0x90] sm:$0xff] %vm1138, %v1079
        %1158 = vst.msk [vmem:[#allocation3 + $0x98] sm:$0xff] %vm1138, %v1081
        %1159 = vst.msk [vmem:[#allocation3 + $0xa0] sm:$0xff] %vm1138, %v1083
        %1160 = vst.msk [vmem:[#allocation3 + $0xa8] sm:$0xff] %vm1138, %v1085
        %1161 = vst.msk [vmem:[#allocation3 + $0xb0] sm:$0xff] %vm1138, %v1087
        %1162 = vst.msk [vmem:[#allocation3 + $0xb8] sm:$0xff] %vm1138, %v1089
        %1163 = vst.msk [vmem:[#allocation3 + $0xc0] sm:$0xff] %vm1138, %v1091
        %1164 = vst.msk [vmem:[#allocation3 + $0xc8] sm:$0xff] %vm1138, %v1093
        %1165 = vst.msk [vmem:[#allocation3 + $0xd0] sm:$0xff] %vm1138, %v1095
        %1166 = vst.msk [vmem:[#allocation3 + $0xd8] sm:$0xff] %vm1138, %v1097
        %1167 = vst.msk [vmem:[#allocation3 + $0xe0] sm:$0xff] %vm1138, %v1099
        %1168 = vst.msk [vmem:[#allocation3 + $0xe8] sm:$0xff] %vm1138, %v1101
        %1169 = vst.msk [vmem:[#allocation3 + $0xf0] sm:$0xff] %vm1138, %v1103
        %1170 = vst.msk [vmem:[#allocation3 + $0xf8] sm:$0xff] %vm1138, %v1105
        %v1171 = vld [vmem:[%s301 + $0x2] sm:$0xff]
        %v1172 = vld [vmem:[%s301 + $0xa] sm:$0xff]
        %v1173 = vld [vmem:[%s301 + $0x1a] sm:$0xff]
        %v1174 = vld [vmem:[%s301 + $0x22] sm:$0xff]
        %v1175 = vld [vmem:[%s301 + $0x32] sm:$0xff]
        %v1176 = vld [vmem:[%s301 + $0x3a] sm:$0xff]
        %v1177 = vld [vmem:[%s301 + $0x4a] sm:$0xff]
        %v1178 = vld [vmem:[%s301 + $0x52] sm:$0xff]
        %v1179 = vld [vmem:[%s301 + $0x62] sm:$0xff]
        %v1180 = vld [vmem:[%s301 + $0x6a] sm:$0xff]
        %v1181 = vld [vmem:[%s301 + $0x7a] sm:$0xff]
        %v1182 = vld [vmem:[%s301 + $0x82] sm:$0xff]
        %v1183 = vld [vmem:[%s301 + $0x92] sm:$0xff]
        %v1184 = vld [vmem:[%s301 + $0x9a] sm:$0xff]
        %v1185 = vld [vmem:[%s301 + $0xaa] sm:$0xff]
        %v1186 = vld [vmem:[%s301 + $0xb2] sm:$0xff]
        %v1187 = vld [vmem:[%s301 + $0xc2] sm:$0xff]
        %v1188 = vld [vmem:[%s301 + $0xca] sm:$0xff]
        %v1189 = vld [vmem:[%s301 + $0xda] sm:$0xff]
        %v1190 = vld [vmem:[%s301 + $0xe2] sm:$0xff]
        %v1191 = vld [vmem:[%s301 + $0xf2] sm:$0xff]
        %v1192 = vld [vmem:[%s301 + $0xfa] sm:$0xff]
        %v1193 = vld [vmem:[%s301 + $0x10a] sm:$0xff]
        %v1194 = vld [vmem:[%s301 + $0x112] sm:$0xff]
        %v1195 = vld [vmem:[%s301 + $0x122] sm:$0xff]
        %v1196 = vld [vmem:[%s301 + $0x12a] sm:$0xff]
        %v1197 = vld [vmem:[%s301 + $0x13a] sm:$0xff]
        %v1198 = vld [vmem:[%s301 + $0x142] sm:$0xff]
        %v1199 = vld [vmem:[%s301 + $0x152] sm:$0xff]
        %v1200 = vld [vmem:[%s301 + $0x15a] sm:$0xff]
        %v1201 = vld [vmem:[%s301 + $0x16a] sm:$0xff]
        %v1202 = vld [vmem:[%s301 + $0x172] sm:$0xff]
        %1235 = vrot.lane.b32.xlu0 %v1171, 20
        %v1236 = vpop.permute.xlu0 %1235
        %1237 = vrot.lane.b32.xlu0 %v1172, 20
        %v1238 = vpop.permute.xlu0 %1237
        %1239 = vrot.lane.b32.xlu0 %v1173, 20
        %v1240 = vpop.permute.xlu0 %1239
        %1241 = vrot.lane.b32.xlu0 %v1174, 20
        %v1242 = vpop.permute.xlu0 %1241
        %1243 = vrot.lane.b32.xlu0 %v1175, 20
        %v1244 = vpop.permute.xlu0 %1243
        %1245 = vrot.lane.b32.xlu0 %v1176, 20
        %v1246 = vpop.permute.xlu0 %1245
        %1247 = vrot.lane.b32.xlu0 %v1177, 20
        %v1248 = vpop.permute.xlu0 %1247
        %1249 = vrot.lane.b32.xlu0 %v1178, 20
        %v1250 = vpop.permute.xlu0 %1249
        %1251 = vrot.lane.b32.xlu0 %v1179, 20
        %v1252 = vpop.permute.xlu0 %1251
        %1253 = vrot.lane.b32.xlu0 %v1180, 20
        %v1254 = vpop.permute.xlu0 %1253
        %1255 = vrot.lane.b32.xlu0 %v1181, 20
        %v1256 = vpop.permute.xlu0 %1255
        %1257 = vrot.lane.b32.xlu0 %v1182, 20
        %v1258 = vpop.permute.xlu0 %1257
        %1259 = vrot.lane.b32.xlu0 %v1183, 20
        %v1260 = vpop.permute.xlu0 %1259
        %1261 = vrot.lane.b32.xlu0 %v1184, 20
        %v1262 = vpop.permute.xlu0 %1261
        %1263 = vrot.lane.b32.xlu0 %v1185, 20
        %v1264 = vpop.permute.xlu0 %1263
        %1265 = vrot.lane.b32.xlu0 %v1186, 20
        %v1266 = vpop.permute.xlu0 %1265
        %1267 = vrot.lane.b32.xlu0 %v1187, 20
        %v1268 = vpop.permute.xlu0 %1267
        %1269 = vrot.lane.b32.xlu0 %v1188, 20
        %v1270 = vpop.permute.xlu0 %1269
        %1271 = vrot.lane.b32.xlu0 %v1189, 20
        %v1272 = vpop.permute.xlu0 %1271
        %1273 = vrot.lane.b32.xlu0 %v1190, 20
        %v1274 = vpop.permute.xlu0 %1273
        %1275 = vrot.lane.b32.xlu0 %v1191, 20
        %v1276 = vpop.permute.xlu0 %1275
        %1277 = vrot.lane.b32.xlu0 %v1192, 20
        %v1278 = vpop.permute.xlu0 %1277
        %1279 = vrot.lane.b32.xlu0 %v1193, 20
        %v1280 = vpop.permute.xlu0 %1279
        %1281 = vrot.lane.b32.xlu0 %v1194, 20
        %v1282 = vpop.permute.xlu0 %1281
        %1283 = vrot.lane.b32.xlu0 %v1195, 20
        %v1284 = vpop.permute.xlu0 %1283
        %1285 = vrot.lane.b32.xlu0 %v1196, 20
        %v1286 = vpop.permute.xlu0 %1285
        %1287 = vrot.lane.b32.xlu0 %v1197, 20
        %v1288 = vpop.permute.xlu0 %1287
        %1289 = vrot.lane.b32.xlu0 %v1198, 20
        %v1290 = vpop.permute.xlu0 %1289
        %1291 = vrot.lane.b32.xlu0 %v1199, 20
        %v1292 = vpop.permute.xlu0 %1291
        %1293 = vrot.lane.b32.xlu0 %v1200, 20
        %v1294 = vpop.permute.xlu0 %1293
        %1295 = vrot.lane.b32.xlu0 %v1201, 20
        %v1296 = vpop.permute.xlu0 %1295
        %1297 = vrot.lane.b32.xlu0 %v1202, 20
        %v1298 = vpop.permute.xlu0 %1297
        %vm1331 = vcmask 195744
        %1332 = vst.msk [vmem:[#allocation3] sm:$0xff] %vm1331, %v1236
        %1333 = vst.msk [vmem:[#allocation3 + $0x8] sm:$0xff] %vm1331, %v1238
        %1334 = vst.msk [vmem:[#allocation3 + $0x10] sm:$0xff] %vm1331, %v1240
        %1335 = vst.msk [vmem:[#allocation3 + $0x18] sm:$0xff] %vm1331, %v1242
        %1336 = vst.msk [vmem:[#allocation3 + $0x20] sm:$0xff] %vm1331, %v1244
        %1337 = vst.msk [vmem:[#allocation3 + $0x28] sm:$0xff] %vm1331, %v1246
        %1338 = vst.msk [vmem:[#allocation3 + $0x30] sm:$0xff] %vm1331, %v1248
        %1339 = vst.msk [vmem:[#allocation3 + $0x38] sm:$0xff] %vm1331, %v1250
        %1340 = vst.msk [vmem:[#allocation3 + $0x40] sm:$0xff] %vm1331, %v1252
        %1341 = vst.msk [vmem:[#allocation3 + $0x48] sm:$0xff] %vm1331, %v1254
        %1342 = vst.msk [vmem:[#allocation3 + $0x50] sm:$0xff] %vm1331, %v1256
        %1343 = vst.msk [vmem:[#allocation3 + $0x58] sm:$0xff] %vm1331, %v1258
        %1344 = vst.msk [vmem:[#allocation3 + $0x60] sm:$0xff] %vm1331, %v1260
        %1345 = vst.msk [vmem:[#allocation3 + $0x68] sm:$0xff] %vm1331, %v1262
        %1346 = vst.msk [vmem:[#allocation3 + $0x70] sm:$0xff] %vm1331, %v1264
        %1347 = vst.msk [vmem:[#allocation3 + $0x78] sm:$0xff] %vm1331, %v1266
        %1348 = vst.msk [vmem:[#allocation3 + $0x80] sm:$0xff] %vm1331, %v1268
        %1349 = vst.msk [vmem:[#allocation3 + $0x88] sm:$0xff] %vm1331, %v1270
        %1350 = vst.msk [vmem:[#allocation3 + $0x90] sm:$0xff] %vm1331, %v1272
        %1351 = vst.msk [vmem:[#allocation3 + $0x98] sm:$0xff] %vm1331, %v1274
        %1352 = vst.msk [vmem:[#allocation3 + $0xa0] sm:$0xff] %vm1331, %v1276
        %1353 = vst.msk [vmem:[#allocation3 + $0xa8] sm:$0xff] %vm1331, %v1278
        %1354 = vst.msk [vmem:[#allocation3 + $0xb0] sm:$0xff] %vm1331, %v1280
        %1355 = vst.msk [vmem:[#allocation3 + $0xb8] sm:$0xff] %vm1331, %v1282
        %1356 = vst.msk [vmem:[#allocation3 + $0xc0] sm:$0xff] %vm1331, %v1284
        %1357 = vst.msk [vmem:[#allocation3 + $0xc8] sm:$0xff] %vm1331, %v1286
        %1358 = vst.msk [vmem:[#allocation3 + $0xd0] sm:$0xff] %vm1331, %v1288
        %1359 = vst.msk [vmem:[#allocation3 + $0xd8] sm:$0xff] %vm1331, %v1290
        %1360 = vst.msk [vmem:[#allocation3 + $0xe0] sm:$0xff] %vm1331, %v1292
        %1361 = vst.msk [vmem:[#allocation3 + $0xe8] sm:$0xff] %vm1331, %v1294
        %1362 = vst.msk [vmem:[#allocation3 + $0xf0] sm:$0xff] %vm1331, %v1296
        %1363 = vst.msk [vmem:[#allocation3 + $0xf8] sm:$0xff] %vm1331, %v1298
        %s1364 = scalar_lea.vmem [#allocation2], 48
        %v1365 = vld [vmem:[%s1364] sm:$0xff]
        %v1366 = vld [vmem:[%s1364 + $0x8] sm:$0xff]
        %v1367 = vld [vmem:[%s1364 + $0x18] sm:$0xff]
        %v1368 = vld [vmem:[%s1364 + $0x20] sm:$0xff]
        %v1369 = vld [vmem:[%s1364 + $0x30] sm:$0xff]
        %v1370 = vld [vmem:[%s1364 + $0x38] sm:$0xff]
        %v1371 = vld [vmem:[%s1364 + $0x48] sm:$0xff]
        %v1372 = vld [vmem:[%s1364 + $0x50] sm:$0xff]
        %v1373 = vld [vmem:[%s1364 + $0x60] sm:$0xff]
        %v1374 = vld [vmem:[%s1364 + $0x68] sm:$0xff]
        %v1375 = vld [vmem:[%s1364 + $0x78] sm:$0xff]
        %v1376 = vld [vmem:[%s1364 + $0x80] sm:$0xff]
        %v1377 = vld [vmem:[%s1364 + $0x90] sm:$0xff]
        %v1378 = vld [vmem:[%s1364 + $0x98] sm:$0xff]
        %v1379 = vld [vmem:[%s1364 + $0xa8] sm:$0xff]
        %v1380 = vld [vmem:[%s1364 + $0xb0] sm:$0xff]
        %v1381 = vld [vmem:[%s1364 + $0xc0] sm:$0xff]
        %v1382 = vld [vmem:[%s1364 + $0xc8] sm:$0xff]
        %v1383 = vld [vmem:[%s1364 + $0xd8] sm:$0xff]
        %v1384 = vld [vmem:[%s1364 + $0xe0] sm:$0xff]
        %v1385 = vld [vmem:[%s1364 + $0xf0] sm:$0xff]
        %v1386 = vld [vmem:[%s1364 + $0xf8] sm:$0xff]
        %v1387 = vld [vmem:[%s1364 + $0x108] sm:$0xff]
        %v1388 = vld [vmem:[%s1364 + $0x110] sm:$0xff]
        %v1389 = vld [vmem:[%s1364 + $0x120] sm:$0xff]
        %v1390 = vld [vmem:[%s1364 + $0x128] sm:$0xff]
        %v1391 = vld [vmem:[%s1364 + $0x138] sm:$0xff]
        %v1392 = vld [vmem:[%s1364 + $0x140] sm:$0xff]
        %v1393 = vld [vmem:[%s1364 + $0x150] sm:$0xff]
        %v1394 = vld [vmem:[%s1364 + $0x158] sm:$0xff]
        %v1395 = vld [vmem:[%s1364 + $0x168] sm:$0xff]
        %v1396 = vld [vmem:[%s1364 + $0x170] sm:$0xff]
        %1429 = vrot.lane.b32.xlu0 %v1365, 24
        %v1430 = vpop.permute.xlu0 %1429
        %1431 = vrot.lane.b32.xlu0 %v1366, 24
        %v1432 = vpop.permute.xlu0 %1431
        %1433 = vrot.lane.b32.xlu0 %v1367, 24
        %v1434 = vpop.permute.xlu0 %1433
        %1435 = vrot.lane.b32.xlu0 %v1368, 24
        %v1436 = vpop.permute.xlu0 %1435
        %1437 = vrot.lane.b32.xlu0 %v1369, 24
        %v1438 = vpop.permute.xlu0 %1437
        %1439 = vrot.lane.b32.xlu0 %v1370, 24
        %v1440 = vpop.permute.xlu0 %1439
        %1441 = vrot.lane.b32.xlu0 %v1371, 24
        %v1442 = vpop.permute.xlu0 %1441
        %1443 = vrot.lane.b32.xlu0 %v1372, 24
        %v1444 = vpop.permute.xlu0 %1443
        %1445 = vrot.lane.b32.xlu0 %v1373, 24
        %v1446 = vpop.permute.xlu0 %1445
        %1447 = vrot.lane.b32.xlu0 %v1374, 24
        %v1448 = vpop.permute.xlu0 %1447
        %1449 = vrot.lane.b32.xlu0 %v1375, 24
        %v1450 = vpop.permute.xlu0 %1449
        %1451 = vrot.lane.b32.xlu0 %v1376, 24
        %v1452 = vpop.permute.xlu0 %1451
        %1453 = vrot.lane.b32.xlu0 %v1377, 24
        %v1454 = vpop.permute.xlu0 %1453
        %1455 = vrot.lane.b32.xlu0 %v1378, 24
        %v1456 = vpop.permute.xlu0 %1455
        %1457 = vrot.lane.b32.xlu0 %v1379, 24
        %v1458 = vpop.permute.xlu0 %1457
        %1459 = vrot.lane.b32.xlu0 %v1380, 24
        %v1460 = vpop.permute.xlu0 %1459
        %1461 = vrot.lane.b32.xlu0 %v1381, 24
        %v1462 = vpop.permute.xlu0 %1461
        %1463 = vrot.lane.b32.xlu0 %v1382, 24
        %v1464 = vpop.permute.xlu0 %1463
        %1465 = vrot.lane.b32.xlu0 %v1383, 24
        %v1466 = vpop.permute.xlu0 %1465
        %1467 = vrot.lane.b32.xlu0 %v1384, 24
        %v1468 = vpop.permute.xlu0 %1467
        %1469 = vrot.lane.b32.xlu0 %v1385, 24
        %v1470 = vpop.permute.xlu0 %1469
        %1471 = vrot.lane.b32.xlu0 %v1386, 24
        %v1472 = vpop.permute.xlu0 %1471
        %1473 = vrot.lane.b32.xlu0 %v1387, 24
        %v1474 = vpop.permute.xlu0 %1473
        %1475 = vrot.lane.b32.xlu0 %v1388, 24
        %v1476 = vpop.permute.xlu0 %1475
        %1477 = vrot.lane.b32.xlu0 %v1389, 24
        %v1478 = vpop.permute.xlu0 %1477
        %1479 = vrot.lane.b32.xlu0 %v1390, 24
        %v1480 = vpop.permute.xlu0 %1479
        %1481 = vrot.lane.b32.xlu0 %v1391, 24
        %v1482 = vpop.permute.xlu0 %1481
        %1483 = vrot.lane.b32.xlu0 %v1392, 24
        %v1484 = vpop.permute.xlu0 %1483
        %1485 = vrot.lane.b32.xlu0 %v1393, 24
        %v1486 = vpop.permute.xlu0 %1485
        %1487 = vrot.lane.b32.xlu0 %v1394, 24
        %v1488 = vpop.permute.xlu0 %1487
        %1489 = vrot.lane.b32.xlu0 %v1395, 24
        %v1490 = vpop.permute.xlu0 %1489
        %1491 = vrot.lane.b32.xlu0 %v1396, 24
        %v1492 = vpop.permute.xlu0 %1491
        %vm1525 = vcmask 228544
        %1526 = vst.msk [vmem:[#allocation3] sm:$0xff] %vm1525, %v1430
        %1527 = vst.msk [vmem:[#allocation3 + $0x8] sm:$0xff] %vm1525, %v1432
        %1528 = vst.msk [vmem:[#allocation3 + $0x10] sm:$0xff] %vm1525, %v1434
        %1529 = vst.msk [vmem:[#allocation3 + $0x18] sm:$0xff] %vm1525, %v1436
        %1530 = vst.msk [vmem:[#allocation3 + $0x20] sm:$0xff] %vm1525, %v1438
        %1531 = vst.msk [vmem:[#allocation3 + $0x28] sm:$0xff] %vm1525, %v1440
        %1532 = vst.msk [vmem:[#allocation3 + $0x30] sm:$0xff] %vm1525, %v1442
        %1533 = vst.msk [vmem:[#allocation3 + $0x38] sm:$0xff] %vm1525, %v1444
        %1534 = vst.msk [vmem:[#allocation3 + $0x40] sm:$0xff] %vm1525, %v1446
        %1535 = vst.msk [vmem:[#allocation3 + $0x48] sm:$0xff] %vm1525, %v1448
        %1536 = vst.msk [vmem:[#allocation3 + $0x50] sm:$0xff] %vm1525, %v1450
        %1537 = vst.msk [vmem:[#allocation3 + $0x58] sm:$0xff] %vm1525, %v1452
        %1538 = vst.msk [vmem:[#allocation3 + $0x60] sm:$0xff] %vm1525, %v1454
        %1539 = vst.msk [vmem:[#allocation3 + $0x68] sm:$0xff] %vm1525, %v1456
        %1540 = vst.msk [vmem:[#allocation3 + $0x70] sm:$0xff] %vm1525, %v1458
        %1541 = vst.msk [vmem:[#allocation3 + $0x78] sm:$0xff] %vm1525, %v1460
        %1542 = vst.msk [vmem:[#allocation3 + $0x80] sm:$0xff] %vm1525, %v1462
        %1543 = vst.msk [vmem:[#allocation3 + $0x88] sm:$0xff] %vm1525, %v1464
        %1544 = vst.msk [vmem:[#allocation3 + $0x90] sm:$0xff] %vm1525, %v1466
        %1545 = vst.msk [vmem:[#allocation3 + $0x98] sm:$0xff] %vm1525, %v1468
        %1546 = vst.msk [vmem:[#allocation3 + $0xa0] sm:$0xff] %vm1525, %v1470
        %1547 = vst.msk [vmem:[#allocation3 + $0xa8] sm:$0xff] %vm1525, %v1472
        %1548 = vst.msk [vmem:[#allocation3 + $0xb0] sm:$0xff] %vm1525, %v1474
        %1549 = vst.msk [vmem:[#allocation3 + $0xb8] sm:$0xff] %vm1525, %v1476
        %1550 = vst.msk [vmem:[#allocation3 + $0xc0] sm:$0xff] %vm1525, %v1478
        %1551 = vst.msk [vmem:[#allocation3 + $0xc8] sm:$0xff] %vm1525, %v1480
        %1552 = vst.msk [vmem:[#allocation3 + $0xd0] sm:$0xff] %vm1525, %v1482
        %1553 = vst.msk [vmem:[#allocation3 + $0xd8] sm:$0xff] %vm1525, %v1484
        %1554 = vst.msk [vmem:[#allocation3 + $0xe0] sm:$0xff] %vm1525, %v1486
        %1555 = vst.msk [vmem:[#allocation3 + $0xe8] sm:$0xff] %vm1525, %v1488
        %1556 = vst.msk [vmem:[#allocation3 + $0xf0] sm:$0xff] %vm1525, %v1490
        %1557 = vst.msk [vmem:[#allocation3 + $0xf8] sm:$0xff] %vm1525, %v1492
        %v1558 = vld [vmem:[%s1364 + $0x1] sm:$0xff]
        %v1559 = vld [vmem:[%s1364 + $0x9] sm:$0xff]
        %v1560 = vld [vmem:[%s1364 + $0x19] sm:$0xff]
        %v1561 = vld [vmem:[%s1364 + $0x21] sm:$0xff]
        %v1562 = vld [vmem:[%s1364 + $0x31] sm:$0xff]
        %v1563 = vld [vmem:[%s1364 + $0x39] sm:$0xff]
        %v1564 = vld [vmem:[%s1364 + $0x49] sm:$0xff]
        %v1565 = vld [vmem:[%s1364 + $0x51] sm:$0xff]
        %v1566 = vld [vmem:[%s1364 + $0x61] sm:$0xff]
        %v1567 = vld [vmem:[%s1364 + $0x69] sm:$0xff]
        %v1568 = vld [vmem:[%s1364 + $0x79] sm:$0xff]
        %v1569 = vld [vmem:[%s1364 + $0x81] sm:$0xff]
        %v1570 = vld [vmem:[%s1364 + $0x91] sm:$0xff]
        %v1571 = vld [vmem:[%s1364 + $0x99] sm:$0xff]
        %v1572 = vld [vmem:[%s1364 + $0xa9] sm:$0xff]
        %v1573 = vld [vmem:[%s1364 + $0xb1] sm:$0xff]
        %v1574 = vld [vmem:[%s1364 + $0xc1] sm:$0xff]
        %v1575 = vld [vmem:[%s1364 + $0xc9] sm:$0xff]
        %v1576 = vld [vmem:[%s1364 + $0xd9] sm:$0xff]
        %v1577 = vld [vmem:[%s1364 + $0xe1] sm:$0xff]
        %v1578 = vld [vmem:[%s1364 + $0xf1] sm:$0xff]
        %v1579 = vld [vmem:[%s1364 + $0xf9] sm:$0xff]
        %v1580 = vld [vmem:[%s1364 + $0x109] sm:$0xff]
        %v1581 = vld [vmem:[%s1364 + $0x111] sm:$0xff]
        %v1582 = vld [vmem:[%s1364 + $0x121] sm:$0xff]
        %v1583 = vld [vmem:[%s1364 + $0x129] sm:$0xff]
        %v1584 = vld [vmem:[%s1364 + $0x139] sm:$0xff]
        %v1585 = vld [vmem:[%s1364 + $0x141] sm:$0xff]
        %v1586 = vld [vmem:[%s1364 + $0x151] sm:$0xff]
        %v1587 = vld [vmem:[%s1364 + $0x159] sm:$0xff]
        %v1588 = vld [vmem:[%s1364 + $0x169] sm:$0xff]
        %v1589 = vld [vmem:[%s1364 + $0x171] sm:$0xff]
        %1622 = vrot.lane.b32.xlu0 %v1558, 28
        %v1623 = vpop.permute.xlu0 %1622
        %1624 = vrot.lane.b32.xlu0 %v1559, 28
        %v1625 = vpop.permute.xlu0 %1624
        %1626 = vrot.lane.b32.xlu0 %v1560, 28
        %v1627 = vpop.permute.xlu0 %1626
        %1628 = vrot.lane.b32.xlu0 %v1561, 28
        %v1629 = vpop.permute.xlu0 %1628
        %1630 = vrot.lane.b32.xlu0 %v1562, 28
        %v1631 = vpop.permute.xlu0 %1630
        %1632 = vrot.lane.b32.xlu0 %v1563, 28
        %v1633 = vpop.permute.xlu0 %1632
        %1634 = vrot.lane.b32.xlu0 %v1564, 28
        %v1635 = vpop.permute.xlu0 %1634
        %1636 = vrot.lane.b32.xlu0 %v1565, 28
        %v1637 = vpop.permute.xlu0 %1636
        %1638 = vrot.lane.b32.xlu0 %v1566, 28
        %v1639 = vpop.permute.xlu0 %1638
        %1640 = vrot.lane.b32.xlu0 %v1567, 28
        %v1641 = vpop.permute.xlu0 %1640
        %1642 = vrot.lane.b32.xlu0 %v1568, 28
        %v1643 = vpop.permute.xlu0 %1642
        %1644 = vrot.lane.b32.xlu0 %v1569, 28
        %v1645 = vpop.permute.xlu0 %1644
        %1646 = vrot.lane.b32.xlu0 %v1570, 28
        %v1647 = vpop.permute.xlu0 %1646
        %1648 = vrot.lane.b32.xlu0 %v1571, 28
        %v1649 = vpop.permute.xlu0 %1648
        %1650 = vrot.lane.b32.xlu0 %v1572, 28
        %v1651 = vpop.permute.xlu0 %1650
        %1652 = vrot.lane.b32.xlu0 %v1573, 28
        %v1653 = vpop.permute.xlu0 %1652
        %1654 = vrot.lane.b32.xlu0 %v1574, 28
        %v1655 = vpop.permute.xlu0 %1654
        %1656 = vrot.lane.b32.xlu0 %v1575, 28
        %v1657 = vpop.permute.xlu0 %1656
        %1658 = vrot.lane.b32.xlu0 %v1576, 28
        %v1659 = vpop.permute.xlu0 %1658
        %1660 = vrot.lane.b32.xlu0 %v1577, 28
        %v1661 = vpop.permute.xlu0 %1660
        %1662 = vrot.lane.b32.xlu0 %v1578, 28
        %v1663 = vpop.permute.xlu0 %1662
        %1664 = vrot.lane.b32.xlu0 %v1579, 28
        %v1665 = vpop.permute.xlu0 %1664
        %1666 = vrot.lane.b32.xlu0 %v1580, 28
        %v1667 = vpop.permute.xlu0 %1666
        %1668 = vrot.lane.b32.xlu0 %v1581, 28
        %v1669 = vpop.permute.xlu0 %1668
        %1670 = vrot.lane.b32.xlu0 %v1582, 28
        %v1671 = vpop.permute.xlu0 %1670
        %1672 = vrot.lane.b32.xlu0 %v1583, 28
        %v1673 = vpop.permute.xlu0 %1672
        %1674 = vrot.lane.b32.xlu0 %v1584, 28
        %v1675 = vpop.permute.xlu0 %1674
        %1676 = vrot.lane.b32.xlu0 %v1585, 28
        %v1677 = vpop.permute.xlu0 %1676
        %1678 = vrot.lane.b32.xlu0 %v1586, 28
        %v1679 = vpop.permute.xlu0 %1678
        %1680 = vrot.lane.b32.xlu0 %v1587, 28
        %v1681 = vpop.permute.xlu0 %1680
        %1682 = vrot.lane.b32.xlu0 %v1588, 28
        %v1683 = vpop.permute.xlu0 %1682
        %1684 = vrot.lane.b32.xlu0 %v1589, 28
        %v1685 = vpop.permute.xlu0 %1684
        %vm1718 = vcmask 261344
        %1719 = vst.msk [vmem:[#allocation3] sm:$0xff] %vm1718, %v1623
        %1720 = vst.msk [vmem:[#allocation3 + $0x8] sm:$0xff] %vm1718, %v1625
        %1721 = vst.msk [vmem:[#allocation3 + $0x10] sm:$0xff] %vm1718, %v1627
        %1722 = vst.msk [vmem:[#allocation3 + $0x18] sm:$0xff] %vm1718, %v1629
        %1723 = vst.msk [vmem:[#allocation3 + $0x20] sm:$0xff] %vm1718, %v1631
        %1724 = vst.msk [vmem:[#allocation3 + $0x28] sm:$0xff] %vm1718, %v1633
        %1725 = vst.msk [vmem:[#allocation3 + $0x30] sm:$0xff] %vm1718, %v1635
        %1726 = vst.msk [vmem:[#allocation3 + $0x38] sm:$0xff] %vm1718, %v1637
        %1727 = vst.msk [vmem:[#allocation3 + $0x40] sm:$0xff] %vm1718, %v1639
        %1728 = vst.msk [vmem:[#allocation3 + $0x48] sm:$0xff] %vm1718, %v1641
        %1729 = vst.msk [vmem:[#allocation3 + $0x50] sm:$0xff] %vm1718, %v1643
        %1730 = vst.msk [vmem:[#allocation3 + $0x58] sm:$0xff] %vm1718, %v1645
        %1731 = vst.msk [vmem:[#allocation3 + $0x60] sm:$0xff] %vm1718, %v1647
        %1732 = vst.msk [vmem:[#allocation3 + $0x68] sm:$0xff] %vm1718, %v1649
        %1733 = vst.msk [vmem:[#allocation3 + $0x70] sm:$0xff] %vm1718, %v1651
        %1734 = vst.msk [vmem:[#allocation3 + $0x78] sm:$0xff] %vm1718, %v1653
        %1735 = vst.msk [vmem:[#allocation3 + $0x80] sm:$0xff] %vm1718, %v1655
        %1736 = vst.msk [vmem:[#allocation3 + $0x88] sm:$0xff] %vm1718, %v1657
        %1737 = vst.msk [vmem:[#allocation3 + $0x90] sm:$0xff] %vm1718, %v1659
        %1738 = vst.msk [vmem:[#allocation3 + $0x98] sm:$0xff] %vm1718, %v1661
        %1739 = vst.msk [vmem:[#allocation3 + $0xa0] sm:$0xff] %vm1718, %v1663
        %1740 = vst.msk [vmem:[#allocation3 + $0xa8] sm:$0xff] %vm1718, %v1665
        %1741 = vst.msk [vmem:[#allocation3 + $0xb0] sm:$0xff] %vm1718, %v1667
        %1742 = vst.msk [vmem:[#allocation3 + $0xb8] sm:$0xff] %vm1718, %v1669
        %1743 = vst.msk [vmem:[#allocation3 + $0xc0] sm:$0xff] %vm1718, %v1671
        %1744 = vst.msk [vmem:[#allocation3 + $0xc8] sm:$0xff] %vm1718, %v1673
        %1745 = vst.msk [vmem:[#allocation3 + $0xd0] sm:$0xff] %vm1718, %v1675
        %1746 = vst.msk [vmem:[#allocation3 + $0xd8] sm:$0xff] %vm1718, %v1677
        %1747 = vst.msk [vmem:[#allocation3 + $0xe0] sm:$0xff] %vm1718, %v1679
        %1748 = vst.msk [vmem:[#allocation3 + $0xe8] sm:$0xff] %vm1718, %v1681
        %1749 = vst.msk [vmem:[#allocation3 + $0xf0] sm:$0xff] %vm1718, %v1683
        %1750 = vst.msk [vmem:[#allocation3 + $0xf8] sm:$0xff] %vm1718, %v1685
        %v1751 = vld [vmem:[%s1364 + $0x2] sm:$0xff]
        %v1752 = vld [vmem:[%s1364 + $0xa] sm:$0xff]
        %v1753 = vld [vmem:[%s1364 + $0x1a] sm:$0xff]
        %v1754 = vld [vmem:[%s1364 + $0x22] sm:$0xff]
        %v1755 = vld [vmem:[%s1364 + $0x32] sm:$0xff]
        %v1756 = vld [vmem:[%s1364 + $0x3a] sm:$0xff]
        %v1757 = vld [vmem:[%s1364 + $0x4a] sm:$0xff]
        %v1758 = vld [vmem:[%s1364 + $0x52] sm:$0xff]
        %v1759 = vld [vmem:[%s1364 + $0x62] sm:$0xff]
        %v1760 = vld [vmem:[%s1364 + $0x6a] sm:$0xff]
        %v1761 = vld [vmem:[%s1364 + $0x7a] sm:$0xff]
        %v1762 = vld [vmem:[%s1364 + $0x82] sm:$0xff]
        %v1763 = vld [vmem:[%s1364 + $0x92] sm:$0xff]
        %v1764 = vld [vmem:[%s1364 + $0x9a] sm:$0xff]
        %v1765 = vld [vmem:[%s1364 + $0xaa] sm:$0xff]
        %v1766 = vld [vmem:[%s1364 + $0xb2] sm:$0xff]
        %v1767 = vld [vmem:[%s1364 + $0xc2] sm:$0xff]
        %v1768 = vld [vmem:[%s1364 + $0xca] sm:$0xff]
        %v1769 = vld [vmem:[%s1364 + $0xda] sm:$0xff]
        %v1770 = vld [vmem:[%s1364 + $0xe2] sm:$0xff]
        %v1771 = vld [vmem:[%s1364 + $0xf2] sm:$0xff]
        %v1772 = vld [vmem:[%s1364 + $0xfa] sm:$0xff]
        %v1773 = vld [vmem:[%s1364 + $0x10a] sm:$0xff]
        %v1774 = vld [vmem:[%s1364 + $0x112] sm:$0xff]
        %v1775 = vld [vmem:[%s1364 + $0x122] sm:$0xff]
        %v1776 = vld [vmem:[%s1364 + $0x12a] sm:$0xff]
        %v1777 = vld [vmem:[%s1364 + $0x13a] sm:$0xff]
        %v1778 = vld [vmem:[%s1364 + $0x142] sm:$0xff]
        %v1779 = vld [vmem:[%s1364 + $0x152] sm:$0xff]
        %v1780 = vld [vmem:[%s1364 + $0x15a] sm:$0xff]
        %v1781 = vld [vmem:[%s1364 + $0x16a] sm:$0xff]
        %v1782 = vld [vmem:[%s1364 + $0x172] sm:$0xff]
        %1815 = vrot.lane.b32.xlu0 %v1751, 32
        %v1816 = vpop.permute.xlu0 %1815
        %1817 = vrot.lane.b32.xlu0 %v1752, 32
        %v1818 = vpop.permute.xlu0 %1817
        %1819 = vrot.lane.b32.xlu0 %v1753, 32
        %v1820 = vpop.permute.xlu0 %1819
        %1821 = vrot.lane.b32.xlu0 %v1754, 32
        %v1822 = vpop.permute.xlu0 %1821
        %1823 = vrot.lane.b32.xlu0 %v1755, 32
        %v1824 = vpop.permute.xlu0 %1823
        %1825 = vrot.lane.b32.xlu0 %v1756, 32
        %v1826 = vpop.permute.xlu0 %1825
        %1827 = vrot.lane.b32.xlu0 %v1757, 32
        %v1828 = vpop.permute.xlu0 %1827
        %1829 = vrot.lane.b32.xlu0 %v1758, 32
        %v1830 = vpop.permute.xlu0 %1829
        %1831 = vrot.lane.b32.xlu0 %v1759, 32
        %v1832 = vpop.permute.xlu0 %1831
        %1833 = vrot.lane.b32.xlu0 %v1760, 32
        %v1834 = vpop.permute.xlu0 %1833
        %1835 = vrot.lane.b32.xlu0 %v1761, 32
        %v1836 = vpop.permute.xlu0 %1835
        %1837 = vrot.lane.b32.xlu0 %v1762, 32
        %v1838 = vpop.permute.xlu0 %1837
        %1839 = vrot.lane.b32.xlu0 %v1763, 32
        %v1840 = vpop.permute.xlu0 %1839
        %1841 = vrot.lane.b32.xlu0 %v1764, 32
        %v1842 = vpop.permute.xlu0 %1841
        %1843 = vrot.lane.b32.xlu0 %v1765, 32
        %v1844 = vpop.permute.xlu0 %1843
        %1845 = vrot.lane.b32.xlu0 %v1766, 32
        %v1846 = vpop.permute.xlu0 %1845
        %1847 = vrot.lane.b32.xlu0 %v1767, 32
        %v1848 = vpop.permute.xlu0 %1847
        %1849 = vrot.lane.b32.xlu0 %v1768, 32
        %v1850 = vpop.permute.xlu0 %1849
        %1851 = vrot.lane.b32.xlu0 %v1769, 32
        %v1852 = vpop.permute.xlu0 %1851
        %1853 = vrot.lane.b32.xlu0 %v1770, 32
        %v1854 = vpop.permute.xlu0 %1853
        %1855 = vrot.lane.b32.xlu0 %v1771, 32
        %v1856 = vpop.permute.xlu0 %1855
        %1857 = vrot.lane.b32.xlu0 %v1772, 32
        %v1858 = vpop.permute.xlu0 %1857
        %1859 = vrot.lane.b32.xlu0 %v1773, 32
        %v1860 = vpop.permute.xlu0 %1859
        %1861 = vrot.lane.b32.xlu0 %v1774, 32
        %v1862 = vpop.permute.xlu0 %1861
        %1863 = vrot.lane.b32.xlu0 %v1775, 32
        %v1864 = vpop.permute.xlu0 %1863
        %1865 = vrot.lane.b32.xlu0 %v1776, 32
        %v1866 = vpop.permute.xlu0 %1865
        %1867 = vrot.lane.b32.xlu0 %v1777, 32
        %v1868 = vpop.permute.xlu0 %1867
        %1869 = vrot.lane.b32.xlu0 %v1778, 32
        %v1870 = vpop.permute.xlu0 %1869
        %1871 = vrot.lane.b32.xlu0 %v1779, 32
        %v1872 = vpop.permute.xlu0 %1871
        %1873 = vrot.lane.b32.xlu0 %v1780, 32
        %v1874 = vpop.permute.xlu0 %1873
        %1875 = vrot.lane.b32.xlu0 %v1781, 32
        %v1876 = vpop.permute.xlu0 %1875
        %1877 = vrot.lane.b32.xlu0 %v1782, 32
        %v1878 = vpop.permute.xlu0 %1877
        %vm1911 = vcmask 294144
        %1912 = vst.msk [vmem:[#allocation3] sm:$0xff] %vm1911, %v1816
        %1913 = vst.msk [vmem:[#allocation3 + $0x8] sm:$0xff] %vm1911, %v1818
        %1914 = vst.msk [vmem:[#allocation3 + $0x10] sm:$0xff] %vm1911, %v1820
        %1915 = vst.msk [vmem:[#allocation3 + $0x18] sm:$0xff] %vm1911, %v1822
        %1916 = vst.msk [vmem:[#allocation3 + $0x20] sm:$0xff] %vm1911, %v1824
        %1917 = vst.msk [vmem:[#allocation3 + $0x28] sm:$0xff] %vm1911, %v1826
        %1918 = vst.msk [vmem:[#allocation3 + $0x30] sm:$0xff] %vm1911, %v1828
        %1919 = vst.msk [vmem:[#allocation3 + $0x38] sm:$0xff] %vm1911, %v1830
        %1920 = vst.msk [vmem:[#allocation3 + $0x40] sm:$0xff] %vm1911, %v1832
        %1921 = vst.msk [vmem:[#allocation3 + $0x48] sm:$0xff] %vm1911, %v1834
        %1922 = vst.msk [vmem:[#allocation3 + $0x50] sm:$0xff] %vm1911, %v1836
        %1923 = vst.msk [vmem:[#allocation3 + $0x58] sm:$0xff] %vm1911, %v1838
        %1924 = vst.msk [vmem:[#allocation3 + $0x60] sm:$0xff] %vm1911, %v1840
        %1925 = vst.msk [vmem:[#allocation3 + $0x68] sm:$0xff] %vm1911, %v1842
        %1926 = vst.msk [vmem:[#allocation3 + $0x70] sm:$0xff] %vm1911, %v1844
        %1927 = vst.msk [vmem:[#allocation3 + $0x78] sm:$0xff] %vm1911, %v1846
        %1928 = vst.msk [vmem:[#allocation3 + $0x80] sm:$0xff] %vm1911, %v1848
        %1929 = vst.msk [vmem:[#allocation3 + $0x88] sm:$0xff] %vm1911, %v1850
        %1930 = vst.msk [vmem:[#allocation3 + $0x90] sm:$0xff] %vm1911, %v1852
        %1931 = vst.msk [vmem:[#allocation3 + $0x98] sm:$0xff] %vm1911, %v1854
        %1932 = vst.msk [vmem:[#allocation3 + $0xa0] sm:$0xff] %vm1911, %v1856
        %1933 = vst.msk [vmem:[#allocation3 + $0xa8] sm:$0xff] %vm1911, %v1858
        %1934 = vst.msk [vmem:[#allocation3 + $0xb0] sm:$0xff] %vm1911, %v1860
        %1935 = vst.msk [vmem:[#allocation3 + $0xb8] sm:$0xff] %vm1911, %v1862
        %1936 = vst.msk [vmem:[#allocation3 + $0xc0] sm:$0xff] %vm1911, %v1864
        %1937 = vst.msk [vmem:[#allocation3 + $0xc8] sm:$0xff] %vm1911, %v1866
        %1938 = vst.msk [vmem:[#allocation3 + $0xd0] sm:$0xff] %vm1911, %v1868
        %1939 = vst.msk [vmem:[#allocation3 + $0xd8] sm:$0xff] %vm1911, %v1870
        %1940 = vst.msk [vmem:[#allocation3 + $0xe0] sm:$0xff] %vm1911, %v1872
        %1941 = vst.msk [vmem:[#allocation3 + $0xe8] sm:$0xff] %vm1911, %v1874
        %1942 = vst.msk [vmem:[#allocation3 + $0xf0] sm:$0xff] %vm1911, %v1876
        %1943 = vst.msk [vmem:[#allocation3 + $0xf8] sm:$0xff] %vm1911, %v1878
        %v1944 = vld [vmem:[#allocation3] sm:$0xff]
        %v1945 = vld [vmem:[#allocation3 + $0x8] sm:$0xff]
        %v1946 = vld [vmem:[#allocation3 + $0x10] sm:$0xff]
        %v1947 = vld [vmem:[#allocation3 + $0x18] sm:$0xff]
        %v1948 = vld [vmem:[#allocation3 + $0x20] sm:$0xff]
        %v1949 = vld [vmem:[#allocation3 + $0x28] sm:$0xff]
        %v1950 = vld [vmem:[#allocation3 + $0x30] sm:$0xff]
        %v1951 = vld [vmem:[#allocation3 + $0x38] sm:$0xff]
        %v1952 = vld [vmem:[#allocation3 + $0x40] sm:$0xff]
        %v1953 = vld [vmem:[#allocation3 + $0x48] sm:$0xff]
        %v1954 = vld [vmem:[#allocation3 + $0x50] sm:$0xff]
        %v1955 = vld [vmem:[#allocation3 + $0x58] sm:$0xff]
        %v1956 = vld [vmem:[#allocation3 + $0x60] sm:$0xff]
        %v1957 = vld [vmem:[#allocation3 + $0x68] sm:$0xff]
        %v1958 = vld [vmem:[#allocation3 + $0x70] sm:$0xff]
        %v1959 = vld [vmem:[#allocation3 + $0x78] sm:$0xff]
        %v1960 = vld [vmem:[#allocation3 + $0x80] sm:$0xff]
        %v1961 = vld [vmem:[#allocation3 + $0x88] sm:$0xff]
        %v1962 = vld [vmem:[#allocation3 + $0x90] sm:$0xff]
        %v1963 = vld [vmem:[#allocation3 + $0x98] sm:$0xff]
        %v1964 = vld [vmem:[#allocation3 + $0xa0] sm:$0xff]
        %v1965 = vld [vmem:[#allocation3 + $0xa8] sm:$0xff]
        %v1966 = vld [vmem:[#allocation3 + $0xb0] sm:$0xff]
        %v1967 = vld [vmem:[#allocation3 + $0xb8] sm:$0xff]
        %v1968 = vld [vmem:[#allocation3 + $0xc0] sm:$0xff]
        %v1969 = vld [vmem:[#allocation3 + $0xc8] sm:$0xff]
        %v1970 = vld [vmem:[#allocation3 + $0xd0] sm:$0xff]
        %v1971 = vld [vmem:[#allocation3 + $0xd8] sm:$0xff]
        %v1972 = vld [vmem:[#allocation3 + $0xe0] sm:$0xff]
        %v1973 = vld [vmem:[#allocation3 + $0xe8] sm:$0xff]
        %v1974 = vld [vmem:[#allocation3 + $0xf0] sm:$0xff]
        %v1975 = vld [vmem:[#allocation3 + $0xf8] sm:$0xff]
        %v1976 = vpack.c.bf16 %v1945, %v1944
        %v1977 = vpack.c.bf16 %v1947, %v1946
        %v1978 = vpack.c.bf16 %v1949, %v1948
        %v1979 = vpack.c.bf16 %v1951, %v1950
        %v1980 = vpack.c.bf16 %v1953, %v1952
        %v1981 = vpack.c.bf16 %v1955, %v1954
        %v1982 = vpack.c.bf16 %v1957, %v1956
        %v1983 = vpack.c.bf16 %v1959, %v1958
        %v1984 = vpack.c.bf16 %v1961, %v1960
        %v1985 = vpack.c.bf16 %v1963, %v1962
        %v1986 = vpack.c.bf16 %v1965, %v1964
        %v1987 = vpack.c.bf16 %v1967, %v1966
        %v1988 = vpack.c.bf16 %v1969, %v1968
        %v1989 = vpack.c.bf16 %v1971, %v1970
        %v1990 = vpack.c.bf16 %v1973, %v1972
        %v1991 = vpack.c.bf16 %v1975, %v1974
        %v1992 = vld [vmem:[%s1] sm:$0xf]
        %v1993 = vld [vmem:[%s1 + $0x4] sm:$0xf]
        %v1994 = vld [vmem:[%s1 + $0x8] sm:$0xf]
        %v1995 = vld [vmem:[%s1 + $0xc] sm:$0xf]
        %v1996 = vld [vmem:[%s1 + $0x10] sm:$0x3]
        %v2002 = vunpack.c.l.b16 %v1992
        %v2003 = vunpack.c.l.b16 %v1993
        %v2004 = vunpack.c.l.b16 %v1994
        %v2005 = vunpack.c.l.b16 %v1995
        %v2006 = vunpack.c.l.b16 %v1996
        %v2007 = vpack.c.b16 %v2003, %v2002
        %v2008 = vpack.c.b16 %v2005, %v2004
        %v2009 = vpack.c.b16 %v2006, %v2006
        %vm2012 = vcmask 293888
        %v2014 = vsel %vm2012, %v1976, 0
        %v2017 = vsel %vm2012, %v1977, 0
        %v2020 = vsel %vm2012, %v1978, 0
        %v2023 = vsel %vm2012, %v1979, 0
        %v2026 = vsel %vm2012, %v1980, 0
        %v2029 = vsel %vm2012, %v1981, 0
        %v2032 = vsel %vm2012, %v1982, 0
        %v2035 = vsel %vm2012, %v1983, 0
        %v2038 = vsel %vm2012, %v1984, 0
        %v2041 = vsel %vm2012, %v1985, 0
        %v2044 = vsel %vm2012, %v1986, 0
        %v2047 = vsel %vm2012, %v1987, 0
        %v2050 = vsel %vm2012, %v1988, 0
        %v2053 = vsel %vm2012, %v1989, 0
        %v2056 = vsel %vm2012, %v1990, 0
        %v2059 = vsel %vm2012, %v1991, 0
        %vm2061 = vcmask 1041408
        %v2063 = vsel %vm2061, %v2009, 0
        %2065 = vmatpush.bf16.msra.mxu0 0
        %2066 = vmatpush.bf16.msra.mxu0 0
        %2067 = vmatpush.bf16.msra.mxu0 0
        %2068 = vmatpush.bf16.msra.mxu0 0
        %2069 = vmatpush.bf16.msra.mxu0 0
        %2070 = vmatpush.bf16.msra.mxu0 %v2063
        %2071 = vmatpush.bf16.msra.mxu0 %v2008
        %2072 = vmatpush.bf16.msra.mxu0 %v2007
        %2073 = vmatmul.bf16.gmra.mxu0 %v2014
        %v2074 = vpop.f32.mrf.mxu0
        %v2075 = vadd.f32 0.0, %v2074
        %v2076 = vpop.f32.mrf.mxu0
        %v2077 = vadd.f32 0.0, %v2076
        %2078 = vmatmul.bf16.gmra.mxu0 %v2017
        %v2079 = vpop.f32.mrf.mxu0
        %v2080 = vadd.f32 0.0, %v2079
        %v2081 = vpop.f32.mrf.mxu0
        %v2082 = vadd.f32 0.0, %v2081
        %2083 = vmatmul.bf16.gmra.mxu0 %v2020
        %v2084 = vpop.f32.mrf.mxu0
        %v2085 = vadd.f32 0.0, %v2084
        %v2086 = vpop.f32.mrf.mxu0
        %v2087 = vadd.f32 0.0, %v2086
        %2088 = vmatmul.bf16.gmra.mxu0 %v2023
        %v2089 = vpop.f32.mrf.mxu0
        %v2090 = vadd.f32 0.0, %v2089
        %v2091 = vpop.f32.mrf.mxu0
        %v2092 = vadd.f32 0.0, %v2091
        %2093 = vmatmul.bf16.gmra.mxu0 %v2026
        %v2094 = vpop.f32.mrf.mxu0
        %v2095 = vadd.f32 0.0, %v2094
        %v2096 = vpop.f32.mrf.mxu0
        %v2097 = vadd.f32 0.0, %v2096
        %2098 = vmatmul.bf16.gmra.mxu0 %v2029
        %v2099 = vpop.f32.mrf.mxu0
        %v2100 = vadd.f32 0.0, %v2099
        %v2101 = vpop.f32.mrf.mxu0
        %v2102 = vadd.f32 0.0, %v2101
        %2103 = vmatmul.bf16.gmra.mxu0 %v2032
        %v2104 = vpop.f32.mrf.mxu0
        %v2105 = vadd.f32 0.0, %v2104
        %v2106 = vpop.f32.mrf.mxu0
        %v2107 = vadd.f32 0.0, %v2106
        %2108 = vmatmul.bf16.gmra.mxu0 %v2035
        %v2109 = vpop.f32.mrf.mxu0
        %v2110 = vadd.f32 0.0, %v2109
        %v2111 = vpop.f32.mrf.mxu0
        %v2112 = vadd.f32 0.0, %v2111
        %2113 = vmatmul.bf16.gmra.mxu0 %v2038
        %v2114 = vpop.f32.mrf.mxu0
        %v2115 = vadd.f32 0.0, %v2114
        %v2116 = vpop.f32.mrf.mxu0
        %v2117 = vadd.f32 0.0, %v2116
        %2118 = vmatmul.bf16.gmra.mxu0 %v2041
        %v2119 = vpop.f32.mrf.mxu0
        %v2120 = vadd.f32 0.0, %v2119
        %v2121 = vpop.f32.mrf.mxu0
        %v2122 = vadd.f32 0.0, %v2121
        %2123 = vmatmul.bf16.gmra.mxu0 %v2044
        %v2124 = vpop.f32.mrf.mxu0
        %v2125 = vadd.f32 0.0, %v2124
        %v2126 = vpop.f32.mrf.mxu0
        %v2127 = vadd.f32 0.0, %v2126
        %2128 = vmatmul.bf16.gmra.mxu0 %v2047
        %v2129 = vpop.f32.mrf.mxu0
        %v2130 = vadd.f32 0.0, %v2129
        %v2131 = vpop.f32.mrf.mxu0
        %v2132 = vadd.f32 0.0, %v2131
        %2133 = vmatmul.bf16.gmra.mxu0 %v2050
        %v2134 = vpop.f32.mrf.mxu0
        %v2135 = vadd.f32 0.0, %v2134
        %v2136 = vpop.f32.mrf.mxu0
        %v2137 = vadd.f32 0.0, %v2136
        %2138 = vmatmul.bf16.gmra.mxu0 %v2053
        %v2139 = vpop.f32.mrf.mxu0
        %v2140 = vadd.f32 0.0, %v2139
        %v2141 = vpop.f32.mrf.mxu0
        %v2142 = vadd.f32 0.0, %v2141
        %2143 = vmatmul.bf16.gmra.mxu0 %v2056
        %v2144 = vpop.f32.mrf.mxu0
        %v2145 = vadd.f32 0.0, %v2144
        %v2146 = vpop.f32.mrf.mxu0
        %v2147 = vadd.f32 0.0, %v2146
        %2148 = vmatmul.bf16.gmra.mxu0 %v2059
        %v2149 = vpop.f32.mrf.mxu0
        %v2150 = vadd.f32 0.0, %v2149
        %v2151 = vpop.f32.mrf.mxu0
        %v2152 = vadd.f32 0.0, %v2151
        %2153 = vdwg.mxu0
        %vm2154 = vcmask 64512
        %v2155 = vsel %vm2154, %v2075, 0.0
        %v2156 = vsel %vm2154, %v2077, 0.0
        %v2157 = vadd.f32 %v2155, %v2156
        %v2158 = vsel %vm2154, %v2080, 0.0
        %v2159 = vadd.f32 %v2157, %v2158
        %v2160 = vsel %vm2154, %v2082, 0.0
        %v2161 = vadd.f32 %v2159, %v2160
        %v2162 = vsel %vm2154, %v2085, 0.0
        %v2163 = vadd.f32 %v2161, %v2162
        %v2164 = vsel %vm2154, %v2087, 0.0
        %v2165 = vadd.f32 %v2163, %v2164
        %v2166 = vsel %vm2154, %v2090, 0.0
        %v2167 = vadd.f32 %v2165, %v2166
        %v2168 = vsel %vm2154, %v2092, 0.0
        %v2169 = vadd.f32 %v2167, %v2168
        %v2170 = vsel %vm2154, %v2095, 0.0
        %v2171 = vadd.f32 %v2169, %v2170
        %v2172 = vsel %vm2154, %v2097, 0.0
        %v2173 = vadd.f32 %v2171, %v2172
        %v2174 = vsel %vm2154, %v2100, 0.0
        %v2175 = vadd.f32 %v2173, %v2174
        %v2176 = vsel %vm2154, %v2102, 0.0
        %v2177 = vadd.f32 %v2175, %v2176
        %v2178 = vsel %vm2154, %v2105, 0.0
        %v2179 = vadd.f32 %v2177, %v2178
        %v2180 = vsel %vm2154, %v2107, 0.0
        %v2181 = vadd.f32 %v2179, %v2180
        %v2182 = vsel %vm2154, %v2110, 0.0
        %v2183 = vadd.f32 %v2181, %v2182
        %v2184 = vsel %vm2154, %v2112, 0.0
        %v2185 = vadd.f32 %v2183, %v2184
        %v2186 = vsel %vm2154, %v2115, 0.0
        %v2187 = vadd.f32 %v2185, %v2186
        %v2188 = vsel %vm2154, %v2117, 0.0
        %v2189 = vadd.f32 %v2187, %v2188
        %v2190 = vsel %vm2154, %v2120, 0.0
        %v2191 = vadd.f32 %v2189, %v2190
        %v2192 = vsel %vm2154, %v2122, 0.0
        %v2193 = vadd.f32 %v2191, %v2192
        %v2194 = vsel %vm2154, %v2125, 0.0
        %v2195 = vadd.f32 %v2193, %v2194
        %v2196 = vsel %vm2154, %v2127, 0.0
        %v2197 = vadd.f32 %v2195, %v2196
        %v2198 = vsel %vm2154, %v2130, 0.0
        %v2199 = vadd.f32 %v2197, %v2198
        %v2200 = vsel %vm2154, %v2132, 0.0
        %v2201 = vadd.f32 %v2199, %v2200
        %v2202 = vsel %vm2154, %v2135, 0.0
        %v2203 = vadd.f32 %v2201, %v2202
        %v2204 = vsel %vm2154, %v2137, 0.0
        %v2205 = vadd.f32 %v2203, %v2204
        %v2206 = vsel %vm2154, %v2140, 0.0
        %v2207 = vadd.f32 %v2205, %v2206
        %v2208 = vsel %vm2154, %v2142, 0.0
        %v2209 = vadd.f32 %v2207, %v2208
        %v2210 = vsel %vm2154, %v2145, 0.0
        %v2211 = vadd.f32 %v2209, %v2210
        %v2212 = vsel %vm2154, %v2147, 0.0
        %v2213 = vadd.f32 %v2211, %v2212
        %v2214 = vsel %vm2154, %v2150, 0.0
        %v2215 = vadd.f32 %v2213, %v2214
        %v2216 = vsel %vm2154, %v2152, 0.0
        %v2217 = vadd.f32 %v2215, %v2216
        %v2218 = vrot.slane %v2217, 4
        %v2219 = vadd.f32 %v2217, %v2218
        %v2220 = vrot.slane %v2219, 2
        %v2221 = vadd.f32 %v2219, %v2220
        %v2222 = vrot.slane %v2221, 1
        %v2223 = vadd.f32 %v2221, %v2222
        %v2224 = vrcp.pop 256.0
        %v2225 = vmul.f32 256.0, %v2224
        %v2226 = vsub.f32 1.0, %v2225
        %v2227 = vmul.f32 %v2224, %v2226
        %v2228 = vadd.f32 %v2224, %v2227
        %vm2229 = vweird.f32 %v2224
        %v2230 = vsel %vm2229, %v2224, %v2228
        %v2231 = vmul.f32 %v2223, %v2230
        %v2232 = vsub.f32 %v2075, %v2231
        %v2233 = vsub.f32 %v2077, %v2231
        %v2234 = vsub.f32 %v2080, %v2231
        %v2235 = vsub.f32 %v2082, %v2231
        %v2236 = vsub.f32 %v2085, %v2231
        %v2237 = vsub.f32 %v2087, %v2231
        %v2238 = vsub.f32 %v2090, %v2231
        %v2239 = vsub.f32 %v2092, %v2231
        %v2240 = vsub.f32 %v2095, %v2231
        %v2241 = vsub.f32 %v2097, %v2231
        %v2242 = vsub.f32 %v2100, %v2231
        %v2243 = vsub.f32 %v2102, %v2231
        %v2244 = vsub.f32 %v2105, %v2231
        %v2245 = vsub.f32 %v2107, %v2231
        %v2246 = vsub.f32 %v2110, %v2231
        %v2247 = vsub.f32 %v2112, %v2231
        %v2248 = vsub.f32 %v2115, %v2231
        %v2249 = vsub.f32 %v2117, %v2231
        %v2250 = vsub.f32 %v2120, %v2231
        %v2251 = vsub.f32 %v2122, %v2231
        %v2252 = vsub.f32 %v2125, %v2231
        %v2253 = vsub.f32 %v2127, %v2231
        %v2254 = vsub.f32 %v2130, %v2231
        %v2255 = vsub.f32 %v2132, %v2231
        %v2256 = vsub.f32 %v2135, %v2231
        %v2257 = vsub.f32 %v2137, %v2231
        %v2258 = vsub.f32 %v2140, %v2231
        %v2259 = vsub.f32 %v2142, %v2231
        %v2260 = vsub.f32 %v2145, %v2231
        %v2261 = vsub.f32 %v2147, %v2231
        %v2262 = vsub.f32 %v2150, %v2231
        %v2263 = vsub.f32 %v2152, %v2231
        %v2264 = vmul.f32 %v2232, %v2232
        %v2265 = vmul.f32 %v2233, %v2233
        %v2266 = vmul.f32 %v2234, %v2234
        %v2267 = vmul.f32 %v2235, %v2235
        %v2268 = vmul.f32 %v2236, %v2236
        %v2269 = vmul.f32 %v2237, %v2237
        %v2270 = vmul.f32 %v2238, %v2238
        %v2271 = vmul.f32 %v2239, %v2239
        %v2272 = vmul.f32 %v2240, %v2240
        %v2273 = vmul.f32 %v2241, %v2241
        %v2274 = vmul.f32 %v2242, %v2242
        %v2275 = vmul.f32 %v2243, %v2243
        %v2276 = vmul.f32 %v2244, %v2244
        %v2277 = vmul.f32 %v2245, %v2245
        %v2278 = vmul.f32 %v2246, %v2246
        %v2279 = vmul.f32 %v2247, %v2247
        %v2280 = vmul.f32 %v2248, %v2248
        %v2281 = vmul.f32 %v2249, %v2249
        %v2282 = vmul.f32 %v2250, %v2250
        %v2283 = vmul.f32 %v2251, %v2251
        %v2284 = vmul.f32 %v2252, %v2252
        %v2285 = vmul.f32 %v2253, %v2253
        %v2286 = vmul.f32 %v2254, %v2254
        %v2287 = vmul.f32 %v2255, %v2255
        %v2288 = vmul.f32 %v2256, %v2256
        %v2289 = vmul.f32 %v2257, %v2257
        %v2290 = vmul.f32 %v2258, %v2258
        %v2291 = vmul.f32 %v2259, %v2259
        %v2292 = vmul.f32 %v2260, %v2260
        %v2293 = vmul.f32 %v2261, %v2261
        %v2294 = vmul.f32 %v2262, %v2262
        %v2295 = vmul.f32 %v2263, %v2263
        %v2296 = vsel %vm2154, %v2264, 0.0
        %v2297 = vsel %vm2154, %v2265, 0.0
        %v2298 = vadd.f32 %v2296, %v2297
        %v2299 = vsel %vm2154, %v2266, 0.0
        %v2300 = vadd.f32 %v2298, %v2299
        %v2301 = vsel %vm2154, %v2267, 0.0
        %v2302 = vadd.f32 %v2300, %v2301
        %v2303 = vsel %vm2154, %v2268, 0.0
        %v2304 = vadd.f32 %v2302, %v2303
        %v2305 = vsel %vm2154, %v2269, 0.0
        %v2306 = vadd.f32 %v2304, %v2305
        %v2307 = vsel %vm2154, %v2270, 0.0
        %v2308 = vadd.f32 %v2306, %v2307
        %v2309 = vsel %vm2154, %v2271, 0.0
        %v2310 = vadd.f32 %v2308, %v2309
        %v2311 = vsel %vm2154, %v2272, 0.0
        %v2312 = vadd.f32 %v2310, %v2311
        %v2313 = vsel %vm2154, %v2273, 0.0
        %v2314 = vadd.f32 %v2312, %v2313
        %v2315 = vsel %vm2154, %v2274, 0.0
        %v2316 = vadd.f32 %v2314, %v2315
        %v2317 = vsel %vm2154, %v2275, 0.0
        %v2318 = vadd.f32 %v2316, %v2317
        %v2319 = vsel %vm2154, %v2276, 0.0
        %v2320 = vadd.f32 %v2318, %v2319
        %v2321 = vsel %vm2154, %v2277, 0.0
        %v2322 = vadd.f32 %v2320, %v2321
        %v2323 = vsel %vm2154, %v2278, 0.0
        %v2324 = vadd.f32 %v2322, %v2323
        %v2325 = vsel %vm2154, %v2279, 0.0
        %v2326 = vadd.f32 %v2324, %v2325
        %v2327 = vsel %vm2154, %v2280, 0.0
        %v2328 = vadd.f32 %v2326, %v2327
        %v2329 = vsel %vm2154, %v2281, 0.0
        %v2330 = vadd.f32 %v2328, %v2329
        %v2331 = vsel %vm2154, %v2282, 0.0
        %v2332 = vadd.f32 %v2330, %v2331
        %v2333 = vsel %vm2154, %v2283, 0.0
        %v2334 = vadd.f32 %v2332, %v2333
        %v2335 = vsel %vm2154, %v2284, 0.0
        %v2336 = vadd.f32 %v2334, %v2335
        %v2337 = vsel %vm2154, %v2285, 0.0
        %v2338 = vadd.f32 %v2336, %v2337
        %v2339 = vsel %vm2154, %v2286, 0.0
        %v2340 = vadd.f32 %v2338, %v2339
        %v2341 = vsel %vm2154, %v2287, 0.0
        %v2342 = vadd.f32 %v2340, %v2341
        %v2343 = vsel %vm2154, %v2288, 0.0
        %v2344 = vadd.f32 %v2342, %v2343
        %v2345 = vsel %vm2154, %v2289, 0.0
        %v2346 = vadd.f32 %v2344, %v2345
        %v2347 = vsel %vm2154, %v2290, 0.0
        %v2348 = vadd.f32 %v2346, %v2347
        %v2349 = vsel %vm2154, %v2291, 0.0
        %v2350 = vadd.f32 %v2348, %v2349
        %v2351 = vsel %vm2154, %v2292, 0.0
        %v2352 = vadd.f32 %v2350, %v2351
        %v2353 = vsel %vm2154, %v2293, 0.0
        %v2354 = vadd.f32 %v2352, %v2353
        %v2355 = vsel %vm2154, %v2294, 0.0
        %v2356 = vadd.f32 %v2354, %v2355
        %v2357 = vsel %vm2154, %v2295, 0.0
        %v2358 = vadd.f32 %v2356, %v2357
        %v2359 = vrot.slane %v2358, 4
        %v2360 = vadd.f32 %v2358, %v2359
        %v2361 = vrot.slane %v2360, 2
        %v2362 = vadd.f32 %v2360, %v2361
        %v2363 = vrot.slane %v2362, 1
        %v2364 = vadd.f32 %v2362, %v2363
        %v2365 = vmul.f32 %v2364, %v2230
        %v2366 = vadd.f32 %v2365, 1e-05
        %v2367 = vrsqrt.pop %v2366
        %v2368 = vmul.f32 %v2367, %v2366
        %v2369 = vmul.f32 %v2368, %v2367
        %v2370 = vmul.f32 0.5, %v2369
        %v2371 = vsub.f32 1.5, %v2370
        %v2372 = vmul.f32 %v2367, %v2371
        %vm2373 = vweird.f32 %v2366
        %vm2374 = vweird.f32 %v2367
        %vm2375 = vmor %vm2373, %vm2374
        %v2376 = vsel %vm2375, %v2367, %v2372
        %v2377 = vmul.f32 %v2232, %v2376
        %v2378 = vmul.f32 %v2233, %v2376
        %v2379 = vmul.f32 %v2234, %v2376
        %v2380 = vmul.f32 %v2235, %v2376
        %v2381 = vmul.f32 %v2236, %v2376
        %v2382 = vmul.f32 %v2237, %v2376
        %v2383 = vmul.f32 %v2238, %v2376
        %v2384 = vmul.f32 %v2239, %v2376
        %v2385 = vmul.f32 %v2240, %v2376
        %v2386 = vmul.f32 %v2241, %v2376
        %v2387 = vmul.f32 %v2242, %v2376
        %v2388 = vmul.f32 %v2243, %v2376
        %v2389 = vmul.f32 %v2244, %v2376
        %v2390 = vmul.f32 %v2245, %v2376
        %v2391 = vmul.f32 %v2246, %v2376
        %v2392 = vmul.f32 %v2247, %v2376
        %v2393 = vmul.f32 %v2248, %v2376
        %v2394 = vmul.f32 %v2249, %v2376
        %v2395 = vmul.f32 %v2250, %v2376
        %v2396 = vmul.f32 %v2251, %v2376
        %v2397 = vmul.f32 %v2252, %v2376
        %v2398 = vmul.f32 %v2253, %v2376
        %v2399 = vmul.f32 %v2254, %v2376
        %v2400 = vmul.f32 %v2255, %v2376
        %v2401 = vmul.f32 %v2256, %v2376
        %v2402 = vmul.f32 %v2257, %v2376
        %v2403 = vmul.f32 %v2258, %v2376
        %v2404 = vmul.f32 %v2259, %v2376
        %v2405 = vmul.f32 %v2260, %v2376
        %v2406 = vmul.f32 %v2261, %v2376
        %v2407 = vmul.f32 %v2262, %v2376
        %v2408 = vmul.f32 %v2263, %v2376
        %vm2409 = vcmp.ge.f32.partialorder %v2377, 0.0
        %vm2410 = vcmp.ge.f32.partialorder %v2378, 0.0
        %vm2411 = vcmp.ge.f32.partialorder %v2379, 0.0
        %vm2412 = vcmp.ge.f32.partialorder %v2380, 0.0
        %vm2413 = vcmp.ge.f32.partialorder %v2381, 0.0
        %vm2414 = vcmp.ge.f32.partialorder %v2382, 0.0
        %vm2415 = vcmp.ge.f32.partialorder %v2383, 0.0
        %vm2416 = vcmp.ge.f32.partialorder %v2384, 0.0
        %vm2417 = vcmp.ge.f32.partialorder %v2385, 0.0
        %vm2418 = vcmp.ge.f32.partialorder %v2386, 0.0
        %vm2419 = vcmp.ge.f32.partialorder %v2387, 0.0
        %vm2420 = vcmp.ge.f32.partialorder %v2388, 0.0
        %vm2421 = vcmp.ge.f32.partialorder %v2389, 0.0
        %vm2422 = vcmp.ge.f32.partialorder %v2390, 0.0
        %vm2423 = vcmp.ge.f32.partialorder %v2391, 0.0
        %vm2424 = vcmp.ge.f32.partialorder %v2392, 0.0
        %vm2425 = vcmp.ge.f32.partialorder %v2393, 0.0
        %vm2426 = vcmp.ge.f32.partialorder %v2394, 0.0
        %vm2427 = vcmp.ge.f32.partialorder %v2395, 0.0
        %vm2428 = vcmp.ge.f32.partialorder %v2396, 0.0
        %vm2429 = vcmp.ge.f32.partialorder %v2397, 0.0
        %vm2430 = vcmp.ge.f32.partialorder %v2398, 0.0
        %vm2431 = vcmp.ge.f32.partialorder %v2399, 0.0
        %vm2432 = vcmp.ge.f32.partialorder %v2400, 0.0
        %vm2433 = vcmp.ge.f32.partialorder %v2401, 0.0
        %vm2434 = vcmp.ge.f32.partialorder %v2402, 0.0
        %vm2435 = vcmp.ge.f32.partialorder %v2403, 0.0
        %vm2436 = vcmp.ge.f32.partialorder %v2404, 0.0
        %vm2437 = vcmp.ge.f32.partialorder %v2405, 0.0
        %vm2438 = vcmp.ge.f32.partialorder %v2406, 0.0
        %vm2439 = vcmp.ge.f32.partialorder %v2407, 0.0
        %vm2440 = vcmp.ge.f32.partialorder %v2408, 0.0
        %v2441 = vstv %s334
        %v2442 = vmul.f32 %v2441, %v2377
        %v2443 = vmul.f32 %v2441, %v2378
        %v2444 = vmul.f32 %v2441, %v2379
        %v2445 = vmul.f32 %v2441, %v2380
        %v2446 = vmul.f32 %v2441, %v2381
        %v2447 = vmul.f32 %v2441, %v2382
        %v2448 = vmul.f32 %v2441, %v2383
        %v2449 = vmul.f32 %v2441, %v2384
        %v2450 = vmul.f32 %v2441, %v2385
        %v2451 = vmul.f32 %v2441, %v2386
        %v2452 = vmul.f32 %v2441, %v2387
        %v2453 = vmul.f32 %v2441, %v2388
        %v2454 = vmul.f32 %v2441, %v2389
        %v2455 = vmul.f32 %v2441, %v2390
        %v2456 = vmul.f32 %v2441, %v2391
        %v2457 = vmul.f32 %v2441, %v2392
        %v2458 = vmul.f32 %v2441, %v2393
        %v2459 = vmul.f32 %v2441, %v2394
        %v2460 = vmul.f32 %v2441, %v2395
        %v2461 = vmul.f32 %v2441, %v2396
        %v2462 = vmul.f32 %v2441, %v2397
        %v2463 = vmul.f32 %v2441, %v2398
        %v2464 = vmul.f32 %v2441, %v2399
        %v2465 = vmul.f32 %v2441, %v2400
        %v2466 = vmul.f32 %v2441, %v2401
        %v2467 = vmul.f32 %v2441, %v2402
        %v2468 = vmul.f32 %v2441, %v2403
        %v2469 = vmul.f32 %v2441, %v2404
        %v2470 = vmul.f32 %v2441, %v2405
        %v2471 = vmul.f32 %v2441, %v2406
        %v2472 = vmul.f32 %v2441, %v2407
        %v2473 = vmul.f32 %v2441, %v2408
        %v2474 = vsel %vm2409, %v2377, %v2442
        %v2475 = vsel %vm2410, %v2378, %v2443
        %v2476 = vsel %vm2411, %v2379, %v2444
        %v2477 = vsel %vm2412, %v2380, %v2445
        %v2478 = vsel %vm2413, %v2381, %v2446
        %v2479 = vsel %vm2414, %v2382, %v2447
        %v2480 = vsel %vm2415, %v2383, %v2448
        %v2481 = vsel %vm2416, %v2384, %v2449
        %v2482 = vsel %vm2417, %v2385, %v2450
        %v2483 = vsel %vm2418, %v2386, %v2451
        %v2484 = vsel %vm2419, %v2387, %v2452
        %v2485 = vsel %vm2420, %v2388, %v2453
        %v2486 = vsel %vm2421, %v2389, %v2454
        %v2487 = vsel %vm2422, %v2390, %v2455
        %v2488 = vsel %vm2423, %v2391, %v2456
        %v2489 = vsel %vm2424, %v2392, %v2457
        %v2490 = vsel %vm2425, %v2393, %v2458
        %v2491 = vsel %vm2426, %v2394, %v2459
        %v2492 = vsel %vm2427, %v2395, %v2460
        %v2493 = vsel %vm2428, %v2396, %v2461
        %v2494 = vsel %vm2429, %v2397, %v2462
        %v2495 = vsel %vm2430, %v2398, %v2463
        %v2496 = vsel %vm2431, %v2399, %v2464
        %v2497 = vsel %vm2432, %v2400, %v2465
        %v2498 = vsel %vm2433, %v2401, %v2466
        %v2499 = vsel %vm2434, %v2402, %v2467
        %v2500 = vsel %vm2435, %v2403, %v2468
        %v2501 = vsel %vm2436, %v2404, %v2469
        %v2502 = vsel %vm2437, %v2405, %v2470
        %v2503 = vsel %vm2438, %v2406, %v2471
        %v2504 = vsel %vm2439, %v2407, %v2472
        %v2505 = vsel %vm2440, %v2408, %v2473
        %2506 = vst.msk [vmem:[#allocation4] sm:$0xff] %vm2154, 0.0
        %2507 = vst.msk [vmem:[#allocation4 + $0x8] sm:$0xff] %vm2154, 0.0
        %vm2508 = vcmask 58368
        %2509 = vst.msk [vmem:[#allocation4 + $0x10] sm:$0x3] %vm2508, 0.0
        %2510 = vst.msk [vmem:[#allocation4 + $0x18] sm:$0xff] %vm2154, 0.0
        %2511 = vst.msk [vmem:[#allocation4 + $0x20] sm:$0xff] %vm2154, 0.0
        %2512 = vst.msk [vmem:[#allocation4 + $0x28] sm:$0x3] %vm2508, 0.0
        %2513 = vst.msk [vmem:[#allocation4 + $0x30] sm:$0xff] %vm2154, 0.0
        %2514 = vst.msk [vmem:[#allocation4 + $0x38] sm:$0xff] %vm2154, 0.0
        %2515 = vst.msk [vmem:[#allocation4 + $0x40] sm:$0x3] %vm2508, 0.0
        %2516 = vst.msk [vmem:[#allocation4 + $0x48] sm:$0xff] %vm2154, 0.0
        %2517 = vst.msk [vmem:[#allocation4 + $0x50] sm:$0xff] %vm2154, 0.0
        %2518 = vst.msk [vmem:[#allocation4 + $0x58] sm:$0x3] %vm2508, 0.0
        %2519 = vst.msk [vmem:[#allocation4 + $0x60] sm:$0xff] %vm2154, 0.0
        %2520 = vst.msk [vmem:[#allocation4 + $0x68] sm:$0xff] %vm2154, 0.0
        %2521 = vst.msk [vmem:[#allocation4 + $0x70] sm:$0x3] %vm2508, 0.0
        %2522 = vst.msk [vmem:[#allocation4 + $0x78] sm:$0xff] %vm2154, 0.0
        %2523 = vst.msk [vmem:[#allocation4 + $0x80] sm:$0xff] %vm2154, 0.0
        %2524 = vst.msk [vmem:[#allocation4 + $0x88] sm:$0x3] %vm2508, 0.0
        %2525 = vst.msk [vmem:[#allocation4 + $0x90] sm:$0xff] %vm2154, 0.0
        %2526 = vst.msk [vmem:[#allocation4 + $0x98] sm:$0xff] %vm2154, 0.0
        %2527 = vst.msk [vmem:[#allocation4 + $0xa0] sm:$0x3] %vm2508, 0.0
        %2528 = vst.msk [vmem:[#allocation4 + $0xa8] sm:$0xff] %vm2154, 0.0
        %2529 = vst.msk [vmem:[#allocation4 + $0xb0] sm:$0xff] %vm2154, 0.0
        %2530 = vst.msk [vmem:[#allocation4 + $0xb8] sm:$0x3] %vm2508, 0.0
        %2531 = vst.msk [vmem:[#allocation4 + $0xc0] sm:$0xff] %vm2154, 0.0
        %2532 = vst.msk [vmem:[#allocation4 + $0xc8] sm:$0xff] %vm2154, 0.0
        %2533 = vst.msk [vmem:[#allocation4 + $0xd0] sm:$0x3] %vm2508, 0.0
        %2534 = vst.msk [vmem:[#allocation4 + $0xd8] sm:$0xff] %vm2154, 0.0
        %2535 = vst.msk [vmem:[#allocation4 + $0xe0] sm:$0xff] %vm2154, 0.0
        %2536 = vst.msk [vmem:[#allocation4 + $0xe8] sm:$0x3] %vm2508, 0.0
        %2537 = vst.msk [vmem:[#allocation4 + $0xf0] sm:$0xff] %vm2154, 0.0
        %2538 = vst.msk [vmem:[#allocation4 + $0xf8] sm:$0xff] %vm2154, 0.0
        %2539 = vst.msk [vmem:[#allocation4 + $0x100] sm:$0x3] %vm2508, 0.0
        %2540 = vst.msk [vmem:[#allocation4 + $0x108] sm:$0xff] %vm2154, 0.0
        %2541 = vst.msk [vmem:[#allocation4 + $0x110] sm:$0xff] %vm2154, 0.0
        %2542 = vst.msk [vmem:[#allocation4 + $0x118] sm:$0x3] %vm2508, 0.0
        %2543 = vst.msk [vmem:[#allocation4 + $0x120] sm:$0xff] %vm2154, 0.0
        %2544 = vst.msk [vmem:[#allocation4 + $0x128] sm:$0xff] %vm2154, 0.0
        %2545 = vst.msk [vmem:[#allocation4 + $0x130] sm:$0x3] %vm2508, 0.0
        %2546 = vst.msk [vmem:[#allocation4 + $0x138] sm:$0xff] %vm2154, 0.0
        %2547 = vst.msk [vmem:[#allocation4 + $0x140] sm:$0xff] %vm2154, 0.0
        %2548 = vst.msk [vmem:[#allocation4 + $0x148] sm:$0x3] %vm2508, 0.0
        %2549 = vst.msk [vmem:[#allocation4 + $0x150] sm:$0xff] %vm2154, 0.0
        %2550 = vst.msk [vmem:[#allocation4 + $0x158] sm:$0xff] %vm2154, 0.0
        %2551 = vst.msk [vmem:[#allocation4 + $0x160] sm:$0x3] %vm2508, 0.0
        %2552 = vst.msk [vmem:[#allocation4 + $0x168] sm:$0xff] %vm2154, 0.0
        %2553 = vst.msk [vmem:[#allocation4 + $0x170] sm:$0xff] %vm2154, 0.0
        %2554 = vst.msk [vmem:[#allocation4 + $0x178] sm:$0x3] %vm2508, 0.0
        %2555 = vst.msk [vmem:[#allocation4 + $0x180] sm:$0xff] %vm2154, 0.0
        %2556 = vst.msk [vmem:[#allocation4 + $0x188] sm:$0xff] %vm2154, 0.0
        %2557 = vst.msk [vmem:[#allocation4 + $0x190] sm:$0x3] %vm2508, 0.0
        %2558 = vst.msk [vmem:[#allocation4 + $0x198] sm:$0xff] %vm2154, 0.0
        %2559 = vst.msk [vmem:[#allocation4 + $0x1a0] sm:$0xff] %vm2154, 0.0
        %2560 = vst.msk [vmem:[#allocation4 + $0x1a8] sm:$0x3] %vm2508, 0.0
        %s2561 = scalar_lea.vmem [#allocation4], 24
        %2562 = vst.msk [vmem:[%s2561 + $0x1] sm:$0xff] %vm2154, %v2474
        %2563 = vst.msk [vmem:[%s2561 + $0x9] sm:$0xff] %vm2154, %v2475
        %2564 = vst.msk [vmem:[%s2561 + $0x19] sm:$0xff] %vm2154, %v2476
        %2565 = vst.msk [vmem:[%s2561 + $0x21] sm:$0xff] %vm2154, %v2477
        %2566 = vst.msk [vmem:[%s2561 + $0x31] sm:$0xff] %vm2154, %v2478
        %2567 = vst.msk [vmem:[%s2561 + $0x39] sm:$0xff] %vm2154, %v2479
        %2568 = vst.msk [vmem:[%s2561 + $0x49] sm:$0xff] %vm2154, %v2480
        %2569 = vst.msk [vmem:[%s2561 + $0x51] sm:$0xff] %vm2154, %v2481
        %2570 = vst.msk [vmem:[%s2561 + $0x61] sm:$0xff] %vm2154, %v2482
        %2571 = vst.msk [vmem:[%s2561 + $0x69] sm:$0xff] %vm2154, %v2483
        %2572 = vst.msk [vmem:[%s2561 + $0x79] sm:$0xff] %vm2154, %v2484
        %2573 = vst.msk [vmem:[%s2561 + $0x81] sm:$0xff] %vm2154, %v2485
        %2574 = vst.msk [vmem:[%s2561 + $0x91] sm:$0xff] %vm2154, %v2486
        %2575 = vst.msk [vmem:[%s2561 + $0x99] sm:$0xff] %vm2154, %v2487
        %2576 = vst.msk [vmem:[%s2561 + $0xa9] sm:$0xff] %vm2154, %v2488
        %2577 = vst.msk [vmem:[%s2561 + $0xb1] sm:$0xff] %vm2154, %v2489
        %2578 = vst.msk [vmem:[%s2561 + $0xc1] sm:$0xff] %vm2154, %v2490
        %2579 = vst.msk [vmem:[%s2561 + $0xc9] sm:$0xff] %vm2154, %v2491
        %2580 = vst.msk [vmem:[%s2561 + $0xd9] sm:$0xff] %vm2154, %v2492
        %2581 = vst.msk [vmem:[%s2561 + $0xe1] sm:$0xff] %vm2154, %v2493
        %2582 = vst.msk [vmem:[%s2561 + $0xf1] sm:$0xff] %vm2154, %v2494
        %2583 = vst.msk [vmem:[%s2561 + $0xf9] sm:$0xff] %vm2154, %v2495
        %2584 = vst.msk [vmem:[%s2561 + $0x109] sm:$0xff] %vm2154, %v2496
        %2585 = vst.msk [vmem:[%s2561 + $0x111] sm:$0xff] %vm2154, %v2497
        %2586 = vst.msk [vmem:[%s2561 + $0x121] sm:$0xff] %vm2154, %v2498
        %2587 = vst.msk [vmem:[%s2561 + $0x129] sm:$0xff] %vm2154, %v2499
        %2588 = vst.msk [vmem:[%s2561 + $0x139] sm:$0xff] %vm2154, %v2500
        %2589 = vst.msk [vmem:[%s2561 + $0x141] sm:$0xff] %vm2154, %v2501
        %2590 = vst.msk [vmem:[%s2561 + $0x151] sm:$0xff] %vm2154, %v2502
        %2591 = vst.msk [vmem:[%s2561 + $0x159] sm:$0xff] %vm2154, %v2503
        %2592 = vst.msk [vmem:[%s2561 + $0x169] sm:$0xff] %vm2154, %v2504
        %2593 = vst.msk [vmem:[%s2561 + $0x171] sm:$0xff] %vm2154, %v2505
        %s2594 = sld [smem:[#allocation6 + $0x1]]
        %v2595 = vld [vmem:[#allocation4] sm:$0xff]
        %v2596 = vld [vmem:[#allocation4 + $0x8] sm:$0xff]
        %v2597 = vld [vmem:[#allocation4 + $0x18] sm:$0xff]
        %v2598 = vld [vmem:[#allocation4 + $0x20] sm:$0xff]
        %v2599 = vld [vmem:[#allocation4 + $0x30] sm:$0xff]
        %v2600 = vld [vmem:[#allocation4 + $0x38] sm:$0xff]
        %v2601 = vld [vmem:[#allocation4 + $0x48] sm:$0xff]
        %v2602 = vld [vmem:[#allocation4 + $0x50] sm:$0xff]
        %v2603 = vld [vmem:[#allocation4 + $0x60] sm:$0xff]
        %v2604 = vld [vmem:[#allocation4 + $0x68] sm:$0xff]
        %v2605 = vld [vmem:[#allocation4 + $0x78] sm:$0xff]
        %v2606 = vld [vmem:[#allocation4 + $0x80] sm:$0xff]
        %v2607 = vld [vmem:[#allocation4 + $0x90] sm:$0xff]
        %v2608 = vld [vmem:[#allocation4 + $0x98] sm:$0xff]
        %v2609 = vld [vmem:[#allocation4 + $0xa8] sm:$0xff]
        %v2610 = vld [vmem:[#allocation4 + $0xb0] sm:$0xff]
        %v2611 = vld [vmem:[#allocation4 + $0xc0] sm:$0xff]
        %v2612 = vld [vmem:[#allocation4 + $0xc8] sm:$0xff]
        %v2613 = vld [vmem:[#allocation4 + $0xd8] sm:$0xff]
        %v2614 = vld [vmem:[#allocation4 + $0xe0] sm:$0xff]
        %v2615 = vld [vmem:[#allocation4 + $0xf0] sm:$0xff]
        %v2616 = vld [vmem:[#allocation4 + $0xf8] sm:$0xff]
        %v2617 = vld [vmem:[#allocation4 + $0x108] sm:$0xff]
        %v2618 = vld [vmem:[#allocation4 + $0x110] sm:$0xff]
        %v2619 = vld [vmem:[#allocation4 + $0x120] sm:$0xff]
        %v2620 = vld [vmem:[#allocation4 + $0x128] sm:$0xff]
        %v2621 = vld [vmem:[#allocation4 + $0x138] sm:$0xff]
        %v2622 = vld [vmem:[#allocation4 + $0x140] sm:$0xff]
        %v2623 = vld [vmem:[#allocation4 + $0x150] sm:$0xff]
        %v2624 = vld [vmem:[#allocation4 + $0x158] sm:$0xff]
        %v2625 = vld [vmem:[#allocation4 + $0x168] sm:$0xff]
        %v2626 = vld [vmem:[#allocation4 + $0x170] sm:$0xff]
        %2627 = vst.msk [vmem:[#allocation5] sm:$0xff] %vm2154, %v2595
        %2628 = vst.msk [vmem:[#allocation5 + $0x8] sm:$0xff] %vm2154, %v2596
        %2629 = vst.msk [vmem:[#allocation5 + $0x10] sm:$0xff] %vm2154, %v2597
        %2630 = vst.msk [vmem:[#allocation5 + $0x18] sm:$0xff] %vm2154, %v2598
        %2631 = vst.msk [vmem:[#allocation5 + $0x20] sm:$0xff] %vm2154, %v2599
        %2632 = vst.msk [vmem:[#allocation5 + $0x28] sm:$0xff] %vm2154, %v2600
        %2633 = vst.msk [vmem:[#allocation5 + $0x30] sm:$0xff] %vm2154, %v2601
        %2634 = vst.msk [vmem:[#allocation5 + $0x38] sm:$0xff] %vm2154, %v2602
        %2635 = vst.msk [vmem:[#allocation5 + $0x40] sm:$0xff] %vm2154, %v2603
        %2636 = vst.msk [vmem:[#allocation5 + $0x48] sm:$0xff] %vm2154, %v2604
        %2637 = vst.msk [vmem:[#allocation5 + $0x50] sm:$0xff] %vm2154, %v2605
        %2638 = vst.msk [vmem:[#allocation5 + $0x58] sm:$0xff] %vm2154, %v2606
        %2639 = vst.msk [vmem:[#allocation5 + $0x60] sm:$0xff] %vm2154, %v2607
        %2640 = vst.msk [vmem:[#allocation5 + $0x68] sm:$0xff] %vm2154, %v2608
        %2641 = vst.msk [vmem:[#allocation5 + $0x70] sm:$0xff] %vm2154, %v2609
        %2642 = vst.msk [vmem:[#allocation5 + $0x78] sm:$0xff] %vm2154, %v2610
        %2643 = vst.msk [vmem:[#allocation5 + $0x80] sm:$0xff] %vm2154, %v2611
        %2644 = vst.msk [vmem:[#allocation5 + $0x88] sm:$0xff] %vm2154, %v2612
        %2645 = vst.msk [vmem:[#allocation5 + $0x90] sm:$0xff] %vm2154, %v2613
        %2646 = vst.msk [vmem:[#allocation5 + $0x98] sm:$0xff] %vm2154, %v2614
        %2647 = vst.msk [vmem:[#allocation5 + $0xa0] sm:$0xff] %vm2154, %v2615
        %2648 = vst.msk [vmem:[#allocation5 + $0xa8] sm:$0xff] %vm2154, %v2616
        %2649 = vst.msk [vmem:[#allocation5 + $0xb0] sm:$0xff] %vm2154, %v2617
        %2650 = vst.msk [vmem:[#allocation5 + $0xb8] sm:$0xff] %vm2154, %v2618
        %2651 = vst.msk [vmem:[#allocation5 + $0xc0] sm:$0xff] %vm2154, %v2619
        %2652 = vst.msk [vmem:[#allocation5 + $0xc8] sm:$0xff] %vm2154, %v2620
        %2653 = vst.msk [vmem:[#allocation5 + $0xd0] sm:$0xff] %vm2154, %v2621
        %2654 = vst.msk [vmem:[#allocation5 + $0xd8] sm:$0xff] %vm2154, %v2622
        %2655 = vst.msk [vmem:[#allocation5 + $0xe0] sm:$0xff] %vm2154, %v2623
        %2656 = vst.msk [vmem:[#allocation5 + $0xe8] sm:$0xff] %vm2154, %v2624
        %2657 = vst.msk [vmem:[#allocation5 + $0xf0] sm:$0xff] %vm2154, %v2625
        %2658 = vst.msk [vmem:[#allocation5 + $0xf8] sm:$0xff] %vm2154, %v2626
        %v2659 = vld [vmem:[#allocation4 + $0x1] sm:$0xff]
        %v2660 = vld [vmem:[#allocation4 + $0x9] sm:$0xff]
        %v2661 = vld [vmem:[#allocation4 + $0x19] sm:$0xff]
        %v2662 = vld [vmem:[#allocation4 + $0x21] sm:$0xff]
        %v2663 = vld [vmem:[#allocation4 + $0x31] sm:$0xff]
        %v2664 = vld [vmem:[#allocation4 + $0x39] sm:$0xff]
        %v2665 = vld [vmem:[#allocation4 + $0x49] sm:$0xff]
        %v2666 = vld [vmem:[#allocation4 + $0x51] sm:$0xff]
        %v2667 = vld [vmem:[#allocation4 + $0x61] sm:$0xff]
        %v2668 = vld [vmem:[#allocation4 + $0x69] sm:$0xff]
        %v2669 = vld [vmem:[#allocation4 + $0x79] sm:$0xff]
        %v2670 = vld [vmem:[#allocation4 + $0x81] sm:$0xff]
        %v2671 = vld [vmem:[#allocation4 + $0x91] sm:$0xff]
        %v2672 = vld [vmem:[#allocation4 + $0x99] sm:$0xff]
        %v2673 = vld [vmem:[#allocation4 + $0xa9] sm:$0xff]
        %v2674 = vld [vmem:[#allocation4 + $0xb1] sm:$0xff]
        %v2675 = vld [vmem:[#allocation4 + $0xc1] sm:$0xff]
        %v2676 = vld [vmem:[#allocation4 + $0xc9] sm:$0xff]
        %v2677 = vld [vmem:[#allocation4 + $0xd9] sm:$0xff]
        %v2678 = vld [vmem:[#allocation4 + $0xe1] sm:$0xff]
        %v2679 = vld [vmem:[#allocation4 + $0xf1] sm:$0xff]
        %v2680 = vld [vmem:[#allocation4 + $0xf9] sm:$0xff]
        %v2681 = vld [vmem:[#allocation4 + $0x109] sm:$0xff]
        %v2682 = vld [vmem:[#allocation4 + $0x111] sm:$0xff]
        %v2683 = vld [vmem:[#allocation4 + $0x121] sm:$0xff]
        %v2684 = vld [vmem:[#allocation4 + $0x129] sm:$0xff]
        %v2685 = vld [vmem:[#allocation4 + $0x139] sm:$0xff]
        %v2686 = vld [vmem:[#allocation4 + $0x141] sm:$0xff]
        %v2687 = vld [vmem:[#allocation4 + $0x151] sm:$0xff]
        %v2688 = vld [vmem:[#allocation4 + $0x159] sm:$0xff]
        %v2689 = vld [vmem:[#allocation4 + $0x169] sm:$0xff]
        %v2690 = vld [vmem:[#allocation4 + $0x171] sm:$0xff]
        %2723 = vrot.lane.b32.xlu0 %v2659, 8
        %v2724 = vpop.permute.xlu0 %2723
        %2725 = vrot.lane.b32.xlu0 %v2660, 8
        %v2726 = vpop.permute.xlu0 %2725
        %2727 = vrot.lane.b32.xlu0 %v2661, 8
        %v2728 = vpop.permute.xlu0 %2727
        %2729 = vrot.lane.b32.xlu0 %v2662, 8
        %v2730 = vpop.permute.xlu0 %2729
        %2731 = vrot.lane.b32.xlu0 %v2663, 8
        %v2732 = vpop.permute.xlu0 %2731
        %2733 = vrot.lane.b32.xlu0 %v2664, 8
        %v2734 = vpop.permute.xlu0 %2733
        %2735 = vrot.lane.b32.xlu0 %v2665, 8
        %v2736 = vpop.permute.xlu0 %2735
        %2737 = vrot.lane.b32.xlu0 %v2666, 8
        %v2738 = vpop.permute.xlu0 %2737
        %2739 = vrot.lane.b32.xlu0 %v2667, 8
        %v2740 = vpop.permute.xlu0 %2739
        %2741 = vrot.lane.b32.xlu0 %v2668, 8
        %v2742 = vpop.permute.xlu0 %2741
        %2743 = vrot.lane.b32.xlu0 %v2669, 8
        %v2744 = vpop.permute.xlu0 %2743
        %2745 = vrot.lane.b32.xlu0 %v2670, 8
        %v2746 = vpop.permute.xlu0 %2745
        %2747 = vrot.lane.b32.xlu0 %v2671, 8
        %v2748 = vpop.permute.xlu0 %2747
        %2749 = vrot.lane.b32.xlu0 %v2672, 8
        %v2750 = vpop.permute.xlu0 %2749
        %2751 = vrot.lane.b32.xlu0 %v2673, 8
        %v2752 = vpop.permute.xlu0 %2751
        %2753 = vrot.lane.b32.xlu0 %v2674, 8
        %v2754 = vpop.permute.xlu0 %2753
        %2755 = vrot.lane.b32.xlu0 %v2675, 8
        %v2756 = vpop.permute.xlu0 %2755
        %2757 = vrot.lane.b32.xlu0 %v2676, 8
        %v2758 = vpop.permute.xlu0 %2757
        %2759 = vrot.lane.b32.xlu0 %v2677, 8
        %v2760 = vpop.permute.xlu0 %2759
        %2761 = vrot.lane.b32.xlu0 %v2678, 8
        %v2762 = vpop.permute.xlu0 %2761
        %2763 = vrot.lane.b32.xlu0 %v2679, 8
        %v2764 = vpop.permute.xlu0 %2763
        %2765 = vrot.lane.b32.xlu0 %v2680, 8
        %v2766 = vpop.permute.xlu0 %2765
        %2767 = vrot.lane.b32.xlu0 %v2681, 8
        %v2768 = vpop.permute.xlu0 %2767
        %2769 = vrot.lane.b32.xlu0 %v2682, 8
        %v2770 = vpop.permute.xlu0 %2769
        %2771 = vrot.lane.b32.xlu0 %v2683, 8
        %v2772 = vpop.permute.xlu0 %2771
        %2773 = vrot.lane.b32.xlu0 %v2684, 8
        %v2774 = vpop.permute.xlu0 %2773
        %2775 = vrot.lane.b32.xlu0 %v2685, 8
        %v2776 = vpop.permute.xlu0 %2775
        %2777 = vrot.lane.b32.xlu0 %v2686, 8
        %v2778 = vpop.permute.xlu0 %2777
        %2779 = vrot.lane.b32.xlu0 %v2687, 8
        %v2780 = vpop.permute.xlu0 %2779
        %2781 = vrot.lane.b32.xlu0 %v2688, 8
        %v2782 = vpop.permute.xlu0 %2781
        %2783 = vrot.lane.b32.xlu0 %v2689, 8
        %v2784 = vpop.permute.xlu0 %2783
        %2785 = vrot.lane.b32.xlu0 %v2690, 8
        %v2786 = vpop.permute.xlu0 %2785
        %vm2819 = vcmask 130112
        %2820 = vst.msk [vmem:[#allocation5] sm:$0xff] %vm2819, %v2724
        %2821 = vst.msk [vmem:[#allocation5 + $0x8] sm:$0xff] %vm2819, %v2726
        %2822 = vst.msk [vmem:[#allocation5 + $0x10] sm:$0xff] %vm2819, %v2728
        %2823 = vst.msk [vmem:[#allocation5 + $0x18] sm:$0xff] %vm2819, %v2730
        %2824 = vst.msk [vmem:[#allocation5 + $0x20] sm:$0xff] %vm2819, %v2732
        %2825 = vst.msk [vmem:[#allocation5 + $0x28] sm:$0xff] %vm2819, %v2734
        %2826 = vst.msk [vmem:[#allocation5 + $0x30] sm:$0xff] %vm2819, %v2736
        %2827 = vst.msk [vmem:[#allocation5 + $0x38] sm:$0xff] %vm2819, %v2738
        %2828 = vst.msk [vmem:[#allocation5 + $0x40] sm:$0xff] %vm2819, %v2740
        %2829 = vst.msk [vmem:[#allocation5 + $0x48] sm:$0xff] %vm2819, %v2742
        %2830 = vst.msk [vmem:[#allocation5 + $0x50] sm:$0xff] %vm2819, %v2744
        %2831 = vst.msk [vmem:[#allocation5 + $0x58] sm:$0xff] %vm2819, %v2746
        %2832 = vst.msk [vmem:[#allocation5 + $0x60] sm:$0xff] %vm2819, %v2748
        %2833 = vst.msk [vmem:[#allocation5 + $0x68] sm:$0xff] %vm2819, %v2750
        %2834 = vst.msk [vmem:[#allocation5 + $0x70] sm:$0xff] %vm2819, %v2752
        %2835 = vst.msk [vmem:[#allocation5 + $0x78] sm:$0xff] %vm2819, %v2754
        %2836 = vst.msk [vmem:[#allocation5 + $0x80] sm:$0xff] %vm2819, %v2756
        %2837 = vst.msk [vmem:[#allocation5 + $0x88] sm:$0xff] %vm2819, %v2758
        %2838 = vst.msk [vmem:[#allocation5 + $0x90] sm:$0xff] %vm2819, %v2760
        %2839 = vst.msk [vmem:[#allocation5 + $0x98] sm:$0xff] %vm2819, %v2762
        %2840 = vst.msk [vmem:[#allocation5 + $0xa0] sm:$0xff] %vm2819, %v2764
        %2841 = vst.msk [vmem:[#allocation5 + $0xa8] sm:$0xff] %vm2819, %v2766
        %2842 = vst.msk [vmem:[#allocation5 + $0xb0] sm:$0xff] %vm2819, %v2768
        %2843 = vst.msk [vmem:[#allocation5 + $0xb8] sm:$0xff] %vm2819, %v2770
        %2844 = vst.msk [vmem:[#allocation5 + $0xc0] sm:$0xff] %vm2819, %v2772
        %2845 = vst.msk [vmem:[#allocation5 + $0xc8] sm:$0xff] %vm2819, %v2774
        %2846 = vst.msk [vmem:[#allocation5 + $0xd0] sm:$0xff] %vm2819, %v2776
        %2847 = vst.msk [vmem:[#allocation5 + $0xd8] sm:$0xff] %vm2819, %v2778
        %2848 = vst.msk [vmem:[#allocation5 + $0xe0] sm:$0xff] %vm2819, %v2780
        %2849 = vst.msk [vmem:[#allocation5 + $0xe8] sm:$0xff] %vm2819, %v2782
        %2850 = vst.msk [vmem:[#allocation5 + $0xf0] sm:$0xff] %vm2819, %v2784
        %2851 = vst.msk [vmem:[#allocation5 + $0xf8] sm:$0xff] %vm2819, %v2786
        %v2852 = vld [vmem:[#allocation4 + $0x2] sm:$0xff]
        %v2853 = vld [vmem:[#allocation4 + $0xa] sm:$0xff]
        %v2854 = vld [vmem:[#allocation4 + $0x1a] sm:$0xff]
        %v2855 = vld [vmem:[#allocation4 + $0x22] sm:$0xff]
        %v2856 = vld [vmem:[#allocation4 + $0x32] sm:$0xff]
        %v2857 = vld [vmem:[#allocation4 + $0x3a] sm:$0xff]
        %v2858 = vld [vmem:[#allocation4 + $0x4a] sm:$0xff]
        %v2859 = vld [vmem:[#allocation4 + $0x52] sm:$0xff]
        %v2860 = vld [vmem:[#allocation4 + $0x62] sm:$0xff]
        %v2861 = vld [vmem:[#allocation4 + $0x6a] sm:$0xff]
        %v2862 = vld [vmem:[#allocation4 + $0x7a] sm:$0xff]
        %v2863 = vld [vmem:[#allocation4 + $0x82] sm:$0xff]
        %v2864 = vld [vmem:[#allocation4 + $0x92] sm:$0xff]
        %v2865 = vld [vmem:[#allocation4 + $0x9a] sm:$0xff]
        %v2866 = vld [vmem:[#allocation4 + $0xaa] sm:$0xff]
        %v2867 = vld [vmem:[#allocation4 + $0xb2] sm:$0xff]
        %v2868 = vld [vmem:[#allocation4 + $0xc2] sm:$0xff]
        %v2869 = vld [vmem:[#allocation4 + $0xca] sm:$0xff]
        %v2870 = vld [vmem:[#allocation4 + $0xda] sm:$0xff]
        %v2871 = vld [vmem:[#allocation4 + $0xe2] sm:$0xff]
        %v2872 = vld [vmem:[#allocation4 + $0xf2] sm:$0xff]
        %v2873 = vld [vmem:[#allocation4 + $0xfa] sm:$0xff]
        %v2874 = vld [vmem:[#allocation4 + $0x10a] sm:$0xff]
        %v2875 = vld [vmem:[#allocation4 + $0x112] sm:$0xff]
        %v2876 = vld [vmem:[#allocation4 + $0x122] sm:$0xff]
        %v2877 = vld [vmem:[#allocation4 + $0x12a] sm:$0xff]
        %v2878 = vld [vmem:[#allocation4 + $0x13a] sm:$0xff]
        %v2879 = vld [vmem:[#allocation4 + $0x142] sm:$0xff]
        %v2880 = vld [vmem:[#allocation4 + $0x152] sm:$0xff]
        %v2881 = vld [vmem:[#allocation4 + $0x15a] sm:$0xff]
        %v2882 = vld [vmem:[#allocation4 + $0x16a] sm:$0xff]
        %v2883 = vld [vmem:[#allocation4 + $0x172] sm:$0xff]
        %2916 = vrot.lane.b32.xlu0 %v2852, 16
        %v2917 = vpop.permute.xlu0 %2916
        %2918 = vrot.lane.b32.xlu0 %v2853, 16
        %v2919 = vpop.permute.xlu0 %2918
        %2920 = vrot.lane.b32.xlu0 %v2854, 16
        %v2921 = vpop.permute.xlu0 %2920
        %2922 = vrot.lane.b32.xlu0 %v2855, 16
        %v2923 = vpop.permute.xlu0 %2922
        %2924 = vrot.lane.b32.xlu0 %v2856, 16
        %v2925 = vpop.permute.xlu0 %2924
        %2926 = vrot.lane.b32.xlu0 %v2857, 16
        %v2927 = vpop.permute.xlu0 %2926
        %2928 = vrot.lane.b32.xlu0 %v2858, 16
        %v2929 = vpop.permute.xlu0 %2928
        %2930 = vrot.lane.b32.xlu0 %v2859, 16
        %v2931 = vpop.permute.xlu0 %2930
        %2932 = vrot.lane.b32.xlu0 %v2860, 16
        %v2933 = vpop.permute.xlu0 %2932
        %2934 = vrot.lane.b32.xlu0 %v2861, 16
        %v2935 = vpop.permute.xlu0 %2934
        %2936 = vrot.lane.b32.xlu0 %v2862, 16
        %v2937 = vpop.permute.xlu0 %2936
        %2938 = vrot.lane.b32.xlu0 %v2863, 16
        %v2939 = vpop.permute.xlu0 %2938
        %2940 = vrot.lane.b32.xlu0 %v2864, 16
        %v2941 = vpop.permute.xlu0 %2940
        %2942 = vrot.lane.b32.xlu0 %v2865, 16
        %v2943 = vpop.permute.xlu0 %2942
        %2944 = vrot.lane.b32.xlu0 %v2866, 16
        %v2945 = vpop.permute.xlu0 %2944
        %2946 = vrot.lane.b32.xlu0 %v2867, 16
        %v2947 = vpop.permute.xlu0 %2946
        %2948 = vrot.lane.b32.xlu0 %v2868, 16
        %v2949 = vpop.permute.xlu0 %2948
        %2950 = vrot.lane.b32.xlu0 %v2869, 16
        %v2951 = vpop.permute.xlu0 %2950
        %2952 = vrot.lane.b32.xlu0 %v2870, 16
        %v2953 = vpop.permute.xlu0 %2952
        %2954 = vrot.lane.b32.xlu0 %v2871, 16
        %v2955 = vpop.permute.xlu0 %2954
        %2956 = vrot.lane.b32.xlu0 %v2872, 16
        %v2957 = vpop.permute.xlu0 %2956
        %2958 = vrot.lane.b32.xlu0 %v2873, 16
        %v2959 = vpop.permute.xlu0 %2958
        %2960 = vrot.lane.b32.xlu0 %v2874, 16
        %v2961 = vpop.permute.xlu0 %2960
        %2962 = vrot.lane.b32.xlu0 %v2875, 16
        %v2963 = vpop.permute.xlu0 %2962
        %2964 = vrot.lane.b32.xlu0 %v2876, 16
        %v2965 = vpop.permute.xlu0 %2964
        %2966 = vrot.lane.b32.xlu0 %v2877, 16
        %v2967 = vpop.permute.xlu0 %2966
        %2968 = vrot.lane.b32.xlu0 %v2878, 16
        %v2969 = vpop.permute.xlu0 %2968
        %2970 = vrot.lane.b32.xlu0 %v2879, 16
        %v2971 = vpop.permute.xlu0 %2970
        %2972 = vrot.lane.b32.xlu0 %v2880, 16
        %v2973 = vpop.permute.xlu0 %2972
        %2974 = vrot.lane.b32.xlu0 %v2881, 16
        %v2975 = vpop.permute.xlu0 %2974
        %2976 = vrot.lane.b32.xlu0 %v2882, 16
        %v2977 = vpop.permute.xlu0 %2976
        %2978 = vrot.lane.b32.xlu0 %v2883, 16
        %v2979 = vpop.permute.xlu0 %2978
        %vm3012 = vcmask 195712
        %3013 = vst.msk [vmem:[#allocation5] sm:$0xff] %vm3012, %v2917
        %3014 = vst.msk [vmem:[#allocation5 + $0x8] sm:$0xff] %vm3012, %v2919
        %3015 = vst.msk [vmem:[#allocation5 + $0x10] sm:$0xff] %vm3012, %v2921
        %3016 = vst.msk [vmem:[#allocation5 + $0x18] sm:$0xff] %vm3012, %v2923
        %3017 = vst.msk [vmem:[#allocation5 + $0x20] sm:$0xff] %vm3012, %v2925
        %3018 = vst.msk [vmem:[#allocation5 + $0x28] sm:$0xff] %vm3012, %v2927
        %3019 = vst.msk [vmem:[#allocation5 + $0x30] sm:$0xff] %vm3012, %v2929
        %3020 = vst.msk [vmem:[#allocation5 + $0x38] sm:$0xff] %vm3012, %v2931
        %3021 = vst.msk [vmem:[#allocation5 + $0x40] sm:$0xff] %vm3012, %v2933
        %3022 = vst.msk [vmem:[#allocation5 + $0x48] sm:$0xff] %vm3012, %v2935
        %3023 = vst.msk [vmem:[#allocation5 + $0x50] sm:$0xff] %vm3012, %v2937
        %3024 = vst.msk [vmem:[#allocation5 + $0x58] sm:$0xff] %vm3012, %v2939
        %3025 = vst.msk [vmem:[#allocation5 + $0x60] sm:$0xff] %vm3012, %v2941
        %3026 = vst.msk [vmem:[#allocation5 + $0x68] sm:$0xff] %vm3012, %v2943
        %3027 = vst.msk [vmem:[#allocation5 + $0x70] sm:$0xff] %vm3012, %v2945
        %3028 = vst.msk [vmem:[#allocation5 + $0x78] sm:$0xff] %vm3012, %v2947
        %3029 = vst.msk [vmem:[#allocation5 + $0x80] sm:$0xff] %vm3012, %v2949
        %3030 = vst.msk [vmem:[#allocation5 + $0x88] sm:$0xff] %vm3012, %v2951
        %3031 = vst.msk [vmem:[#allocation5 + $0x90] sm:$0xff] %vm3012, %v2953
        %3032 = vst.msk [vmem:[#allocation5 + $0x98] sm:$0xff] %vm3012, %v2955
        %3033 = vst.msk [vmem:[#allocation5 + $0xa0] sm:$0xff] %vm3012, %v2957
        %3034 = vst.msk [vmem:[#allocation5 + $0xa8] sm:$0xff] %vm3012, %v2959
        %3035 = vst.msk [vmem:[#allocation5 + $0xb0] sm:$0xff] %vm3012, %v2961
        %3036 = vst.msk [vmem:[#allocation5 + $0xb8] sm:$0xff] %vm3012, %v2963
        %3037 = vst.msk [vmem:[#allocation5 + $0xc0] sm:$0xff] %vm3012, %v2965
        %3038 = vst.msk [vmem:[#allocation5 + $0xc8] sm:$0xff] %vm3012, %v2967
        %3039 = vst.msk [vmem:[#allocation5 + $0xd0] sm:$0xff] %vm3012, %v2969
        %3040 = vst.msk [vmem:[#allocation5 + $0xd8] sm:$0xff] %vm3012, %v2971
        %3041 = vst.msk [vmem:[#allocation5 + $0xe0] sm:$0xff] %vm3012, %v2973
        %3042 = vst.msk [vmem:[#allocation5 + $0xe8] sm:$0xff] %vm3012, %v2975
        %3043 = vst.msk [vmem:[#allocation5 + $0xf0] sm:$0xff] %vm3012, %v2977
        %3044 = vst.msk [vmem:[#allocation5 + $0xf8] sm:$0xff] %vm3012, %v2979
        %v3045 = vld [vmem:[%s2561] sm:$0xff]
        %v3046 = vld [vmem:[%s2561 + $0x8] sm:$0xff]
        %v3047 = vld [vmem:[%s2561 + $0x18] sm:$0xff]
        %v3048 = vld [vmem:[%s2561 + $0x20] sm:$0xff]
        %v3049 = vld [vmem:[%s2561 + $0x30] sm:$0xff]
        %v3050 = vld [vmem:[%s2561 + $0x38] sm:$0xff]
        %v3051 = vld [vmem:[%s2561 + $0x48] sm:$0xff]
        %v3052 = vld [vmem:[%s2561 + $0x50] sm:$0xff]
        %v3053 = vld [vmem:[%s2561 + $0x60] sm:$0xff]
        %v3054 = vld [vmem:[%s2561 + $0x68] sm:$0xff]
        %v3055 = vld [vmem:[%s2561 + $0x78] sm:$0xff]
        %v3056 = vld [vmem:[%s2561 + $0x80] sm:$0xff]
        %v3057 = vld [vmem:[%s2561 + $0x90] sm:$0xff]
        %v3058 = vld [vmem:[%s2561 + $0x98] sm:$0xff]
        %v3059 = vld [vmem:[%s2561 + $0xa8] sm:$0xff]
        %v3060 = vld [vmem:[%s2561 + $0xb0] sm:$0xff]
        %v3061 = vld [vmem:[%s2561 + $0xc0] sm:$0xff]
        %v3062 = vld [vmem:[%s2561 + $0xc8] sm:$0xff]
        %v3063 = vld [vmem:[%s2561 + $0xd8] sm:$0xff]
        %v3064 = vld [vmem:[%s2561 + $0xe0] sm:$0xff]
        %v3065 = vld [vmem:[%s2561 + $0xf0] sm:$0xff]
        %v3066 = vld [vmem:[%s2561 + $0xf8] sm:$0xff]
        %v3067 = vld [vmem:[%s2561 + $0x108] sm:$0xff]
        %v3068 = vld [vmem:[%s2561 + $0x110] sm:$0xff]
        %v3069 = vld [vmem:[%s2561 + $0x120] sm:$0xff]
        %v3070 = vld [vmem:[%s2561 + $0x128] sm:$0xff]
        %v3071 = vld [vmem:[%s2561 + $0x138] sm:$0xff]
        %v3072 = vld [vmem:[%s2561 + $0x140] sm:$0xff]
        %v3073 = vld [vmem:[%s2561 + $0x150] sm:$0xff]
        %v3074 = vld [vmem:[%s2561 + $0x158] sm:$0xff]
        %v3075 = vld [vmem:[%s2561 + $0x168] sm:$0xff]
        %v3076 = vld [vmem:[%s2561 + $0x170] sm:$0xff]
        %3109 = vrot.lane.b32.xlu0 %v3045, 24
        %v3110 = vpop.permute.xlu0 %3109
        %3111 = vrot.lane.b32.xlu0 %v3046, 24
        %v3112 = vpop.permute.xlu0 %3111
        %3113 = vrot.lane.b32.xlu0 %v3047, 24
        %v3114 = vpop.permute.xlu0 %3113
        %3115 = vrot.lane.b32.xlu0 %v3048, 24
        %v3116 = vpop.permute.xlu0 %3115
        %3117 = vrot.lane.b32.xlu0 %v3049, 24
        %v3118 = vpop.permute.xlu0 %3117
        %3119 = vrot.lane.b32.xlu0 %v3050, 24
        %v3120 = vpop.permute.xlu0 %3119
        %3121 = vrot.lane.b32.xlu0 %v3051, 24
        %v3122 = vpop.permute.xlu0 %3121
        %3123 = vrot.lane.b32.xlu0 %v3052, 24
        %v3124 = vpop.permute.xlu0 %3123
        %3125 = vrot.lane.b32.xlu0 %v3053, 24
        %v3126 = vpop.permute.xlu0 %3125
        %3127 = vrot.lane.b32.xlu0 %v3054, 24
        %v3128 = vpop.permute.xlu0 %3127
        %3129 = vrot.lane.b32.xlu0 %v3055, 24
        %v3130 = vpop.permute.xlu0 %3129
        %3131 = vrot.lane.b32.xlu0 %v3056, 24
        %v3132 = vpop.permute.xlu0 %3131
        %3133 = vrot.lane.b32.xlu0 %v3057, 24
        %v3134 = vpop.permute.xlu0 %3133
        %3135 = vrot.lane.b32.xlu0 %v3058, 24
        %v3136 = vpop.permute.xlu0 %3135
        %3137 = vrot.lane.b32.xlu0 %v3059, 24
        %v3138 = vpop.permute.xlu0 %3137
        %3139 = vrot.lane.b32.xlu0 %v3060, 24
        %v3140 = vpop.permute.xlu0 %3139
        %3141 = vrot.lane.b32.xlu0 %v3061, 24
        %v3142 = vpop.permute.xlu0 %3141
        %3143 = vrot.lane.b32.xlu0 %v3062, 24
        %v3144 = vpop.permute.xlu0 %3143
        %3145 = vrot.lane.b32.xlu0 %v3063, 24
        %v3146 = vpop.permute.xlu0 %3145
        %3147 = vrot.lane.b32.xlu0 %v3064, 24
        %v3148 = vpop.permute.xlu0 %3147
        %3149 = vrot.lane.b32.xlu0 %v3065, 24
        %v3150 = vpop.permute.xlu0 %3149
        %3151 = vrot.lane.b32.xlu0 %v3066, 24
        %v3152 = vpop.permute.xlu0 %3151
        %3153 = vrot.lane.b32.xlu0 %v3067, 24
        %v3154 = vpop.permute.xlu0 %3153
        %3155 = vrot.lane.b32.xlu0 %v3068, 24
        %v3156 = vpop.permute.xlu0 %3155
        %3157 = vrot.lane.b32.xlu0 %v3069, 24
        %v3158 = vpop.permute.xlu0 %3157
        %3159 = vrot.lane.b32.xlu0 %v3070, 24
        %v3160 = vpop.permute.xlu0 %3159
        %3161 = vrot.lane.b32.xlu0 %v3071, 24
        %v3162 = vpop.permute.xlu0 %3161
        %3163 = vrot.lane.b32.xlu0 %v3072, 24
        %v3164 = vpop.permute.xlu0 %3163
        %3165 = vrot.lane.b32.xlu0 %v3073, 24
        %v3166 = vpop.permute.xlu0 %3165
        %3167 = vrot.lane.b32.xlu0 %v3074, 24
        %v3168 = vpop.permute.xlu0 %3167
        %3169 = vrot.lane.b32.xlu0 %v3075, 24
        %v3170 = vpop.permute.xlu0 %3169
        %3171 = vrot.lane.b32.xlu0 %v3076, 24
        %v3172 = vpop.permute.xlu0 %3171
        %vm3205 = vcmask 261312
        %3206 = vst.msk [vmem:[#allocation5] sm:$0xff] %vm3205, %v3110
        %3207 = vst.msk [vmem:[#allocation5 + $0x8] sm:$0xff] %vm3205, %v3112
        %3208 = vst.msk [vmem:[#allocation5 + $0x10] sm:$0xff] %vm3205, %v3114
        %3209 = vst.msk [vmem:[#allocation5 + $0x18] sm:$0xff] %vm3205, %v3116
        %3210 = vst.msk [vmem:[#allocation5 + $0x20] sm:$0xff] %vm3205, %v3118
        %3211 = vst.msk [vmem:[#allocation5 + $0x28] sm:$0xff] %vm3205, %v3120
        %3212 = vst.msk [vmem:[#allocation5 + $0x30] sm:$0xff] %vm3205, %v3122
        %3213 = vst.msk [vmem:[#allocation5 + $0x38] sm:$0xff] %vm3205, %v3124
        %3214 = vst.msk [vmem:[#allocation5 + $0x40] sm:$0xff] %vm3205, %v3126
        %3215 = vst.msk [vmem:[#allocation5 + $0x48] sm:$0xff] %vm3205, %v3128
        %3216 = vst.msk [vmem:[#allocation5 + $0x50] sm:$0xff] %vm3205, %v3130
        %3217 = vst.msk [vmem:[#allocation5 + $0x58] sm:$0xff] %vm3205, %v3132
        %3218 = vst.msk [vmem:[#allocation5 + $0x60] sm:$0xff] %vm3205, %v3134
        %3219 = vst.msk [vmem:[#allocation5 + $0x68] sm:$0xff] %vm3205, %v3136
        %3220 = vst.msk [vmem:[#allocation5 + $0x70] sm:$0xff] %vm3205, %v3138
        %3221 = vst.msk [vmem:[#allocation5 + $0x78] sm:$0xff] %vm3205, %v3140
        %3222 = vst.msk [vmem:[#allocation5 + $0x80] sm:$0xff] %vm3205, %v3142
        %3223 = vst.msk [vmem:[#allocation5 + $0x88] sm:$0xff] %vm3205, %v3144
        %3224 = vst.msk [vmem:[#allocation5 + $0x90] sm:$0xff] %vm3205, %v3146
        %3225 = vst.msk [vmem:[#allocation5 + $0x98] sm:$0xff] %vm3205, %v3148
        %3226 = vst.msk [vmem:[#allocation5 + $0xa0] sm:$0xff] %vm3205, %v3150
        %3227 = vst.msk [vmem:[#allocation5 + $0xa8] sm:$0xff] %vm3205, %v3152
        %3228 = vst.msk [vmem:[#allocation5 + $0xb0] sm:$0xff] %vm3205, %v3154
        %3229 = vst.msk [vmem:[#allocation5 + $0xb8] sm:$0xff] %vm3205, %v3156
        %3230 = vst.msk [vmem:[#allocation5 + $0xc0] sm:$0xff] %vm3205, %v3158
        %3231 = vst.msk [vmem:[#allocation5 + $0xc8] sm:$0xff] %vm3205, %v3160
        %3232 = vst.msk [vmem:[#allocation5 + $0xd0] sm:$0xff] %vm3205, %v3162
        %3233 = vst.msk [vmem:[#allocation5 + $0xd8] sm:$0xff] %vm3205, %v3164
        %3234 = vst.msk [vmem:[#allocation5 + $0xe0] sm:$0xff] %vm3205, %v3166
        %3235 = vst.msk [vmem:[#allocation5 + $0xe8] sm:$0xff] %vm3205, %v3168
        %3236 = vst.msk [vmem:[#allocation5 + $0xf0] sm:$0xff] %vm3205, %v3170
        %3237 = vst.msk [vmem:[#allocation5 + $0xf8] sm:$0xff] %vm3205, %v3172
        %v3238 = vld [vmem:[%s2561 + $0x1] sm:$0xff]
        %v3239 = vld [vmem:[%s2561 + $0x9] sm:$0xff]
        %v3240 = vld [vmem:[%s2561 + $0x19] sm:$0xff]
        %v3241 = vld [vmem:[%s2561 + $0x21] sm:$0xff]
        %v3242 = vld [vmem:[%s2561 + $0x31] sm:$0xff]
        %v3243 = vld [vmem:[%s2561 + $0x39] sm:$0xff]
        %v3244 = vld [vmem:[%s2561 + $0x49] sm:$0xff]
        %v3245 = vld [vmem:[%s2561 + $0x51] sm:$0xff]
        %v3246 = vld [vmem:[%s2561 + $0x61] sm:$0xff]
        %v3247 = vld [vmem:[%s2561 + $0x69] sm:$0xff]
        %v3248 = vld [vmem:[%s2561 + $0x79] sm:$0xff]
        %v3249 = vld [vmem:[%s2561 + $0x81] sm:$0xff]
        %v3250 = vld [vmem:[%s2561 + $0x91] sm:$0xff]
        %v3251 = vld [vmem:[%s2561 + $0x99] sm:$0xff]
        %v3252 = vld [vmem:[%s2561 + $0xa9] sm:$0xff]
        %v3253 = vld [vmem:[%s2561 + $0xb1] sm:$0xff]
        %v3254 = vld [vmem:[%s2561 + $0xc1] sm:$0xff]
        %v3255 = vld [vmem:[%s2561 + $0xc9] sm:$0xff]
        %v3256 = vld [vmem:[%s2561 + $0xd9] sm:$0xff]
        %v3257 = vld [vmem:[%s2561 + $0xe1] sm:$0xff]
        %v3258 = vld [vmem:[%s2561 + $0xf1] sm:$0xff]
        %v3259 = vld [vmem:[%s2561 + $0xf9] sm:$0xff]
        %v3260 = vld [vmem:[%s2561 + $0x109] sm:$0xff]
        %v3261 = vld [vmem:[%s2561 + $0x111] sm:$0xff]
        %v3262 = vld [vmem:[%s2561 + $0x121] sm:$0xff]
        %v3263 = vld [vmem:[%s2561 + $0x129] sm:$0xff]
        %v3264 = vld [vmem:[%s2561 + $0x139] sm:$0xff]
        %v3265 = vld [vmem:[%s2561 + $0x141] sm:$0xff]
        %v3266 = vld [vmem:[%s2561 + $0x151] sm:$0xff]
        %v3267 = vld [vmem:[%s2561 + $0x159] sm:$0xff]
        %v3268 = vld [vmem:[%s2561 + $0x169] sm:$0xff]
        %v3269 = vld [vmem:[%s2561 + $0x171] sm:$0xff]
        %3302 = vrot.lane.b32.xlu0 %v3238, 32
        %v3303 = vpop.permute.xlu0 %3302
        %3304 = vrot.lane.b32.xlu0 %v3239, 32
        %v3305 = vpop.permute.xlu0 %3304
        %3306 = vrot.lane.b32.xlu0 %v3240, 32
        %v3307 = vpop.permute.xlu0 %3306
        %3308 = vrot.lane.b32.xlu0 %v3241, 32
        %v3309 = vpop.permute.xlu0 %3308
        %3310 = vrot.lane.b32.xlu0 %v3242, 32
        %v3311 = vpop.permute.xlu0 %3310
        %3312 = vrot.lane.b32.xlu0 %v3243, 32
        %v3313 = vpop.permute.xlu0 %3312
        %3314 = vrot.lane.b32.xlu0 %v3244, 32
        %v3315 = vpop.permute.xlu0 %3314
        %3316 = vrot.lane.b32.xlu0 %v3245, 32
        %v3317 = vpop.permute.xlu0 %3316
        %3318 = vrot.lane.b32.xlu0 %v3246, 32
        %v3319 = vpop.permute.xlu0 %3318
        %3320 = vrot.lane.b32.xlu0 %v3247, 32
        %v3321 = vpop.permute.xlu0 %3320
        %3322 = vrot.lane.b32.xlu0 %v3248, 32
        %v3323 = vpop.permute.xlu0 %3322
        %3324 = vrot.lane.b32.xlu0 %v3249, 32
        %v3325 = vpop.permute.xlu0 %3324
        %3326 = vrot.lane.b32.xlu0 %v3250, 32
        %v3327 = vpop.permute.xlu0 %3326
        %3328 = vrot.lane.b32.xlu0 %v3251, 32
        %v3329 = vpop.permute.xlu0 %3328
        %3330 = vrot.lane.b32.xlu0 %v3252, 32
        %v3331 = vpop.permute.xlu0 %3330
        %3332 = vrot.lane.b32.xlu0 %v3253, 32
        %v3333 = vpop.permute.xlu0 %3332
        %3334 = vrot.lane.b32.xlu0 %v3254, 32
        %v3335 = vpop.permute.xlu0 %3334
        %3336 = vrot.lane.b32.xlu0 %v3255, 32
        %v3337 = vpop.permute.xlu0 %3336
        %3338 = vrot.lane.b32.xlu0 %v3256, 32
        %v3339 = vpop.permute.xlu0 %3338
        %3340 = vrot.lane.b32.xlu0 %v3257, 32
        %v3341 = vpop.permute.xlu0 %3340
        %3342 = vrot.lane.b32.xlu0 %v3258, 32
        %v3343 = vpop.permute.xlu0 %3342
        %3344 = vrot.lane.b32.xlu0 %v3259, 32
        %v3345 = vpop.permute.xlu0 %3344
        %3346 = vrot.lane.b32.xlu0 %v3260, 32
        %v3347 = vpop.permute.xlu0 %3346
        %3348 = vrot.lane.b32.xlu0 %v3261, 32
        %v3349 = vpop.permute.xlu0 %3348
        %3350 = vrot.lane.b32.xlu0 %v3262, 32
        %v3351 = vpop.permute.xlu0 %3350
        %3352 = vrot.lane.b32.xlu0 %v3263, 32
        %v3353 = vpop.permute.xlu0 %3352
        %3354 = vrot.lane.b32.xlu0 %v3264, 32
        %v3355 = vpop.permute.xlu0 %3354
        %3356 = vrot.lane.b32.xlu0 %v3265, 32
        %v3357 = vpop.permute.xlu0 %3356
        %3358 = vrot.lane.b32.xlu0 %v3266, 32
        %v3359 = vpop.permute.xlu0 %3358
        %3360 = vrot.lane.b32.xlu0 %v3267, 32
        %v3361 = vpop.permute.xlu0 %3360
        %3362 = vrot.lane.b32.xlu0 %v3268, 32
        %v3363 = vpop.permute.xlu0 %3362
        %3364 = vrot.lane.b32.xlu0 %v3269, 32
        %v3365 = vpop.permute.xlu0 %3364
        %vm3398 = vcmask 326912
        %3399 = vst.msk [vmem:[#allocation5] sm:$0xff] %vm3398, %v3303
        %3400 = vst.msk [vmem:[#allocation5 + $0x8] sm:$0xff] %vm3398, %v3305
        %3401 = vst.msk [vmem:[#allocation5 + $0x10] sm:$0xff] %vm3398, %v3307
        %3402 = vst.msk [vmem:[#allocation5 + $0x18] sm:$0xff] %vm3398, %v3309
        %3403 = vst.msk [vmem:[#allocation5 + $0x20] sm:$0xff] %vm3398, %v3311
        %3404 = vst.msk [vmem:[#allocation5 + $0x28] sm:$0xff] %vm3398, %v3313
        %3405 = vst.msk [vmem:[#allocation5 + $0x30] sm:$0xff] %vm3398, %v3315
        %3406 = vst.msk [vmem:[#allocation5 + $0x38] sm:$0xff] %vm3398, %v3317
        %3407 = vst.msk [vmem:[#allocation5 + $0x40] sm:$0xff] %vm3398, %v3319
        %3408 = vst.msk [vmem:[#allocation5 + $0x48] sm:$0xff] %vm3398, %v3321
        %3409 = vst.msk [vmem:[#allocation5 + $0x50] sm:$0xff] %vm3398, %v3323
        %3410 = vst.msk [vmem:[#allocation5 + $0x58] sm:$0xff] %vm3398, %v3325
        %3411 = vst.msk [vmem:[#allocation5 + $0x60] sm:$0xff] %vm3398, %v3327
        %3412 = vst.msk [vmem:[#allocation5 + $0x68] sm:$0xff] %vm3398, %v3329
        %3413 = vst.msk [vmem:[#allocation5 + $0x70] sm:$0xff] %vm3398, %v3331
        %3414 = vst.msk [vmem:[#allocation5 + $0x78] sm:$0xff] %vm3398, %v3333
        %3415 = vst.msk [vmem:[#allocation5 + $0x80] sm:$0xff] %vm3398, %v3335
        %3416 = vst.msk [vmem:[#allocation5 + $0x88] sm:$0xff] %vm3398, %v3337
        %3417 = vst.msk [vmem:[#allocation5 + $0x90] sm:$0xff] %vm3398, %v3339
        %3418 = vst.msk [vmem:[#allocation5 + $0x98] sm:$0xff] %vm3398, %v3341
        %3419 = vst.msk [vmem:[#allocation5 + $0xa0] sm:$0xff] %vm3398, %v3343
        %3420 = vst.msk [vmem:[#allocation5 + $0xa8] sm:$0xff] %vm3398, %v3345
        %3421 = vst.msk [vmem:[#allocation5 + $0xb0] sm:$0xff] %vm3398, %v3347
        %3422 = vst.msk [vmem:[#allocation5 + $0xb8] sm:$0xff] %vm3398, %v3349
        %3423 = vst.msk [vmem:[#allocation5 + $0xc0] sm:$0xff] %vm3398, %v3351
        %3424 = vst.msk [vmem:[#allocation5 + $0xc8] sm:$0xff] %vm3398, %v3353
        %3425 = vst.msk [vmem:[#allocation5 + $0xd0] sm:$0xff] %vm3398, %v3355
        %3426 = vst.msk [vmem:[#allocation5 + $0xd8] sm:$0xff] %vm3398, %v3357
        %3427 = vst.msk [vmem:[#allocation5 + $0xe0] sm:$0xff] %vm3398, %v3359
        %3428 = vst.msk [vmem:[#allocation5 + $0xe8] sm:$0xff] %vm3398, %v3361
        %3429 = vst.msk [vmem:[#allocation5 + $0xf0] sm:$0xff] %vm3398, %v3363
        %3430 = vst.msk [vmem:[#allocation5 + $0xf8] sm:$0xff] %vm3398, %v3365
        %v3431 = vld [vmem:[%s2561 + $0x2] sm:$0xff]
        %v3432 = vld [vmem:[%s2561 + $0xa] sm:$0xff]
        %v3433 = vld [vmem:[%s2561 + $0x1a] sm:$0xff]
        %v3434 = vld [vmem:[%s2561 + $0x22] sm:$0xff]
        %v3435 = vld [vmem:[%s2561 + $0x32] sm:$0xff]
        %v3436 = vld [vmem:[%s2561 + $0x3a] sm:$0xff]
        %v3437 = vld [vmem:[%s2561 + $0x4a] sm:$0xff]
        %v3438 = vld [vmem:[%s2561 + $0x52] sm:$0xff]
        %v3439 = vld [vmem:[%s2561 + $0x62] sm:$0xff]
        %v3440 = vld [vmem:[%s2561 + $0x6a] sm:$0xff]
        %v3441 = vld [vmem:[%s2561 + $0x7a] sm:$0xff]
        %v3442 = vld [vmem:[%s2561 + $0x82] sm:$0xff]
        %v3443 = vld [vmem:[%s2561 + $0x92] sm:$0xff]
        %v3444 = vld [vmem:[%s2561 + $0x9a] sm:$0xff]
        %v3445 = vld [vmem:[%s2561 + $0xaa] sm:$0xff]
        %v3446 = vld [vmem:[%s2561 + $0xb2] sm:$0xff]
        %v3447 = vld [vmem:[%s2561 + $0xc2] sm:$0xff]
        %v3448 = vld [vmem:[%s2561 + $0xca] sm:$0xff]
        %v3449 = vld [vmem:[%s2561 + $0xda] sm:$0xff]
        %v3450 = vld [vmem:[%s2561 + $0xe2] sm:$0xff]
        %v3451 = vld [vmem:[%s2561 + $0xf2] sm:$0xff]
        %v3452 = vld [vmem:[%s2561 + $0xfa] sm:$0xff]
        %v3453 = vld [vmem:[%s2561 + $0x10a] sm:$0xff]
        %v3454 = vld [vmem:[%s2561 + $0x112] sm:$0xff]
        %v3455 = vld [vmem:[%s2561 + $0x122] sm:$0xff]
        %v3456 = vld [vmem:[%s2561 + $0x12a] sm:$0xff]
        %v3457 = vld [vmem:[%s2561 + $0x13a] sm:$0xff]
        %v3458 = vld [vmem:[%s2561 + $0x142] sm:$0xff]
        %v3459 = vld [vmem:[%s2561 + $0x152] sm:$0xff]
        %v3460 = vld [vmem:[%s2561 + $0x15a] sm:$0xff]
        %v3461 = vld [vmem:[%s2561 + $0x16a] sm:$0xff]
        %v3462 = vld [vmem:[%s2561 + $0x172] sm:$0xff]
        %3495 = vrot.lane.b32.xlu0 %v3431, 40
        %v3496 = vpop.permute.xlu0 %3495
        %3497 = vrot.lane.b32.xlu0 %v3432, 40
        %v3498 = vpop.permute.xlu0 %3497
        %3499 = vrot.lane.b32.xlu0 %v3433, 40
        %v3500 = vpop.permute.xlu0 %3499
        %3501 = vrot.lane.b32.xlu0 %v3434, 40
        %v3502 = vpop.permute.xlu0 %3501
        %3503 = vrot.lane.b32.xlu0 %v3435, 40
        %v3504 = vpop.permute.xlu0 %3503
        %3505 = vrot.lane.b32.xlu0 %v3436, 40
        %v3506 = vpop.permute.xlu0 %3505
        %3507 = vrot.lane.b32.xlu0 %v3437, 40
        %v3508 = vpop.permute.xlu0 %3507
        %3509 = vrot.lane.b32.xlu0 %v3438, 40
        %v3510 = vpop.permute.xlu0 %3509
        %3511 = vrot.lane.b32.xlu0 %v3439, 40
        %v3512 = vpop.permute.xlu0 %3511
        %3513 = vrot.lane.b32.xlu0 %v3440, 40
        %v3514 = vpop.permute.xlu0 %3513
        %3515 = vrot.lane.b32.xlu0 %v3441, 40
        %v3516 = vpop.permute.xlu0 %3515
        %3517 = vrot.lane.b32.xlu0 %v3442, 40
        %v3518 = vpop.permute.xlu0 %3517
        %3519 = vrot.lane.b32.xlu0 %v3443, 40
        %v3520 = vpop.permute.xlu0 %3519
        %3521 = vrot.lane.b32.xlu0 %v3444, 40
        %v3522 = vpop.permute.xlu0 %3521
        %3523 = vrot.lane.b32.xlu0 %v3445, 40
        %v3524 = vpop.permute.xlu0 %3523
        %3525 = vrot.lane.b32.xlu0 %v3446, 40
        %v3526 = vpop.permute.xlu0 %3525
        %3527 = vrot.lane.b32.xlu0 %v3447, 40
        %v3528 = vpop.permute.xlu0 %3527
        %3529 = vrot.lane.b32.xlu0 %v3448, 40
        %v3530 = vpop.permute.xlu0 %3529
        %3531 = vrot.lane.b32.xlu0 %v3449, 40
        %v3532 = vpop.permute.xlu0 %3531
        %3533 = vrot.lane.b32.xlu0 %v3450, 40
        %v3534 = vpop.permute.xlu0 %3533
        %3535 = vrot.lane.b32.xlu0 %v3451, 40
        %v3536 = vpop.permute.xlu0 %3535
        %3537 = vrot.lane.b32.xlu0 %v3452, 40
        %v3538 = vpop.permute.xlu0 %3537
        %3539 = vrot.lane.b32.xlu0 %v3453, 40
        %v3540 = vpop.permute.xlu0 %3539
        %3541 = vrot.lane.b32.xlu0 %v3454, 40
        %v3542 = vpop.permute.xlu0 %3541
        %3543 = vrot.lane.b32.xlu0 %v3455, 40
        %v3544 = vpop.permute.xlu0 %3543
        %3545 = vrot.lane.b32.xlu0 %v3456, 40
        %v3546 = vpop.permute.xlu0 %3545
        %3547 = vrot.lane.b32.xlu0 %v3457, 40
        %v3548 = vpop.permute.xlu0 %3547
        %3549 = vrot.lane.b32.xlu0 %v3458, 40
        %v3550 = vpop.permute.xlu0 %3549
        %3551 = vrot.lane.b32.xlu0 %v3459, 40
        %v3552 = vpop.permute.xlu0 %3551
        %3553 = vrot.lane.b32.xlu0 %v3460, 40
        %v3554 = vpop.permute.xlu0 %3553
        %3555 = vrot.lane.b32.xlu0 %v3461, 40
        %v3556 = vpop.permute.xlu0 %3555
        %3557 = vrot.lane.b32.xlu0 %v3462, 40
        %v3558 = vpop.permute.xlu0 %3557
        %vm3591 = vcmask 392512
        %3592 = vst.msk [vmem:[#allocation5] sm:$0xff] %vm3591, %v3496
        %3593 = vst.msk [vmem:[#allocation5 + $0x8] sm:$0xff] %vm3591, %v3498
        %3594 = vst.msk [vmem:[#allocation5 + $0x10] sm:$0xff] %vm3591, %v3500
        %3595 = vst.msk [vmem:[#allocation5 + $0x18] sm:$0xff] %vm3591, %v3502
        %3596 = vst.msk [vmem:[#allocation5 + $0x20] sm:$0xff] %vm3591, %v3504
        %3597 = vst.msk [vmem:[#allocation5 + $0x28] sm:$0xff] %vm3591, %v3506
        %3598 = vst.msk [vmem:[#allocation5 + $0x30] sm:$0xff] %vm3591, %v3508
        %3599 = vst.msk [vmem:[#allocation5 + $0x38] sm:$0xff] %vm3591, %v3510
        %3600 = vst.msk [vmem:[#allocation5 + $0x40] sm:$0xff] %vm3591, %v3512
        %3601 = vst.msk [vmem:[#allocation5 + $0x48] sm:$0xff] %vm3591, %v3514
        %3602 = vst.msk [vmem:[#allocation5 + $0x50] sm:$0xff] %vm3591, %v3516
        %3603 = vst.msk [vmem:[#allocation5 + $0x58] sm:$0xff] %vm3591, %v3518
        %3604 = vst.msk [vmem:[#allocation5 + $0x60] sm:$0xff] %vm3591, %v3520
        %3605 = vst.msk [vmem:[#allocation5 + $0x68] sm:$0xff] %vm3591, %v3522
        %3606 = vst.msk [vmem:[#allocation5 + $0x70] sm:$0xff] %vm3591, %v3524
        %3607 = vst.msk [vmem:[#allocation5 + $0x78] sm:$0xff] %vm3591, %v3526
        %3608 = vst.msk [vmem:[#allocation5 + $0x80] sm:$0xff] %vm3591, %v3528
        %3609 = vst.msk [vmem:[#allocation5 + $0x88] sm:$0xff] %vm3591, %v3530
        %3610 = vst.msk [vmem:[#allocation5 + $0x90] sm:$0xff] %vm3591, %v3532
        %3611 = vst.msk [vmem:[#allocation5 + $0x98] sm:$0xff] %vm3591, %v3534
        %3612 = vst.msk [vmem:[#allocation5 + $0xa0] sm:$0xff] %vm3591, %v3536
        %3613 = vst.msk [vmem:[#allocation5 + $0xa8] sm:$0xff] %vm3591, %v3538
        %3614 = vst.msk [vmem:[#allocation5 + $0xb0] sm:$0xff] %vm3591, %v3540
        %3615 = vst.msk [vmem:[#allocation5 + $0xb8] sm:$0xff] %vm3591, %v3542
        %3616 = vst.msk [vmem:[#allocation5 + $0xc0] sm:$0xff] %vm3591, %v3544
        %3617 = vst.msk [vmem:[#allocation5 + $0xc8] sm:$0xff] %vm3591, %v3546
        %3618 = vst.msk [vmem:[#allocation5 + $0xd0] sm:$0xff] %vm3591, %v3548
        %3619 = vst.msk [vmem:[#allocation5 + $0xd8] sm:$0xff] %vm3591, %v3550
        %3620 = vst.msk [vmem:[#allocation5 + $0xe0] sm:$0xff] %vm3591, %v3552
        %3621 = vst.msk [vmem:[#allocation5 + $0xe8] sm:$0xff] %vm3591, %v3554
        %3622 = vst.msk [vmem:[#allocation5 + $0xf0] sm:$0xff] %vm3591, %v3556
        %3623 = vst.msk [vmem:[#allocation5 + $0xf8] sm:$0xff] %vm3591, %v3558
        %s3624 = scalar_lea.vmem [#allocation4], 48
        %v3625 = vld [vmem:[%s3624] sm:$0xff]
        %v3626 = vld [vmem:[%s3624 + $0x8] sm:$0xff]
        %v3627 = vld [vmem:[%s3624 + $0x18] sm:$0xff]
        %v3628 = vld [vmem:[%s3624 + $0x20] sm:$0xff]
        %v3629 = vld [vmem:[%s3624 + $0x30] sm:$0xff]
        %v3630 = vld [vmem:[%s3624 + $0x38] sm:$0xff]
        %v3631 = vld [vmem:[%s3624 + $0x48] sm:$0xff]
        %v3632 = vld [vmem:[%s3624 + $0x50] sm:$0xff]
        %v3633 = vld [vmem:[%s3624 + $0x60] sm:$0xff]
        %v3634 = vld [vmem:[%s3624 + $0x68] sm:$0xff]
        %v3635 = vld [vmem:[%s3624 + $0x78] sm:$0xff]
        %v3636 = vld [vmem:[%s3624 + $0x80] sm:$0xff]
        %v3637 = vld [vmem:[%s3624 + $0x90] sm:$0xff]
        %v3638 = vld [vmem:[%s3624 + $0x98] sm:$0xff]
        %v3639 = vld [vmem:[%s3624 + $0xa8] sm:$0xff]
        %v3640 = vld [vmem:[%s3624 + $0xb0] sm:$0xff]
        %v3641 = vld [vmem:[%s3624 + $0xc0] sm:$0xff]
        %v3642 = vld [vmem:[%s3624 + $0xc8] sm:$0xff]
        %v3643 = vld [vmem:[%s3624 + $0xd8] sm:$0xff]
        %v3644 = vld [vmem:[%s3624 + $0xe0] sm:$0xff]
        %v3645 = vld [vmem:[%s3624 + $0xf0] sm:$0xff]
        %v3646 = vld [vmem:[%s3624 + $0xf8] sm:$0xff]
        %v3647 = vld [vmem:[%s3624 + $0x108] sm:$0xff]
        %v3648 = vld [vmem:[%s3624 + $0x110] sm:$0xff]
        %v3649 = vld [vmem:[%s3624 + $0x120] sm:$0xff]
        %v3650 = vld [vmem:[%s3624 + $0x128] sm:$0xff]
        %v3651 = vld [vmem:[%s3624 + $0x138] sm:$0xff]
        %v3652 = vld [vmem:[%s3624 + $0x140] sm:$0xff]
        %v3653 = vld [vmem:[%s3624 + $0x150] sm:$0xff]
        %v3654 = vld [vmem:[%s3624 + $0x158] sm:$0xff]
        %v3655 = vld [vmem:[%s3624 + $0x168] sm:$0xff]
        %v3656 = vld [vmem:[%s3624 + $0x170] sm:$0xff]
        %3689 = vrot.lane.b32.xlu0 %v3625, 48
        %v3690 = vpop.permute.xlu0 %3689
        %3691 = vrot.lane.b32.xlu0 %v3626, 48
        %v3692 = vpop.permute.xlu0 %3691
        %3693 = vrot.lane.b32.xlu0 %v3627, 48
        %v3694 = vpop.permute.xlu0 %3693
        %3695 = vrot.lane.b32.xlu0 %v3628, 48
        %v3696 = vpop.permute.xlu0 %3695
        %3697 = vrot.lane.b32.xlu0 %v3629, 48
        %v3698 = vpop.permute.xlu0 %3697
        %3699 = vrot.lane.b32.xlu0 %v3630, 48
        %v3700 = vpop.permute.xlu0 %3699
        %3701 = vrot.lane.b32.xlu0 %v3631, 48
        %v3702 = vpop.permute.xlu0 %3701
        %3703 = vrot.lane.b32.xlu0 %v3632, 48
        %v3704 = vpop.permute.xlu0 %3703
        %3705 = vrot.lane.b32.xlu0 %v3633, 48
        %v3706 = vpop.permute.xlu0 %3705
        %3707 = vrot.lane.b32.xlu0 %v3634, 48
        %v3708 = vpop.permute.xlu0 %3707
        %3709 = vrot.lane.b32.xlu0 %v3635, 48
        %v3710 = vpop.permute.xlu0 %3709
        %3711 = vrot.lane.b32.xlu0 %v3636, 48
        %v3712 = vpop.permute.xlu0 %3711
        %3713 = vrot.lane.b32.xlu0 %v3637, 48
        %v3714 = vpop.permute.xlu0 %3713
        %3715 = vrot.lane.b32.xlu0 %v3638, 48
        %v3716 = vpop.permute.xlu0 %3715
        %3717 = vrot.lane.b32.xlu0 %v3639, 48
        %v3718 = vpop.permute.xlu0 %3717
        %3719 = vrot.lane.b32.xlu0 %v3640, 48
        %v3720 = vpop.permute.xlu0 %3719
        %3721 = vrot.lane.b32.xlu0 %v3641, 48
        %v3722 = vpop.permute.xlu0 %3721
        %3723 = vrot.lane.b32.xlu0 %v3642, 48
        %v3724 = vpop.permute.xlu0 %3723
        %3725 = vrot.lane.b32.xlu0 %v3643, 48
        %v3726 = vpop.permute.xlu0 %3725
        %3727 = vrot.lane.b32.xlu0 %v3644, 48
        %v3728 = vpop.permute.xlu0 %3727
        %3729 = vrot.lane.b32.xlu0 %v3645, 48
        %v3730 = vpop.permute.xlu0 %3729
        %3731 = vrot.lane.b32.xlu0 %v3646, 48
        %v3732 = vpop.permute.xlu0 %3731
        %3733 = vrot.lane.b32.xlu0 %v3647, 48
        %v3734 = vpop.permute.xlu0 %3733
        %3735 = vrot.lane.b32.xlu0 %v3648, 48
        %v3736 = vpop.permute.xlu0 %3735
        %3737 = vrot.lane.b32.xlu0 %v3649, 48
        %v3738 = vpop.permute.xlu0 %3737
        %3739 = vrot.lane.b32.xlu0 %v3650, 48
        %v3740 = vpop.permute.xlu0 %3739
        %3741 = vrot.lane.b32.xlu0 %v3651, 48
        %v3742 = vpop.permute.xlu0 %3741
        %3743 = vrot.lane.b32.xlu0 %v3652, 48
        %v3744 = vpop.permute.xlu0 %3743
        %3745 = vrot.lane.b32.xlu0 %v3653, 48
        %v3746 = vpop.permute.xlu0 %3745
        %3747 = vrot.lane.b32.xlu0 %v3654, 48
        %v3748 = vpop.permute.xlu0 %3747
        %3749 = vrot.lane.b32.xlu0 %v3655, 48
        %v3750 = vpop.permute.xlu0 %3749
        %3751 = vrot.lane.b32.xlu0 %v3656, 48
        %v3752 = vpop.permute.xlu0 %3751
        %vm3785 = vcmask 458112
        %3786 = vst.msk [vmem:[#allocation5] sm:$0xff] %vm3785, %v3690
        %3787 = vst.msk [vmem:[#allocation5 + $0x8] sm:$0xff] %vm3785, %v3692
        %3788 = vst.msk [vmem:[#allocation5 + $0x10] sm:$0xff] %vm3785, %v3694
        %3789 = vst.msk [vmem:[#allocation5 + $0x18] sm:$0xff] %vm3785, %v3696
        %3790 = vst.msk [vmem:[#allocation5 + $0x20] sm:$0xff] %vm3785, %v3698
        %3791 = vst.msk [vmem:[#allocation5 + $0x28] sm:$0xff] %vm3785, %v3700
        %3792 = vst.msk [vmem:[#allocation5 + $0x30] sm:$0xff] %vm3785, %v3702
        %3793 = vst.msk [vmem:[#allocation5 + $0x38] sm:$0xff] %vm3785, %v3704
        %3794 = vst.msk [vmem:[#allocation5 + $0x40] sm:$0xff] %vm3785, %v3706
        %3795 = vst.msk [vmem:[#allocation5 + $0x48] sm:$0xff] %vm3785, %v3708
        %3796 = vst.msk [vmem:[#allocation5 + $0x50] sm:$0xff] %vm3785, %v3710
        %3797 = vst.msk [vmem:[#allocation5 + $0x58] sm:$0xff] %vm3785, %v3712
        %3798 = vst.msk [vmem:[#allocation5 + $0x60] sm:$0xff] %vm3785, %v3714
        %3799 = vst.msk [vmem:[#allocation5 + $0x68] sm:$0xff] %vm3785, %v3716
        %3800 = vst.msk [vmem:[#allocation5 + $0x70] sm:$0xff] %vm3785, %v3718
        %3801 = vst.msk [vmem:[#allocation5 + $0x78] sm:$0xff] %vm3785, %v3720
        %3802 = vst.msk [vmem:[#allocation5 + $0x80] sm:$0xff] %vm3785, %v3722
        %3803 = vst.msk [vmem:[#allocation5 + $0x88] sm:$0xff] %vm3785, %v3724
        %3804 = vst.msk [vmem:[#allocation5 + $0x90] sm:$0xff] %vm3785, %v3726
        %3805 = vst.msk [vmem:[#allocation5 + $0x98] sm:$0xff] %vm3785, %v3728
        %3806 = vst.msk [vmem:[#allocation5 + $0xa0] sm:$0xff] %vm3785, %v3730
        %3807 = vst.msk [vmem:[#allocation5 + $0xa8] sm:$0xff] %vm3785, %v3732
        %3808 = vst.msk [vmem:[#allocation5 + $0xb0] sm:$0xff] %vm3785, %v3734
        %3809 = vst.msk [vmem:[#allocation5 + $0xb8] sm:$0xff] %vm3785, %v3736
        %3810 = vst.msk [vmem:[#allocation5 + $0xc0] sm:$0xff] %vm3785, %v3738
        %3811 = vst.msk [vmem:[#allocation5 + $0xc8] sm:$0xff] %vm3785, %v3740
        %3812 = vst.msk [vmem:[#allocation5 + $0xd0] sm:$0xff] %vm3785, %v3742
        %3813 = vst.msk [vmem:[#allocation5 + $0xd8] sm:$0xff] %vm3785, %v3744
        %3814 = vst.msk [vmem:[#allocation5 + $0xe0] sm:$0xff] %vm3785, %v3746
        %3815 = vst.msk [vmem:[#allocation5 + $0xe8] sm:$0xff] %vm3785, %v3748
        %3816 = vst.msk [vmem:[#allocation5 + $0xf0] sm:$0xff] %vm3785, %v3750
        %3817 = vst.msk [vmem:[#allocation5 + $0xf8] sm:$0xff] %vm3785, %v3752
        %v3818 = vld [vmem:[%s3624 + $0x1] sm:$0xff]
        %v3819 = vld [vmem:[%s3624 + $0x9] sm:$0xff]
        %v3820 = vld [vmem:[%s3624 + $0x19] sm:$0xff]
        %v3821 = vld [vmem:[%s3624 + $0x21] sm:$0xff]
        %v3822 = vld [vmem:[%s3624 + $0x31] sm:$0xff]
        %v3823 = vld [vmem:[%s3624 + $0x39] sm:$0xff]
        %v3824 = vld [vmem:[%s3624 + $0x49] sm:$0xff]
        %v3825 = vld [vmem:[%s3624 + $0x51] sm:$0xff]
        %v3826 = vld [vmem:[%s3624 + $0x61] sm:$0xff]
        %v3827 = vld [vmem:[%s3624 + $0x69] sm:$0xff]
        %v3828 = vld [vmem:[%s3624 + $0x79] sm:$0xff]
        %v3829 = vld [vmem:[%s3624 + $0x81] sm:$0xff]
        %v3830 = vld [vmem:[%s3624 + $0x91] sm:$0xff]
        %v3831 = vld [vmem:[%s3624 + $0x99] sm:$0xff]
        %v3832 = vld [vmem:[%s3624 + $0xa9] sm:$0xff]
        %v3833 = vld [vmem:[%s3624 + $0xb1] sm:$0xff]
        %v3834 = vld [vmem:[%s3624 + $0xc1] sm:$0xff]
        %v3835 = vld [vmem:[%s3624 + $0xc9] sm:$0xff]
        %v3836 = vld [vmem:[%s3624 + $0xd9] sm:$0xff]
        %v3837 = vld [vmem:[%s3624 + $0xe1] sm:$0xff]
        %v3838 = vld [vmem:[%s3624 + $0xf1] sm:$0xff]
        %v3839 = vld [vmem:[%s3624 + $0xf9] sm:$0xff]
        %v3840 = vld [vmem:[%s3624 + $0x109] sm:$0xff]
        %v3841 = vld [vmem:[%s3624 + $0x111] sm:$0xff]
        %v3842 = vld [vmem:[%s3624 + $0x121] sm:$0xff]
        %v3843 = vld [vmem:[%s3624 + $0x129] sm:$0xff]
        %v3844 = vld [vmem:[%s3624 + $0x139] sm:$0xff]
        %v3845 = vld [vmem:[%s3624 + $0x141] sm:$0xff]
        %v3846 = vld [vmem:[%s3624 + $0x151] sm:$0xff]
        %v3847 = vld [vmem:[%s3624 + $0x159] sm:$0xff]
        %v3848 = vld [vmem:[%s3624 + $0x169] sm:$0xff]
        %v3849 = vld [vmem:[%s3624 + $0x171] sm:$0xff]
        %3882 = vrot.lane.b32.xlu0 %v3818, 56
        %v3883 = vpop.permute.xlu0 %3882
        %3884 = vrot.lane.b32.xlu0 %v3819, 56
        %v3885 = vpop.permute.xlu0 %3884
        %3886 = vrot.lane.b32.xlu0 %v3820, 56
        %v3887 = vpop.permute.xlu0 %3886
        %3888 = vrot.lane.b32.xlu0 %v3821, 56
        %v3889 = vpop.permute.xlu0 %3888
        %3890 = vrot.lane.b32.xlu0 %v3822, 56
        %v3891 = vpop.permute.xlu0 %3890
        %3892 = vrot.lane.b32.xlu0 %v3823, 56
        %v3893 = vpop.permute.xlu0 %3892
        %3894 = vrot.lane.b32.xlu0 %v3824, 56
        %v3895 = vpop.permute.xlu0 %3894
        %3896 = vrot.lane.b32.xlu0 %v3825, 56
        %v3897 = vpop.permute.xlu0 %3896
        %3898 = vrot.lane.b32.xlu0 %v3826, 56
        %v3899 = vpop.permute.xlu0 %3898
        %3900 = vrot.lane.b32.xlu0 %v3827, 56
        %v3901 = vpop.permute.xlu0 %3900
        %3902 = vrot.lane.b32.xlu0 %v3828, 56
        %v3903 = vpop.permute.xlu0 %3902
        %3904 = vrot.lane.b32.xlu0 %v3829, 56
        %v3905 = vpop.permute.xlu0 %3904
        %3906 = vrot.lane.b32.xlu0 %v3830, 56
        %v3907 = vpop.permute.xlu0 %3906
        %3908 = vrot.lane.b32.xlu0 %v3831, 56
        %v3909 = vpop.permute.xlu0 %3908
        %3910 = vrot.lane.b32.xlu0 %v3832, 56
        %v3911 = vpop.permute.xlu0 %3910
        %3912 = vrot.lane.b32.xlu0 %v3833, 56
        %v3913 = vpop.permute.xlu0 %3912
        %3914 = vrot.lane.b32.xlu0 %v3834, 56
        %v3915 = vpop.permute.xlu0 %3914
        %3916 = vrot.lane.b32.xlu0 %v3835, 56
        %v3917 = vpop.permute.xlu0 %3916
        %3918 = vrot.lane.b32.xlu0 %v3836, 56
        %v3919 = vpop.permute.xlu0 %3918
        %3920 = vrot.lane.b32.xlu0 %v3837, 56
        %v3921 = vpop.permute.xlu0 %3920
        %3922 = vrot.lane.b32.xlu0 %v3838, 56
        %v3923 = vpop.permute.xlu0 %3922
        %3924 = vrot.lane.b32.xlu0 %v3839, 56
        %v3925 = vpop.permute.xlu0 %3924
        %3926 = vrot.lane.b32.xlu0 %v3840, 56
        %v3927 = vpop.permute.xlu0 %3926
        %3928 = vrot.lane.b32.xlu0 %v3841, 56
        %v3929 = vpop.permute.xlu0 %3928
        %3930 = vrot.lane.b32.xlu0 %v3842, 56
        %v3931 = vpop.permute.xlu0 %3930
        %3932 = vrot.lane.b32.xlu0 %v3843, 56
        %v3933 = vpop.permute.xlu0 %3932
        %3934 = vrot.lane.b32.xlu0 %v3844, 56
        %v3935 = vpop.permute.xlu0 %3934
        %3936 = vrot.lane.b32.xlu0 %v3845, 56
        %v3937 = vpop.permute.xlu0 %3936
        %3938 = vrot.lane.b32.xlu0 %v3846, 56
        %v3939 = vpop.permute.xlu0 %3938
        %3940 = vrot.lane.b32.xlu0 %v3847, 56
        %v3941 = vpop.permute.xlu0 %3940
        %3942 = vrot.lane.b32.xlu0 %v3848, 56
        %v3943 = vpop.permute.xlu0 %3942
        %3944 = vrot.lane.b32.xlu0 %v3849, 56
        %v3945 = vpop.permute.xlu0 %3944
        %vm3978 = vcmask 523712
        %3979 = vst.msk [vmem:[#allocation5] sm:$0xff] %vm3978, %v3883
        %3980 = vst.msk [vmem:[#allocation5 + $0x8] sm:$0xff] %vm3978, %v3885
        %3981 = vst.msk [vmem:[#allocation5 + $0x10] sm:$0xff] %vm3978, %v3887
        %3982 = vst.msk [vmem:[#allocation5 + $0x18] sm:$0xff] %vm3978, %v3889
        %3983 = vst.msk [vmem:[#allocation5 + $0x20] sm:$0xff] %vm3978, %v3891
        %3984 = vst.msk [vmem:[#allocation5 + $0x28] sm:$0xff] %vm3978, %v3893
        %3985 = vst.msk [vmem:[#allocation5 + $0x30] sm:$0xff] %vm3978, %v3895
        %3986 = vst.msk [vmem:[#allocation5 + $0x38] sm:$0xff] %vm3978, %v3897
        %3987 = vst.msk [vmem:[#allocation5 + $0x40] sm:$0xff] %vm3978, %v3899
        %3988 = vst.msk [vmem:[#allocation5 + $0x48] sm:$0xff] %vm3978, %v3901
        %3989 = vst.msk [vmem:[#allocation5 + $0x50] sm:$0xff] %vm3978, %v3903
        %3990 = vst.msk [vmem:[#allocation5 + $0x58] sm:$0xff] %vm3978, %v3905
        %3991 = vst.msk [vmem:[#allocation5 + $0x60] sm:$0xff] %vm3978, %v3907
        %3992 = vst.msk [vmem:[#allocation5 + $0x68] sm:$0xff] %vm3978, %v3909
        %3993 = vst.msk [vmem:[#allocation5 + $0x70] sm:$0xff] %vm3978, %v3911
        %3994 = vst.msk [vmem:[#allocation5 + $0x78] sm:$0xff] %vm3978, %v3913
        %3995 = vst.msk [vmem:[#allocation5 + $0x80] sm:$0xff] %vm3978, %v3915
        %3996 = vst.msk [vmem:[#allocation5 + $0x88] sm:$0xff] %vm3978, %v3917
        %3997 = vst.msk [vmem:[#allocation5 + $0x90] sm:$0xff] %vm3978, %v3919
        %3998 = vst.msk [vmem:[#allocation5 + $0x98] sm:$0xff] %vm3978, %v3921
        %3999 = vst.msk [vmem:[#allocation5 + $0xa0] sm:$0xff] %vm3978, %v3923
        %4000 = vst.msk [vmem:[#allocation5 + $0xa8] sm:$0xff] %vm3978, %v3925
        %4001 = vst.msk [vmem:[#allocation5 + $0xb0] sm:$0xff] %vm3978, %v3927
        %4002 = vst.msk [vmem:[#allocation5 + $0xb8] sm:$0xff] %vm3978, %v3929
        %4003 = vst.msk [vmem:[#allocation5 + $0xc0] sm:$0xff] %vm3978, %v3931
        %4004 = vst.msk [vmem:[#allocation5 + $0xc8] sm:$0xff] %vm3978, %v3933
        %4005 = vst.msk [vmem:[#allocation5 + $0xd0] sm:$0xff] %vm3978, %v3935
        %4006 = vst.msk [vmem:[#allocation5 + $0xd8] sm:$0xff] %vm3978, %v3937
        %4007 = vst.msk [vmem:[#allocation5 + $0xe0] sm:$0xff] %vm3978, %v3939
        %4008 = vst.msk [vmem:[#allocation5 + $0xe8] sm:$0xff] %vm3978, %v3941
        %4009 = vst.msk [vmem:[#allocation5 + $0xf0] sm:$0xff] %vm3978, %v3943
        %4010 = vst.msk [vmem:[#allocation5 + $0xf8] sm:$0xff] %vm3978, %v3945
        %v4011 = vld [vmem:[%s3624 + $0x2] sm:$0xff]
        %v4012 = vld [vmem:[%s3624 + $0xa] sm:$0xff]
        %v4013 = vld [vmem:[%s3624 + $0x1a] sm:$0xff]
        %v4014 = vld [vmem:[%s3624 + $0x22] sm:$0xff]
        %v4015 = vld [vmem:[%s3624 + $0x32] sm:$0xff]
        %v4016 = vld [vmem:[%s3624 + $0x3a] sm:$0xff]
        %v4017 = vld [vmem:[%s3624 + $0x4a] sm:$0xff]
        %v4018 = vld [vmem:[%s3624 + $0x52] sm:$0xff]
        %v4019 = vld [vmem:[%s3624 + $0x62] sm:$0xff]
        %v4020 = vld [vmem:[%s3624 + $0x6a] sm:$0xff]
        %v4021 = vld [vmem:[%s3624 + $0x7a] sm:$0xff]
        %v4022 = vld [vmem:[%s3624 + $0x82] sm:$0xff]
        %v4023 = vld [vmem:[%s3624 + $0x92] sm:$0xff]
        %v4024 = vld [vmem:[%s3624 + $0x9a] sm:$0xff]
        %v4025 = vld [vmem:[%s3624 + $0xaa] sm:$0xff]
        %v4026 = vld [vmem:[%s3624 + $0xb2] sm:$0xff]
        %v4027 = vld [vmem:[%s3624 + $0xc2] sm:$0xff]
        %v4028 = vld [vmem:[%s3624 + $0xca] sm:$0xff]
        %v4029 = vld [vmem:[%s3624 + $0xda] sm:$0xff]
        %v4030 = vld [vmem:[%s3624 + $0xe2] sm:$0xff]
        %v4031 = vld [vmem:[%s3624 + $0xf2] sm:$0xff]
        %v4032 = vld [vmem:[%s3624 + $0xfa] sm:$0xff]
        %v4033 = vld [vmem:[%s3624 + $0x10a] sm:$0xff]
        %v4034 = vld [vmem:[%s3624 + $0x112] sm:$0xff]
        %v4035 = vld [vmem:[%s3624 + $0x122] sm:$0xff]
        %v4036 = vld [vmem:[%s3624 + $0x12a] sm:$0xff]
        %v4037 = vld [vmem:[%s3624 + $0x13a] sm:$0xff]
        %v4038 = vld [vmem:[%s3624 + $0x142] sm:$0xff]
        %v4039 = vld [vmem:[%s3624 + $0x152] sm:$0xff]
        %v4040 = vld [vmem:[%s3624 + $0x15a] sm:$0xff]
        %v4041 = vld [vmem:[%s3624 + $0x16a] sm:$0xff]
        %v4042 = vld [vmem:[%s3624 + $0x172] sm:$0xff]
        %4075 = vrot.lane.b32.xlu0 %v4011, 64
        %v4076 = vpop.permute.xlu0 %4075
        %4077 = vrot.lane.b32.xlu0 %v4012, 64
        %v4078 = vpop.permute.xlu0 %4077
        %4079 = vrot.lane.b32.xlu0 %v4013, 64
        %v4080 = vpop.permute.xlu0 %4079
        %4081 = vrot.lane.b32.xlu0 %v4014, 64
        %v4082 = vpop.permute.xlu0 %4081
        %4083 = vrot.lane.b32.xlu0 %v4015, 64
        %v4084 = vpop.permute.xlu0 %4083
        %4085 = vrot.lane.b32.xlu0 %v4016, 64
        %v4086 = vpop.permute.xlu0 %4085
        %4087 = vrot.lane.b32.xlu0 %v4017, 64
        %v4088 = vpop.permute.xlu0 %4087
        %4089 = vrot.lane.b32.xlu0 %v4018, 64
        %v4090 = vpop.permute.xlu0 %4089
        %4091 = vrot.lane.b32.xlu0 %v4019, 64
        %v4092 = vpop.permute.xlu0 %4091
        %4093 = vrot.lane.b32.xlu0 %v4020, 64
        %v4094 = vpop.permute.xlu0 %4093
        %4095 = vrot.lane.b32.xlu0 %v4021, 64
        %v4096 = vpop.permute.xlu0 %4095
        %4097 = vrot.lane.b32.xlu0 %v4022, 64
        %v4098 = vpop.permute.xlu0 %4097
        %4099 = vrot.lane.b32.xlu0 %v4023, 64
        %v4100 = vpop.permute.xlu0 %4099
        %4101 = vrot.lane.b32.xlu0 %v4024, 64
        %v4102 = vpop.permute.xlu0 %4101
        %4103 = vrot.lane.b32.xlu0 %v4025, 64
        %v4104 = vpop.permute.xlu0 %4103
        %4105 = vrot.lane.b32.xlu0 %v4026, 64
        %v4106 = vpop.permute.xlu0 %4105
        %4107 = vrot.lane.b32.xlu0 %v4027, 64
        %v4108 = vpop.permute.xlu0 %4107
        %4109 = vrot.lane.b32.xlu0 %v4028, 64
        %v4110 = vpop.permute.xlu0 %4109
        %4111 = vrot.lane.b32.xlu0 %v4029, 64
        %v4112 = vpop.permute.xlu0 %4111
        %4113 = vrot.lane.b32.xlu0 %v4030, 64
        %v4114 = vpop.permute.xlu0 %4113
        %4115 = vrot.lane.b32.xlu0 %v4031, 64
        %v4116 = vpop.permute.xlu0 %4115
        %4117 = vrot.lane.b32.xlu0 %v4032, 64
        %v4118 = vpop.permute.xlu0 %4117
        %4119 = vrot.lane.b32.xlu0 %v4033, 64
        %v4120 = vpop.permute.xlu0 %4119
        %4121 = vrot.lane.b32.xlu0 %v4034, 64
        %v4122 = vpop.permute.xlu0 %4121
        %4123 = vrot.lane.b32.xlu0 %v4035, 64
        %v4124 = vpop.permute.xlu0 %4123
        %4125 = vrot.lane.b32.xlu0 %v4036, 64
        %v4126 = vpop.permute.xlu0 %4125
        %4127 = vrot.lane.b32.xlu0 %v4037, 64
        %v4128 = vpop.permute.xlu0 %4127
        %4129 = vrot.lane.b32.xlu0 %v4038, 64
        %v4130 = vpop.permute.xlu0 %4129
        %4131 = vrot.lane.b32.xlu0 %v4039, 64
        %v4132 = vpop.permute.xlu0 %4131
        %4133 = vrot.lane.b32.xlu0 %v4040, 64
        %v4134 = vpop.permute.xlu0 %4133
        %4135 = vrot.lane.b32.xlu0 %v4041, 64
        %v4136 = vpop.permute.xlu0 %4135
        %4137 = vrot.lane.b32.xlu0 %v4042, 64
        %v4138 = vpop.permute.xlu0 %4137
        %vm4171 = vcmask 589312
        %4172 = vst.msk [vmem:[#allocation5] sm:$0xff] %vm4171, %v4076
        %4173 = vst.msk [vmem:[#allocation5 + $0x8] sm:$0xff] %vm4171, %v4078
        %4174 = vst.msk [vmem:[#allocation5 + $0x10] sm:$0xff] %vm4171, %v4080
        %4175 = vst.msk [vmem:[#allocation5 + $0x18] sm:$0xff] %vm4171, %v4082
        %4176 = vst.msk [vmem:[#allocation5 + $0x20] sm:$0xff] %vm4171, %v4084
        %4177 = vst.msk [vmem:[#allocation5 + $0x28] sm:$0xff] %vm4171, %v4086
        %4178 = vst.msk [vmem:[#allocation5 + $0x30] sm:$0xff] %vm4171, %v4088
        %4179 = vst.msk [vmem:[#allocation5 + $0x38] sm:$0xff] %vm4171, %v4090
        %4180 = vst.msk [vmem:[#allocation5 + $0x40] sm:$0xff] %vm4171, %v4092
        %4181 = vst.msk [vmem:[#allocation5 + $0x48] sm:$0xff] %vm4171, %v4094
        %4182 = vst.msk [vmem:[#allocation5 + $0x50] sm:$0xff] %vm4171, %v4096
        %4183 = vst.msk [vmem:[#allocation5 + $0x58] sm:$0xff] %vm4171, %v4098
        %4184 = vst.msk [vmem:[#allocation5 + $0x60] sm:$0xff] %vm4171, %v4100
        %4185 = vst.msk [vmem:[#allocation5 + $0x68] sm:$0xff] %vm4171, %v4102
        %4186 = vst.msk [vmem:[#allocation5 + $0x70] sm:$0xff] %vm4171, %v4104
        %4187 = vst.msk [vmem:[#allocation5 + $0x78] sm:$0xff] %vm4171, %v4106
        %4188 = vst.msk [vmem:[#allocation5 + $0x80] sm:$0xff] %vm4171, %v4108
        %4189 = vst.msk [vmem:[#allocation5 + $0x88] sm:$0xff] %vm4171, %v4110
        %4190 = vst.msk [vmem:[#allocation5 + $0x90] sm:$0xff] %vm4171, %v4112
        %4191 = vst.msk [vmem:[#allocation5 + $0x98] sm:$0xff] %vm4171, %v4114
        %4192 = vst.msk [vmem:[#allocation5 + $0xa0] sm:$0xff] %vm4171, %v4116
        %4193 = vst.msk [vmem:[#allocation5 + $0xa8] sm:$0xff] %vm4171, %v4118
        %4194 = vst.msk [vmem:[#allocation5 + $0xb0] sm:$0xff] %vm4171, %v4120
        %4195 = vst.msk [vmem:[#allocation5 + $0xb8] sm:$0xff] %vm4171, %v4122
        %4196 = vst.msk [vmem:[#allocation5 + $0xc0] sm:$0xff] %vm4171, %v4124
        %4197 = vst.msk [vmem:[#allocation5 + $0xc8] sm:$0xff] %vm4171, %v4126
        %4198 = vst.msk [vmem:[#allocation5 + $0xd0] sm:$0xff] %vm4171, %v4128
        %4199 = vst.msk [vmem:[#allocation5 + $0xd8] sm:$0xff] %vm4171, %v4130
        %4200 = vst.msk [vmem:[#allocation5 + $0xe0] sm:$0xff] %vm4171, %v4132
        %4201 = vst.msk [vmem:[#allocation5 + $0xe8] sm:$0xff] %vm4171, %v4134
        %4202 = vst.msk [vmem:[#allocation5 + $0xf0] sm:$0xff] %vm4171, %v4136
        %4203 = vst.msk [vmem:[#allocation5 + $0xf8] sm:$0xff] %vm4171, %v4138
        %v4204 = vld [vmem:[#allocation5] sm:$0xff]
        %v4205 = vld [vmem:[#allocation5 + $0x8] sm:$0xff]
        %v4206 = vld [vmem:[#allocation5 + $0x10] sm:$0xff]
        %v4207 = vld [vmem:[#allocation5 + $0x18] sm:$0xff]
        %v4208 = vld [vmem:[#allocation5 + $0x20] sm:$0xff]
        %v4209 = vld [vmem:[#allocation5 + $0x28] sm:$0xff]
        %v4210 = vld [vmem:[#allocation5 + $0x30] sm:$0xff]
        %v4211 = vld [vmem:[#allocation5 + $0x38] sm:$0xff]
        %v4212 = vld [vmem:[#allocation5 + $0x40] sm:$0xff]
        %v4213 = vld [vmem:[#allocation5 + $0x48] sm:$0xff]
        %v4214 = vld [vmem:[#allocation5 + $0x50] sm:$0xff]
        %v4215 = vld [vmem:[#allocation5 + $0x58] sm:$0xff]
        %v4216 = vld [vmem:[#allocation5 + $0x60] sm:$0xff]
        %v4217 = vld [vmem:[#allocation5 + $0x68] sm:$0xff]
        %v4218 = vld [vmem:[#allocation5 + $0x70] sm:$0xff]
        %v4219 = vld [vmem:[#allocation5 + $0x78] sm:$0xff]
        %v4220 = vld [vmem:[#allocation5 + $0x80] sm:$0xff]
        %v4221 = vld [vmem:[#allocation5 + $0x88] sm:$0xff]
        %v4222 = vld [vmem:[#allocation5 + $0x90] sm:$0xff]
        %v4223 = vld [vmem:[#allocation5 + $0x98] sm:$0xff]
        %v4224 = vld [vmem:[#allocation5 + $0xa0] sm:$0xff]
        %v4225 = vld [vmem:[#allocation5 + $0xa8] sm:$0xff]
        %v4226 = vld [vmem:[#allocation5 + $0xb0] sm:$0xff]
        %v4227 = vld [vmem:[#allocation5 + $0xb8] sm:$0xff]
        %v4228 = vld [vmem:[#allocation5 + $0xc0] sm:$0xff]
        %v4229 = vld [vmem:[#allocation5 + $0xc8] sm:$0xff]
        %v4230 = vld [vmem:[#allocation5 + $0xd0] sm:$0xff]
        %v4231 = vld [vmem:[#allocation5 + $0xd8] sm:$0xff]
        %v4232 = vld [vmem:[#allocation5 + $0xe0] sm:$0xff]
        %v4233 = vld [vmem:[#allocation5 + $0xe8] sm:$0xff]
        %v4234 = vld [vmem:[#allocation5 + $0xf0] sm:$0xff]
        %v4235 = vld [vmem:[#allocation5 + $0xf8] sm:$0xff]
        %v4236 = vpack.c.bf16 %v4205, %v4204
        %v4237 = vpack.c.bf16 %v4207, %v4206
        %v4238 = vpack.c.bf16 %v4209, %v4208
        %v4239 = vpack.c.bf16 %v4211, %v4210
        %v4240 = vpack.c.bf16 %v4213, %v4212
        %v4241 = vpack.c.bf16 %v4215, %v4214
        %v4242 = vpack.c.bf16 %v4217, %v4216
        %v4243 = vpack.c.bf16 %v4219, %v4218
        %v4244 = vpack.c.bf16 %v4221, %v4220
        %v4245 = vpack.c.bf16 %v4223, %v4222
        %v4246 = vpack.c.bf16 %v4225, %v4224
        %v4247 = vpack.c.bf16 %v4227, %v4226
        %v4248 = vpack.c.bf16 %v4229, %v4228
        %v4249 = vpack.c.bf16 %v4231, %v4230
        %v4250 = vpack.c.bf16 %v4233, %v4232
        %v4251 = vpack.c.bf16 %v4235, %v4234
        %v4252 = vld [vmem:[%s2] sm:$0xf]
        %vm4253 = vcmask 588800
        %v4255 = vsel %vm4253, %v4252, 0
        %v4258 = vsel %vm4253, %v4236, 0
        %v4261 = vsel %vm4253, %v4237, 0
        %v4264 = vsel %vm4253, %v4238, 0
        %v4267 = vsel %vm4253, %v4239, 0
        %v4270 = vsel %vm4253, %v4240, 0
        %v4273 = vsel %vm4253, %v4241, 0
        %v4276 = vsel %vm4253, %v4242, 0
        %v4279 = vsel %vm4253, %v4243, 0
        %v4282 = vsel %vm4253, %v4244, 0
        %v4285 = vsel %vm4253, %v4245, 0
        %v4288 = vsel %vm4253, %v4246, 0
        %v4291 = vsel %vm4253, %v4247, 0
        %v4294 = vsel %vm4253, %v4248, 0
        %v4297 = vsel %vm4253, %v4249, 0
        %v4300 = vsel %vm4253, %v4250, 0
        %v4303 = vsel %vm4253, %v4251, 0
        %4305 = vmatpush.bf16.xpose.msra.mxu0 %v4279
        %4306 = vmatpush.bf16.xpose.msra.mxu0 %v4276
        %4307 = vmatpush.bf16.xpose.msra.mxu0 %v4273
        %4308 = vmatpush.bf16.xpose.msra.mxu0 %v4270
        %4309 = vmatpush.bf16.xpose.msra.mxu0 %v4267
        %4310 = vmatpush.bf16.xpose.msra.mxu0 %v4264
        %4311 = vmatpush.bf16.xpose.msra.mxu0 %v4261
        %4312 = vmatpush.bf16.xpose.msra.mxu0 %v4258
        %4313 = vmatmul.bf16.gmra.mxu0 %v4255
        %v4314 = vpop.f32.mrf.mxu0
        %v4315 = vadd.f32 0.0, %v4314
        %v4316 = vpop.f32.mrf.mxu0
        %4317 = vdwg.mxu0
        %4318 = vmatpush.bf16.xpose.msra.mxu0 %v4303
        %4319 = vmatpush.bf16.xpose.msra.mxu0 %v4300
        %4320 = vmatpush.bf16.xpose.msra.mxu0 %v4297
        %4321 = vmatpush.bf16.xpose.msra.mxu0 %v4294
        %4322 = vmatpush.bf16.xpose.msra.mxu0 %v4291
        %4323 = vmatpush.bf16.xpose.msra.mxu0 %v4288
        %4324 = vmatpush.bf16.xpose.msra.mxu0 %v4285
        %4325 = vmatpush.bf16.xpose.msra.mxu0 %v4282
        %4326 = vmatmul.bf16.gmra.mxu0 %v4255
        %v4327 = vpop.f32.mrf.mxu0
        %v4328 = vadd.f32 0.0, %v4327
        %v4329 = vpop.f32.mrf.mxu0
        %4330 = vdwg.mxu0
        %v4331 = vadd.f32 %v4315, %v4328
        %4332 = vadd.xlane.f32.xlu0 %v4331
        %v4333 = vpop.xlane.xlu0 %4332
        %v4334 = vmul.f32 %v4333, %v2230
        %v4335 = vsub.f32 %v4315, %v4334
        %v4336 = vsub.f32 %v4328, %v4334
        %v4337 = vmul.f32 %v4335, %v4335
        %v4338 = vmul.f32 %v4336, %v4336
        %v4339 = vadd.f32 %v4337, %v4338
        %4340 = vadd.xlane.f32.xlu0 %v4339
        %v4341 = vpop.xlane.xlu0 %4340
        %v4342 = vmul.f32 %v4341, %v2230
        %v4343 = vadd.f32 %v4342, 1e-05
        %v4344 = vrsqrt.pop %v4343
        %v4345 = vmul.f32 %v4344, %v4343
        %v4346 = vmul.f32 %v4345, %v4344
        %v4347 = vmul.f32 0.5, %v4346
        %v4348 = vsub.f32 1.5, %v4347
        %v4349 = vmul.f32 %v4344, %v4348
        %vm4350 = vweird.f32 %v4343
        %vm4351 = vweird.f32 %v4344
        %vm4352 = vmor %vm4350, %vm4351
        %v4353 = vsel %vm4352, %v4344, %v4349
        %v4354 = vmul.f32 %v4335, %v4353
        %v4355 = vmul.f32 %v4336, %v4353
        %vm4356 = vcmp.ge.f32.partialorder %v4354, 0.0
        %vm4357 = vcmp.ge.f32.partialorder %v4355, 0.0
        %v4358 = vstv %s2594
        %v4359 = vmul.f32 %v4358, %v4354
        %v4360 = vmul.f32 %v4358, %v4355
        %v4361 = vsel %vm4356, %v4354, %v4359
        %v4362 = vsel %vm4357, %v4355, %v4360
        %4363 = vst [vmem:[%s211] sm:$0xff] %v4361
        %4364 = vst [vmem:[%s211 + $0x8] sm:$0xff] %v4362
        %p4365 = scmp.lt.s32.totalorder %s16, 1
        %s4366 = scalar_select %p4365, %s16, 1
        %s4367 = smul.addr %s4366, 2
        %s4368 = smul.addr %s4367, 8
        %s4369 = scalar_lea.vmem %s4, %s4368
        // Predicated region
        $region41: #{conv_block_forward.1} parent=35 // pred_check
          %p4370 = pneg %p123
        $region42: #{conv_block_forward.1} parent=35 // pred_check_branch
          %4372 = sbr.rel (%p4370) target = $region44
        $region43: #{conv_block_forward.1} parent=35 // pred_region
          _
        $region44: #{conv_block_forward.1} parent=35 // pred_fallthru
          _
      $region36: #{conv_block_forward.1} parent=5 // pred_fallthru
        _
      %p4373 = scmp.le.s32.totalorder 2, %s11
      // Predicated region
      $region45: #{conv_block_forward.1} parent=5 // pred_check
        %p4374 = pneg %p4373
      $region46: #{conv_block_forward.1} parent=5 // pred_check_branch
        %4376 = sbr.rel (%p4374) target = $region48
      $region47: #{conv_block_forward.1} parent=5 // pred_region
        %s4377 = ssub.s32 %s11, 2
        // Predicated region
        $region49: #{conv_block_forward.1} parent=47 // pred_check
          %p4378 = pneg %p129
        $region50: #{conv_block_forward.1} parent=47 // pred_check_branch
          %4380 = sbr.rel (%p4378) target = $region52
        $region51: #{conv_block_forward.1} parent=47 // pred_region
          %p4381 = scmp.lt.s32.totalorder %s17, 1
          %s4382 = scalar_select %p4381, %s17, 1
          %s4383 = smul.addr %s4382, 2
          %s4384 = smul.addr %s4383, 8
          %s4385 = scalar_lea.vmem %s4, %s4384
        $region52: #{conv_block_forward.1} parent=47 // pred_fallthru
          _
      $region48: #{conv_block_forward.1} parent=5 // pred_fallthru
        _
    $region6: #{conv_block_forward.1} parent=1 // loop_footer
      %s15 = sadd.s32 1, %s11
    $region7: #{conv_block_forward.1} parent=1 // loop_footer_branch
      %10 = sbr.rel target = $region3
    $region8: #{conv_block_forward.1} parent=1 // loop_exit
      _
    %4386 = vsyncpa [#allocation7], 1
    %s4387 = scalar_lea.sflag [#allocation7], 1
    %4388 = vsyncpa %s4387, 1

</llo_original>
